<compile_context>
chip_gen: v7x
topology: tpu7x:2x2x1
jax: 0.10.0
libtpu: 0.0.40
codegen_flags: <defaults>
</compile_context>

<pallas_src>
import functools

import jax
import jax.numpy as jnp
from jax import lax
from jax.experimental import pallas as pl
from jax.experimental.pallas import tpu as pltpu


def _gated_mha_kernel(num_heads, head_dim,
                      xq_ref, xkv_ref, w_ref, b_ref, wo_ref, bo_ref, mask_ref,
                      out_ref, attw_ref):
    """One (batch, query-tile) step of gated multi-head attention.

    xq_ref  : (1, TQ, E) bf16   query rows of this tile
    xkv_ref : (1, L, E)  bf16   all rows (keys/values), resident per batch
    w_ref   : (4, E, H)  bf16   q/k/v/g projection weights
    b_ref   : (4, H)     f32    q/k/v/g projection biases
    wo_ref  : (nh, hd, E) bf16  output projection weight, split per head
    bo_ref  : (1, E)     f32    output projection bias
    mask_ref: (1, TQ, L) f32    attn_mask + log(key_padding_mask) (additive)
    out_ref : (1, TQ, E) f32    attention output
    attw_ref: (1, nh, TQ, L) f32  attention weights (lane-dense layout)
    """
    f32 = jnp.float32
    bf16 = jnp.bfloat16
    hd = head_dim
    scaling = head_dim ** (-0.5)

    xq = xq_ref[0]                       # [TQ, E] bf16
    xkv = xkv_ref[0]                     # [L, E]  bf16
    b = b_ref[...]                       # [4, H]  f32

    # Query-side projections (lane-dense [TQ, H] slabs).
    q = jnp.dot(xq, w_ref[0], preferred_element_type=f32) + b[0:1, :]
    g = jnp.dot(xq, w_ref[3], preferred_element_type=f32) + b[3:4, :]
    g_sig = jax.nn.sigmoid(g)            # lane-dense sigmoid, sliced per head later

    # Key/value-side projections for the full sequence.  Recomputed per query
    # tile so that both grid axes can stay "parallel" (no cross-step scratch).
    k = jnp.dot(xkv, w_ref[1], preferred_element_type=f32) + b[1:2, :]
    v = jnp.dot(xkv, w_ref[2], preferred_element_type=f32) + b[2:3, :]
    v_tanh = jnp.tanh(v).astype(bf16)    # lane-dense tanh, cast once for the MXU

    q_bf = (q * scaling).astype(bf16)    # fold the 1/sqrt(hd) scaling into q
    k_bf = k.astype(bf16)

    # Pass 1: per-head scaled scores, stashed in the attw output block (VMEM),
    # tracking the elementwise max over heads.
    # TODO(synk): for head_dim < 128 these per-head lane slices imply a relayout
    #             copy; padding head_dim to 128 (or a head-major weight layout)
    #             would make them free.
    m = None
    for h in range(num_heads):
        qh = q_bf[:, h * hd:(h + 1) * hd]
        kh = k_bf[:, h * hd:(h + 1) * hd]
        s = lax.dot_general(qh, kh, (((1,), (1,)), ((), ())),
                            preferred_element_type=f32)            # [TQ, L]
        attw_ref[0, h] = s
        m = s if m is None else jnp.maximum(m, s)

    # Pass 2: unnormalized exp (one exp per head) and the head-sum.
    se = None
    for h in range(num_heads):
        eh = jnp.exp(attw_ref[0, h] - m)
        attw_ref[0, h] = eh
        se = eh if se is None else se + eh

    # Shared per-(i, j) factor: exp(additive mask) / sum over heads.  The key
    # padding mask was folded additively into the mask in the wrapper, so
    # masked positions give exp(-1e30) == 0 exactly (no inf*0 NaN path).
    f = jnp.exp(mask_ref[0]) * pl.reciprocal(se, approx=True)       # [TQ, L]

    # Pass 3: finalize attention weights, attend, gate, and accumulate the
    # output projection per head (no concatenate, no [TQ, H] intermediate).
    out_acc = jnp.zeros(out_ref.shape[1:], dtype=f32)               # [TQ, E]
    for h in range(num_heads):
        w = attw_ref[0, h] * f
        attw_ref[0, h] = w
        vh = v_tanh[:, h * hd:(h + 1) * hd]                         # [L, hd]
        oh = jnp.dot(w.astype(bf16), vh, preferred_element_type=f32)  # [TQ, hd]
        gated = oh * g_sig[:, h * hd:(h + 1) * hd]
        out_acc = out_acc + jnp.dot(gated.astype(bf16), wo_ref[h],
                                    preferred_element_type=f32)     # [TQ, E]

    out_ref[0] = (out_acc + bo_ref[...]).astype(out_ref.dtype)


def _pick_tq(length, target):
    """Largest multiple-of-8 divisor of `length` that is <= target (else length)."""
    tq = min(target, length)
    while tq > 8 and (length % tq != 0 or tq % 8 != 0):
        tq -= 8
    if tq <= 0 or length % tq != 0:
        tq = length
    return tq


def gated_mha_pallas(query, attn_mask, key_padding_mask, params,
                     num_heads, head_dim, *, tq=256, transpose_attw=False):
    """Gated MHA forward.  params are in PyTorch layout:
       proj_w [4H, E], proj_b [4H], out_w [E, H], out_b [E]."""
    B, L, E = query.shape
    H = num_heads * head_dim
    proj_w, proj_b, out_w, out_b = params

    TQ = _pick_tq(L, tq)
    n_q = L // TQ

    # ---- wrapper-side repack: bf16 weights/activations for the MXU, per-head
    #      output projection, key_padding_mask folded additively into the mask.
    x_bf = query.astype(jnp.bfloat16)
    w_all = jnp.transpose(proj_w.reshape(4, H, E), (0, 2, 1)).astype(jnp.bfloat16)
    b_all = proj_b.reshape(4, H).astype(jnp.float32)
    wo_r = out_w.T.reshape(num_heads, head_dim, E).astype(jnp.bfloat16)
    bo_r = out_b.reshape(1, E).astype(jnp.float32)
    mask = (attn_mask + jnp.where(key_padding_mask, 0.0, -1e30)).astype(jnp.float32)

    kernel = functools.partial(_gated_mha_kernel, num_heads, head_dim)

    # Advisory cost estimate for XLA scheduling around the custom call.
    flops = (4 * B * L * E * H                 # q/g projections
             + 4 * B * n_q * L * E * H         # k/v projections (recomputed per q tile)
             + 4 * B * L * L * H               # scores + attend
             + 2 * B * L * H * E)              # output projection
    transcendentals = B * (num_heads + 2) * L * L + B * (n_q + 1) * L * H
    bytes_accessed = (2 * 2 * B * L * E        # x (bf16, query-rows + kv-rows streams)
                      + 4 * B * L * L          # additive mask
                      + 4 * B * num_heads * L * L   # attw
                      + 4 * B * L * E          # out
                      + 2 * 5 * E * H + 4 * (4 * H + E))

    out, attw = pl.pallas_call(
        kernel,
        out_shape=(jax.ShapeDtypeStruct((B, L, E), jnp.float32),
                   jax.ShapeDtypeStruct((B, num_heads, L, L), jnp.float32)),
        grid=(B, n_q),
        in_specs=[
            pl.BlockSpec((1, TQ, E), lambda b, i: (b, i, 0)),            # query rows
            pl.BlockSpec((1, L, E), lambda b, i: (b, 0, 0)),             # key/value rows
            pl.BlockSpec((4, E, H), lambda b, i: (0, 0, 0)),             # q/k/v/g weights
            pl.BlockSpec((4, H), lambda b, i: (0, 0)),                   # q/k/v/g biases
            pl.BlockSpec((num_heads, head_dim, E), lambda b, i: (0, 0, 0)),  # out proj
            pl.BlockSpec((1, E), lambda b, i: (0, 0)),                   # out bias
            pl.BlockSpec((1, TQ, L), lambda b, i: (b, i, 0)),            # additive mask
        ],
        out_specs=(
            pl.BlockSpec((1, TQ, E), lambda b, i: (b, i, 0)),
            pl.BlockSpec((1, num_heads, TQ, L), lambda b, i: (b, 0, i, 0)),
        ),
        compiler_params=pltpu.CompilerParams(
            dimension_semantics=("parallel", "parallel"),
            # > default scoped limit (16 MiB v5e / 32 MiB v6e,v7x), safely
            # below v7x's 64 MiB physical VMEM.
            vmem_limit_bytes=48 * 1024 * 1024),
        cost_estimate=pl.CostEstimate(flops=int(flops),
                                      transcendentals=int(transcendentals),
                                      bytes_accessed=int(bytes_accessed)),
    )(x_bf, x_bf, w_all, b_all, wo_r, bo_r, mask)

    if transpose_attw:
        # PyTorch layout [B, L, L, num_heads]; optional because it is a full
        # extra HBM pass over the largest tensor.
        attw = jnp.transpose(attw, (0, 2, 3, 1))
    return out, attw


# ---------------------------------------------------------------------------
# Parameter init (deterministic, mirrors nn.Linear + xavier_uniform_)
# ---------------------------------------------------------------------------
def _xavier_uniform(key, out_features, in_features):
    bound = (6.0 / (in_features + out_features)) ** 0.5
    return jax.random.uniform(key, (out_features, in_features),
                              jnp.float32, -bound, bound)


def init_params(key, embed_dim, head_dim, num_heads):
    H = head_dim * num_heads
    k1, k2 = jax.random.split(key)
    proj_w = _xavier_uniform(k1, 4 * H, embed_dim)      # torch: [out, in]
    proj_b = jnp.zeros((4 * H,), jnp.float32)
    out_w = _xavier_uniform(k2, embed_dim, H)
    out_b = jnp.zeros((embed_dim,), jnp.float32)
    return proj_w, proj_b, out_w, out_b


# ---------------------------------------------------------------------------
# Pure-JAX reference (mirrors the PyTorch forward exactly, f32 throughout)
# ---------------------------------------------------------------------------
def reference(query, attn_mask, key_padding_mask, params, num_heads, head_dim):
    B, L, E = query.shape
    H = num_heads * head_dim
    proj_w, proj_b, out_w, out_b = params
    qkvg = query @ proj_w.T + proj_b
    q, k, v, g = jnp.split(qkvg, 4, axis=-1)
    q = q.reshape(B, L, num_heads, head_dim)
    k = k.reshape(B, L, num_heads, head_dim)
    v = v.reshape(B, L, num_heads, head_dim)
    g = g.reshape(B, L, num_heads, head_dim)
    s = jnp.einsum('bihd,bjhd->bijh', q, k) * head_dim ** (-0.5)
    w = jnp.exp(jax.nn.log_softmax(s, axis=-1) + attn_mask[:, :, :, None])
    w = jnp.where(key_padding_mask[:, :, :, None], w, 0.0)
    o = jnp.einsum('bijh,bjhd->bihd', w, jnp.tanh(v))
    go = (o * jax.nn.sigmoid(g)).reshape(B, L, H)
    return go @ out_w.T + out_b, w


if __name__ == "__main__":
    # Small but non-degenerate shapes (L >= 128 so the lane dim is a real vreg
    # tile and the query-tiling path is exercised with >1 tile per batch).
    B, L, E = 2, 128, 64
    num_heads, head_dim = 4, 16

    key = jax.random.PRNGKey(0)
    k_q, k_m, k_p, k_param = jax.random.split(key, 4)

    query = jax.random.normal(k_q, (B, L, E), jnp.float32)
    attn_mask = 0.1 * jax.random.normal(k_m, (B, L, L), jnp.float32)
    key_padding_mask = jax.random.uniform(k_p, (B, L, L)) > 0.2   # bool, mostly True

    params = init_params(k_param, E, head_dim, num_heads)

    out, attw = gated_mha_pallas(query, attn_mask, key_padding_mask, params,
                                 num_heads, head_dim, tq=64)
    out = jax.block_until_ready(out)
    attw = jax.block_until_ready(attw)

    ref_out, ref_attw = reference(query, attn_mask, key_padding_mask, params,
                                  num_heads, head_dim)
    ref_attw_k = jnp.transpose(ref_attw, (0, 3, 1, 2))   # kernel layout [B, nh, L, L]

    assert out.shape == (B, L, E)
    assert attw.shape == (B, num_heads, L, L)
    # bf16 MXU operands (f32 accumulation) -> loosened tolerances vs pure f32.
    assert jnp.allclose(out, ref_out, atol=5e-2, rtol=5e-2)
    assert jnp.allclose(attw, ref_attw_k, atol=2e-2, rtol=2e-2)

    print("KERNEL_OK")
</pallas_src>

<mosaic_0001>
module attributes {stable_mosaic.version = 11 : i64} {
  func.func @_gated_mha_kernel(%arg0: i32, %arg1: i32, %arg2: memref<1x64x64xbf16, #tpu.memory_space<vmem>>, %arg3: memref<1x128x64xbf16, #tpu.memory_space<vmem>>, %arg4: memref<4x64x64xbf16, #tpu.memory_space<vmem>>, %arg5: memref<4x64xf32, #tpu.memory_space<vmem>>, %arg6: memref<4x16x64xbf16, #tpu.memory_space<vmem>>, %arg7: memref<1x64xf32, #tpu.memory_space<vmem>>, %arg8: memref<1x64x128xf32, #tpu.memory_space<vmem>>, %arg9: memref<1x64x64xf32, #tpu.memory_space<vmem>>, %arg10: memref<1x4x64x128xf32, #tpu.memory_space<vmem>>) attributes {dimension_semantics = [#tpu.dimension_semantics<parallel>, #tpu.dimension_semantics<parallel>], iteration_bounds = array<i64: 2, 2>, scalar_prefetch = 0 : i64, scratch_operands = 0 : i64, tpu.core_type = #tpu.core_type<tc>, window_params = [{transform_indices = @transform_0, window_bounds = array<i64: 1, 64, 64>}, {transform_indices = @transform_1, window_bounds = array<i64: 1, 128, 64>}, {pipeline_mode = #tpu.pipeline_mode<synchronous>, transform_indices = @transform_2, window_bounds = array<i64: 4, 64, 64>}, {pipeline_mode = #tpu.pipeline_mode<synchronous>, transform_indices = @transform_3, window_bounds = array<i64: 4, 64>}, {pipeline_mode = #tpu.pipeline_mode<synchronous>, transform_indices = @transform_4, window_bounds = array<i64: 4, 16, 64>}, {pipeline_mode = #tpu.pipeline_mode<synchronous>, transform_indices = @transform_5, window_bounds = array<i64: 1, 64>}, {transform_indices = @transform_6, window_bounds = array<i64: 1, 64, 128>}, {transform_indices = @transform_7, window_bounds = array<i64: 1, 64, 64>}, {transform_indices = @transform_8, window_bounds = array<i64: 1, 4, 64, 128>}]} {
    %c0 = arith.constant 0 : index
    %c0_0 = arith.constant 0 : index
    %c0_1 = arith.constant 0 : index
    %0 = vector.load %arg2[%c0, %c0_0, %c0_1] : memref<1x64x64xbf16, #tpu.memory_space<vmem>>, vector<1x64x64xbf16>
    %1 = vector.shape_cast %0 : vector<1x64x64xbf16> to vector<64x64xbf16>
    %c0_2 = arith.constant 0 : index
    %c0_3 = arith.constant 0 : index
    %c0_4 = arith.constant 0 : index
    %2 = vector.load %arg3[%c0_2, %c0_3, %c0_4] : memref<1x128x64xbf16, #tpu.memory_space<vmem>>, vector<1x128x64xbf16>
    %3 = vector.shape_cast %2 : vector<1x128x64xbf16> to vector<128x64xbf16>
    %c0_5 = arith.constant 0 : index
    %c0_6 = arith.constant 0 : index
    %4 = vector.load %arg5[%c0_5, %c0_6] : memref<4x64xf32, #tpu.memory_space<vmem>>, vector<4x64xf32>
    %c0_7 = arith.constant 0 : index
    %c0_8 = arith.constant 0 : index
    %c0_9 = arith.constant 0 : index
    %5 = vector.load %arg4[%c0_7, %c0_8, %c0_9] : memref<4x64x64xbf16, #tpu.memory_space<vmem>>, vector<1x64x64xbf16>
    %6 = vector.shape_cast %5 : vector<1x64x64xbf16> to vector<64x64xbf16>
    %cst = arith.constant dense<0.000000e+00> : vector<64x64xf32>
    %7 = tpu.matmul %1, %6, %cst {dimension_numbers = #tpu.dot_dimension_numbers<[1], [0], [0], [1], [0, 0, 1, 1], [], []>} : vector<64x64xbf16>, vector<64x64xbf16>, vector<64x64xf32> -> vector<64x64xf32>
    %8 = vector.extract_strided_slice %4 {offsets = [0, 0], sizes = [1, 64], strides = [1, 1]} : vector<4x64xf32> to vector<1x64xf32>
    %9 = vector.broadcast %8 : vector<1x64xf32> to vector<64x64xf32>
    %10 = arith.addf %7, %9 : vector<64x64xf32>
    %c3 = arith.constant 3 : index
    %c0_10 = arith.constant 0 : index
    %c0_11 = arith.constant 0 : index
    %11 = vector.load %arg4[%c3, %c0_10, %c0_11] : memref<4x64x64xbf16, #tpu.memory_space<vmem>>, vector<1x64x64xbf16>
    %12 = vector.shape_cast %11 : vector<1x64x64xbf16> to vector<64x64xbf16>
    %cst_12 = arith.constant dense<0.000000e+00> : vector<64x64xf32>
    %13 = tpu.matmul %1, %12, %cst_12 {dimension_numbers = #tpu.dot_dimension_numbers<[1], [0], [0], [1], [0, 0, 1, 1], [], []>} : vector<64x64xbf16>, vector<64x64xbf16>, vector<64x64xf32> -> vector<64x64xf32>
    %14 = vector.extract_strided_slice %4 {offsets = [3, 0], sizes = [1, 64], strides = [1, 1]} : vector<4x64xf32> to vector<1x64xf32>
    %15 = vector.broadcast %14 : vector<1x64xf32> to vector<64x64xf32>
    %16 = arith.addf %13, %15 : vector<64x64xf32>
    %17 = arith.negf %16 : vector<64x64xf32>
    %18 = math.exp %17 : vector<64x64xf32>
    %cst_13 = arith.constant 1.000000e+00 : f32
    %19 = vector.broadcast %cst_13 : f32 to vector<64x64xf32>
    %20 = arith.addf %19, %18 : vector<64x64xf32>
    %21 = arith.divf %19, %20 : vector<64x64xf32>
    %c1 = arith.constant 1 : index
    %c0_14 = arith.constant 0 : index
    %c0_15 = arith.constant 0 : index
    %22 = vector.load %arg4[%c1, %c0_14, %c0_15] : memref<4x64x64xbf16, #tpu.memory_space<vmem>>, vector<1x64x64xbf16>
    %23 = vector.shape_cast %22 : vector<1x64x64xbf16> to vector<64x64xbf16>
    %cst_16 = arith.constant dense<0.000000e+00> : vector<128x64xf32>
    %24 = tpu.matmul %3, %23, %cst_16 {dimension_numbers = #tpu.dot_dimension_numbers<[1], [0], [0], [1], [0, 0, 1, 1], [], []>} : vector<128x64xbf16>, vector<64x64xbf16>, vector<128x64xf32> -> vector<128x64xf32>
    %25 = vector.extract_strided_slice %4 {offsets = [1, 0], sizes = [1, 64], strides = [1, 1]} : vector<4x64xf32> to vector<1x64xf32>
    %26 = vector.broadcast %25 : vector<1x64xf32> to vector<128x64xf32>
    %27 = arith.addf %24, %26 : vector<128x64xf32>
    %c2 = arith.constant 2 : index
    %c0_17 = arith.constant 0 : index
    %c0_18 = arith.constant 0 : index
    %28 = vector.load %arg4[%c2, %c0_17, %c0_18] : memref<4x64x64xbf16, #tpu.memory_space<vmem>>, vector<1x64x64xbf16>
    %29 = vector.shape_cast %28 : vector<1x64x64xbf16> to vector<64x64xbf16>
    %cst_19 = arith.constant dense<0.000000e+00> : vector<128x64xf32>
    %30 = tpu.matmul %3, %29, %cst_19 {dimension_numbers = #tpu.dot_dimension_numbers<[1], [0], [0], [1], [0, 0, 1, 1], [], []>} : vector<128x64xbf16>, vector<64x64xbf16>, vector<128x64xf32> -> vector<128x64xf32>
    %31 = vector.extract_strided_slice %4 {offsets = [2, 0], sizes = [1, 64], strides = [1, 1]} : vector<4x64xf32> to vector<1x64xf32>
    %32 = vector.broadcast %31 : vector<1x64xf32> to vector<128x64xf32>
    %33 = arith.addf %30, %32 : vector<128x64xf32>
    %34 = math.tanh %33 : vector<128x64xf32>
    %35 = arith.truncf %34 : vector<128x64xf32> to vector<128x64xbf16>
    %cst_20 = arith.constant 2.500000e-01 : f32
    %36 = vector.broadcast %cst_20 : f32 to vector<64x64xf32>
    %37 = arith.mulf %10, %36 : vector<64x64xf32>
    %38 = arith.truncf %37 : vector<64x64xf32> to vector<64x64xbf16>
    %39 = arith.truncf %27 : vector<128x64xf32> to vector<128x64xbf16>
    %40 = vector.extract_strided_slice %38 {offsets = [0, 0], sizes = [64, 16], strides = [1, 1]} : vector<64x64xbf16> to vector<64x16xbf16>
    %41 = vector.extract_strided_slice %39 {offsets = [0, 0], sizes = [128, 16], strides = [1, 1]} : vector<128x64xbf16> to vector<128x16xbf16>
    %cst_21 = arith.constant dense<0.000000e+00> : vector<64x128xf32>
    %42 = tpu.matmul %40, %41, %cst_21 {dimension_numbers = #tpu.dot_dimension_numbers<[1], [1], [0], [0], [0, 0, 1, 0], [], []>} : vector<64x16xbf16>, vector<128x16xbf16>, vector<64x128xf32> -> vector<64x128xf32>
    %c0_22 = arith.constant 0 : index
    %c0_23 = arith.constant 0 : index
    %c0_24 = arith.constant 0 : index
    %c0_25 = arith.constant 0 : index
    %43 = vector.load %arg10[%c0_22, %c0_23, %c0_24, %c0_25] : memref<1x4x64x128xf32, #tpu.memory_space<vmem>>, vector<1x1x64x128xf32>
    %44 = vector.shape_cast %43 : vector<1x1x64x128xf32> to vector<64x128xf32>
    %45 = vector.shape_cast %42 : vector<64x128xf32> to vector<1x1x64x128xf32>
    tpu.vector_store %arg10[%c0_22, %c0_23, %c0_24, %c0_25], %45 {strides = array<i32>} : memref<1x4x64x128xf32, #tpu.memory_space<vmem>>, vector<1x1x64x128xf32>,
    %46 = vector.extract_strided_slice %38 {offsets = [0, 16], sizes = [64, 16], strides = [1, 1]} : vector<64x64xbf16> to vector<64x16xbf16>
    %47 = vector.extract_strided_slice %39 {offsets = [0, 16], sizes = [128, 16], strides = [1, 1]} : vector<128x64xbf16> to vector<128x16xbf16>
    %cst_26 = arith.constant dense<0.000000e+00> : vector<64x128xf32>
    %48 = tpu.matmul %46, %47, %cst_26 {dimension_numbers = #tpu.dot_dimension_numbers<[1], [1], [0], [0], [0, 0, 1, 0], [], []>} : vector<64x16xbf16>, vector<128x16xbf16>, vector<64x128xf32> -> vector<64x128xf32>
    %c0_27 = arith.constant 0 : index
    %c1_28 = arith.constant 1 : index
    %c0_29 = arith.constant 0 : index
    %c0_30 = arith.constant 0 : index
    %49 = vector.load %arg10[%c0_27, %c1_28, %c0_29, %c0_30] : memref<1x4x64x128xf32, #tpu.memory_space<vmem>>, vector<1x1x64x128xf32>
    %50 = vector.shape_cast %49 : vector<1x1x64x128xf32> to vector<64x128xf32>
    %51 = vector.shape_cast %48 : vector<64x128xf32> to vector<1x1x64x128xf32>
    tpu.vector_store %arg10[%c0_27, %c1_28, %c0_29, %c0_30], %51 {strides = array<i32>} : memref<1x4x64x128xf32, #tpu.memory_space<vmem>>, vector<1x1x64x128xf32>,
    %52 = arith.maximumf %42, %48 : vector<64x128xf32>
    %53 = vector.extract_strided_slice %38 {offsets = [0, 32], sizes = [64, 16], strides = [1, 1]} : vector<64x64xbf16> to vector<64x16xbf16>
    %54 = vector.extract_strided_slice %39 {offsets = [0, 32], sizes = [128, 16], strides = [1, 1]} : vector<128x64xbf16> to vector<128x16xbf16>
    %cst_31 = arith.constant dense<0.000000e+00> : vector<64x128xf32>
    %55 = tpu.matmul %53, %54, %cst_31 {dimension_numbers = #tpu.dot_dimension_numbers<[1], [1], [0], [0], [0, 0, 1, 0], [], []>} : vector<64x16xbf16>, vector<128x16xbf16>, vector<64x128xf32> -> vector<64x128xf32>
    %c0_32 = arith.constant 0 : index
    %c2_33 = arith.constant 2 : index
    %c0_34 = arith.constant 0 : index
    %c0_35 = arith.constant 0 : index
    %56 = vector.load %arg10[%c0_32, %c2_33, %c0_34, %c0_35] : memref<1x4x64x128xf32, #tpu.memory_space<vmem>>, vector<1x1x64x128xf32>
    %57 = vector.shape_cast %56 : vector<1x1x64x128xf32> to vector<64x128xf32>
    %58 = vector.shape_cast %55 : vector<64x128xf32> to vector<1x1x64x128xf32>
    tpu.vector_store %arg10[%c0_32, %c2_33, %c0_34, %c0_35], %58 {strides = array<i32>} : memref<1x4x64x128xf32, #tpu.memory_space<vmem>>, vector<1x1x64x128xf32>,
    %59 = arith.maximumf %52, %55 : vector<64x128xf32>
    %60 = vector.extract_strided_slice %38 {offsets = [0, 48], sizes = [64, 16], strides = [1, 1]} : vector<64x64xbf16> to vector<64x16xbf16>
    %61 = vector.extract_strided_slice %39 {offsets = [0, 48], sizes = [128, 16], strides = [1, 1]} : vector<128x64xbf16> to vector<128x16xbf16>
    %cst_36 = arith.constant dense<0.000000e+00> : vector<64x128xf32>
    %62 = tpu.matmul %60, %61, %cst_36 {dimension_numbers = #tpu.dot_dimension_numbers<[1], [1], [0], [0], [0, 0, 1, 0], [], []>} : vector<64x16xbf16>, vector<128x16xbf16>, vector<64x128xf32> -> vector<64x128xf32>
    %c0_37 = arith.constant 0 : index
    %c3_38 = arith.constant 3 : index
    %c0_39 = arith.constant 0 : index
    %c0_40 = arith.constant 0 : index
    %63 = vector.load %arg10[%c0_37, %c3_38, %c0_39, %c0_40] : memref<1x4x64x128xf32, #tpu.memory_space<vmem>>, vector<1x1x64x128xf32>
    %64 = vector.shape_cast %63 : vector<1x1x64x128xf32> to vector<64x128xf32>
    %65 = vector.shape_cast %62 : vector<64x128xf32> to vector<1x1x64x128xf32>
    tpu.vector_store %arg10[%c0_37, %c3_38, %c0_39, %c0_40], %65 {strides = array<i32>} : memref<1x4x64x128xf32, #tpu.memory_space<vmem>>, vector<1x1x64x128xf32>,
    %66 = arith.maximumf %59, %62 : vector<64x128xf32>
    %c0_41 = arith.constant 0 : index
    %c0_42 = arith.constant 0 : index
    %c0_43 = arith.constant 0 : index
    %c0_44 = arith.constant 0 : index
    %67 = vector.load %arg10[%c0_41, %c0_42, %c0_43, %c0_44] : memref<1x4x64x128xf32, #tpu.memory_space<vmem>>, vector<1x1x64x128xf32>
    %68 = vector.shape_cast %67 : vector<1x1x64x128xf32> to vector<64x128xf32>
    %69 = arith.subf %68, %66 : vector<64x128xf32>
    %70 = math.exp %69 : vector<64x128xf32>
    %c0_45 = arith.constant 0 : index
    %c0_46 = arith.constant 0 : index
    %c0_47 = arith.constant 0 : index
    %c0_48 = arith.constant 0 : index
    %71 = vector.load %arg10[%c0_45, %c0_46, %c0_47, %c0_48] : memref<1x4x64x128xf32, #tpu.memory_space<vmem>>, vector<1x1x64x128xf32>
    %72 = vector.shape_cast %71 : vector<1x1x64x128xf32> to vector<64x128xf32>
    %73 = vector.shape_cast %70 : vector<64x128xf32> to vector<1x1x64x128xf32>
    tpu.vector_store %arg10[%c0_45, %c0_46, %c0_47, %c0_48], %73 {strides = array<i32>} : memref<1x4x64x128xf32, #tpu.memory_space<vmem>>, vector<1x1x64x128xf32>,
    %c0_49 = arith.constant 0 : index
    %c1_50 = arith.constant 1 : index
    %c0_51 = arith.constant 0 : index
    %c0_52 = arith.constant 0 : index
    %74 = vector.load %arg10[%c0_49, %c1_50, %c0_51, %c0_52] : memref<1x4x64x128xf32, #tpu.memory_space<vmem>>, vector<1x1x64x128xf32>
    %75 = vector.shape_cast %74 : vector<1x1x64x128xf32> to vector<64x128xf32>
    %76 = arith.subf %75, %66 : vector<64x128xf32>
    %77 = math.exp %76 : vector<64x128xf32>
    %c0_53 = arith.constant 0 : index
    %c1_54 = arith.constant 1 : index
    %c0_55 = arith.constant 0 : index
    %c0_56 = arith.constant 0 : index
    %78 = vector.load %arg10[%c0_53, %c1_54, %c0_55, %c0_56] : memref<1x4x64x128xf32, #tpu.memory_space<vmem>>, vector<1x1x64x128xf32>
    %79 = vector.shape_cast %78 : vector<1x1x64x128xf32> to vector<64x128xf32>
    %80 = vector.shape_cast %77 : vector<64x128xf32> to vector<1x1x64x128xf32>
    tpu.vector_store %arg10[%c0_53, %c1_54, %c0_55, %c0_56], %80 {strides = array<i32>} : memref<1x4x64x128xf32, #tpu.memory_space<vmem>>, vector<1x1x64x128xf32>,
    %81 = arith.addf %70, %77 : vector<64x128xf32>
    %c0_57 = arith.constant 0 : index
    %c2_58 = arith.constant 2 : index
    %c0_59 = arith.constant 0 : index
    %c0_60 = arith.constant 0 : index
    %82 = vector.load %arg10[%c0_57, %c2_58, %c0_59, %c0_60] : memref<1x4x64x128xf32, #tpu.memory_space<vmem>>, vector<1x1x64x128xf32>
    %83 = vector.shape_cast %82 : vector<1x1x64x128xf32> to vector<64x128xf32>
    %84 = arith.subf %83, %66 : vector<64x128xf32>
    %85 = math.exp %84 : vector<64x128xf32>
    %c0_61 = arith.constant 0 : index
    %c2_62 = arith.constant 2 : index
    %c0_63 = arith.constant 0 : index
    %c0_64 = arith.constant 0 : index
    %86 = vector.load %arg10[%c0_61, %c2_62, %c0_63, %c0_64] : memref<1x4x64x128xf32, #tpu.memory_space<vmem>>, vector<1x1x64x128xf32>
    %87 = vector.shape_cast %86 : vector<1x1x64x128xf32> to vector<64x128xf32>
    %88 = vector.shape_cast %85 : vector<64x128xf32> to vector<1x1x64x128xf32>
    tpu.vector_store %arg10[%c0_61, %c2_62, %c0_63, %c0_64], %88 {strides = array<i32>} : memref<1x4x64x128xf32, #tpu.memory_space<vmem>>, vector<1x1x64x128xf32>,
    %89 = arith.addf %81, %85 : vector<64x128xf32>
    %c0_65 = arith.constant 0 : index
    %c3_66 = arith.constant 3 : index
    %c0_67 = arith.constant 0 : index
    %c0_68 = arith.constant 0 : index
    %90 = vector.load %arg10[%c0_65, %c3_66, %c0_67, %c0_68] : memref<1x4x64x128xf32, #tpu.memory_space<vmem>>, vector<1x1x64x128xf32>
    %91 = vector.shape_cast %90 : vector<1x1x64x128xf32> to vector<64x128xf32>
    %92 = arith.subf %91, %66 : vector<64x128xf32>
    %93 = math.exp %92 : vector<64x128xf32>
    %c0_69 = arith.constant 0 : index
    %c3_70 = arith.constant 3 : index
    %c0_71 = arith.constant 0 : index
    %c0_72 = arith.constant 0 : index
    %94 = vector.load %arg10[%c0_69, %c3_70, %c0_71, %c0_72] : memref<1x4x64x128xf32, #tpu.memory_space<vmem>>, vector<1x1x64x128xf32>
    %95 = vector.shape_cast %94 : vector<1x1x64x128xf32> to vector<64x128xf32>
    %96 = vector.shape_cast %93 : vector<64x128xf32> to vector<1x1x64x128xf32>
    tpu.vector_store %arg10[%c0_69, %c3_70, %c0_71, %c0_72], %96 {strides = array<i32>} : memref<1x4x64x128xf32, #tpu.memory_space<vmem>>, vector<1x1x64x128xf32>,
    %97 = arith.addf %89, %93 : vector<64x128xf32>
    %c0_73 = arith.constant 0 : index
    %c0_74 = arith.constant 0 : index
    %c0_75 = arith.constant 0 : index
    %98 = vector.load %arg8[%c0_73, %c0_74, %c0_75] : memref<1x64x128xf32, #tpu.memory_space<vmem>>, vector<1x64x128xf32>
    %99 = vector.shape_cast %98 : vector<1x64x128xf32> to vector<64x128xf32>
    %100 = math.exp %99 : vector<64x128xf32>
    %101 = tpu.reciprocal %97 {approx = true} : vector<64x128xf32> -> vector<64x128xf32>
    %102 = arith.mulf %100, %101 : vector<64x128xf32>
    %cst_76 = arith.constant 0.000000e+00 : f32
    %103 = vector.broadcast %cst_76 : f32 to vector<64x64xf32>
    %c0_77 = arith.constant 0 : index
    %c0_78 = arith.constant 0 : index
    %c0_79 = arith.constant 0 : index
    %c0_80 = arith.constant 0 : index
    %104 = vector.load %arg10[%c0_77, %c0_78, %c0_79, %c0_80] : memref<1x4x64x128xf32, #tpu.memory_space<vmem>>, vector<1x1x64x128xf32>
    %105 = vector.shape_cast %104 : vector<1x1x64x128xf32> to vector<64x128xf32>
    %106 = arith.mulf %105, %102 : vector<64x128xf32>
    %c0_81 = arith.constant 0 : index
    %c0_82 = arith.constant 0 : index
    %c0_83 = arith.constant 0 : index
    %c0_84 = arith.constant 0 : index
    %107 = vector.load %arg10[%c0_81, %c0_82, %c0_83, %c0_84] : memref<1x4x64x128xf32, #tpu.memory_space<vmem>>, vector<1x1x64x128xf32>
    %108 = vector.shape_cast %107 : vector<1x1x64x128xf32> to vector<64x128xf32>
    %109 = vector.shape_cast %106 : vector<64x128xf32> to vector<1x1x64x128xf32>
    tpu.vector_store %arg10[%c0_81, %c0_82, %c0_83, %c0_84], %109 {strides = array<i32>} : memref<1x4x64x128xf32, #tpu.memory_space<vmem>>, vector<1x1x64x128xf32>,
    %110 = vector.extract_strided_slice %35 {offsets = [0, 0], sizes = [128, 16], strides = [1, 1]} : vector<128x64xbf16> to vector<128x16xbf16>
    %111 = arith.truncf %106 : vector<64x128xf32> to vector<64x128xbf16>
    %cst_85 = arith.constant dense<0.000000e+00> : vector<64x16xf32>
    %112 = tpu.matmul %111, %110, %cst_85 {dimension_numbers = #tpu.dot_dimension_numbers<[1], [0], [0], [1], [0, 0, 1, 1], [], []>} : vector<64x128xbf16>, vector<128x16xbf16>, vector<64x16xf32> -> vector<64x16xf32>
    %113 = vector.extract_strided_slice %21 {offsets = [0, 0], sizes = [64, 16], strides = [1, 1]} : vector<64x64xf32> to vector<64x16xf32>
    %114 = arith.mulf %112, %113 : vector<64x16xf32>
    %115 = arith.truncf %114 : vector<64x16xf32> to vector<64x16xbf16>
    %c0_86 = arith.constant 0 : index
    %c0_87 = arith.constant 0 : index
    %c0_88 = arith.constant 0 : index
    %116 = vector.load %arg6[%c0_86, %c0_87, %c0_88] : memref<4x16x64xbf16, #tpu.memory_space<vmem>>, vector<1x16x64xbf16>
    %117 = vector.shape_cast %116 : vector<1x16x64xbf16> to vector<16x64xbf16>
    %cst_89 = arith.constant dense<0.000000e+00> : vector<64x64xf32>
    %118 = tpu.matmul %115, %117, %cst_89 {dimension_numbers = #tpu.dot_dimension_numbers<[1], [0], [0], [1], [0, 0, 1, 1], [], []>} : vector<64x16xbf16>, vector<16x64xbf16>, vector<64x64xf32> -> vector<64x64xf32>
    %119 = arith.addf %103, %118 : vector<64x64xf32>
    %c0_90 = arith.constant 0 : index
    %c1_91 = arith.constant 1 : index
    %c0_92 = arith.constant 0 : index
    %c0_93 = arith.constant 0 : index
    %120 = vector.load %arg10[%c0_90, %c1_91, %c0_92, %c0_93] : memref<1x4x64x128xf32, #tpu.memory_space<vmem>>, vector<1x1x64x128xf32>
    %121 = vector.shape_cast %120 : vector<1x1x64x128xf32> to vector<64x128xf32>
    %122 = arith.mulf %121, %102 : vector<64x128xf32>
    %c0_94 = arith.constant 0 : index
    %c1_95 = arith.constant 1 : index
    %c0_96 = arith.constant 0 : index
    %c0_97 = arith.constant 0 : index
    %123 = vector.load %arg10[%c0_94, %c1_95, %c0_96, %c0_97] : memref<1x4x64x128xf32, #tpu.memory_space<vmem>>, vector<1x1x64x128xf32>
    %124 = vector.shape_cast %123 : vector<1x1x64x128xf32> to vector<64x128xf32>
    %125 = vector.shape_cast %122 : vector<64x128xf32> to vector<1x1x64x128xf32>
    tpu.vector_store %arg10[%c0_94, %c1_95, %c0_96, %c0_97], %125 {strides = array<i32>} : memref<1x4x64x128xf32, #tpu.memory_space<vmem>>, vector<1x1x64x128xf32>,
    %126 = vector.extract_strided_slice %35 {offsets = [0, 16], sizes = [128, 16], strides = [1, 1]} : vector<128x64xbf16> to vector<128x16xbf16>
    %127 = arith.truncf %122 : vector<64x128xf32> to vector<64x128xbf16>
    %cst_98 = arith.constant dense<0.000000e+00> : vector<64x16xf32>
    %128 = tpu.matmul %127, %126, %cst_98 {dimension_numbers = #tpu.dot_dimension_numbers<[1], [0], [0], [1], [0, 0, 1, 1], [], []>} : vector<64x128xbf16>, vector<128x16xbf16>, vector<64x16xf32> -> vector<64x16xf32>
    %129 = vector.extract_strided_slice %21 {offsets = [0, 16], sizes = [64, 16], strides = [1, 1]} : vector<64x64xf32> to vector<64x16xf32>
    %130 = arith.mulf %128, %129 : vector<64x16xf32>
    %131 = arith.truncf %130 : vector<64x16xf32> to vector<64x16xbf16>
    %c1_99 = arith.constant 1 : index
    %c0_100 = arith.constant 0 : index
    %c0_101 = arith.constant 0 : index
    %132 = vector.load %arg6[%c1_99, %c0_100, %c0_101] : memref<4x16x64xbf16, #tpu.memory_space<vmem>>, vector<1x16x64xbf16>
    %133 = vector.shape_cast %132 : vector<1x16x64xbf16> to vector<16x64xbf16>
    %cst_102 = arith.constant dense<0.000000e+00> : vector<64x64xf32>
    %134 = tpu.matmul %131, %133, %cst_102 {dimension_numbers = #tpu.dot_dimension_numbers<[1], [0], [0], [1], [0, 0, 1, 1], [], []>} : vector<64x16xbf16>, vector<16x64xbf16>, vector<64x64xf32> -> vector<64x64xf32>
    %135 = arith.addf %119, %134 : vector<64x64xf32>
    %c0_103 = arith.constant 0 : index
    %c2_104 = arith.constant 2 : index
    %c0_105 = arith.constant 0 : index
    %c0_106 = arith.constant 0 : index
    %136 = vector.load %arg10[%c0_103, %c2_104, %c0_105, %c0_106] : memref<1x4x64x128xf32, #tpu.memory_space<vmem>>, vector<1x1x64x128xf32>
    %137 = vector.shape_cast %136 : vector<1x1x64x128xf32> to vector<64x128xf32>
    %138 = arith.mulf %137, %102 : vector<64x128xf32>
    %c0_107 = arith.constant 0 : index
    %c2_108 = arith.constant 2 : index
    %c0_109 = arith.constant 0 : index
    %c0_110 = arith.constant 0 : index
    %139 = vector.load %arg10[%c0_107, %c2_108, %c0_109, %c0_110] : memref<1x4x64x128xf32, #tpu.memory_space<vmem>>, vector<1x1x64x128xf32>
    %140 = vector.shape_cast %139 : vector<1x1x64x128xf32> to vector<64x128xf32>
    %141 = vector.shape_cast %138 : vector<64x128xf32> to vector<1x1x64x128xf32>
    tpu.vector_store %arg10[%c0_107, %c2_108, %c0_109, %c0_110], %141 {strides = array<i32>} : memref<1x4x64x128xf32, #tpu.memory_space<vmem>>, vector<1x1x64x128xf32>,
    %142 = vector.extract_strided_slice %35 {offsets = [0, 32], sizes = [128, 16], strides = [1, 1]} : vector<128x64xbf16> to vector<128x16xbf16>
    %143 = arith.truncf %138 : vector<64x128xf32> to vector<64x128xbf16>
    %cst_111 = arith.constant dense<0.000000e+00> : vector<64x16xf32>
    %144 = tpu.matmul %143, %142, %cst_111 {dimension_numbers = #tpu.dot_dimension_numbers<[1], [0], [0], [1], [0, 0, 1, 1], [], []>} : vector<64x128xbf16>, vector<128x16xbf16>, vector<64x16xf32> -> vector<64x16xf32>
    %145 = vector.extract_strided_slice %21 {offsets = [0, 32], sizes = [64, 16], strides = [1, 1]} : vector<64x64xf32> to vector<64x16xf32>
    %146 = arith.mulf %144, %145 : vector<64x16xf32>
    %147 = arith.truncf %146 : vector<64x16xf32> to vector<64x16xbf16>
    %c2_112 = arith.constant 2 : index
    %c0_113 = arith.constant 0 : index
    %c0_114 = arith.constant 0 : index
    %148 = vector.load %arg6[%c2_112, %c0_113, %c0_114] : memref<4x16x64xbf16, #tpu.memory_space<vmem>>, vector<1x16x64xbf16>
    %149 = vector.shape_cast %148 : vector<1x16x64xbf16> to vector<16x64xbf16>
    %cst_115 = arith.constant dense<0.000000e+00> : vector<64x64xf32>
    %150 = tpu.matmul %147, %149, %cst_115 {dimension_numbers = #tpu.dot_dimension_numbers<[1], [0], [0], [1], [0, 0, 1, 1], [], []>} : vector<64x16xbf16>, vector<16x64xbf16>, vector<64x64xf32> -> vector<64x64xf32>
    %151 = arith.addf %135, %150 : vector<64x64xf32>
    %c0_116 = arith.constant 0 : index
    %c3_117 = arith.constant 3 : index
    %c0_118 = arith.constant 0 : index
    %c0_119 = arith.constant 0 : index
    %152 = vector.load %arg10[%c0_116, %c3_117, %c0_118, %c0_119] : memref<1x4x64x128xf32, #tpu.memory_space<vmem>>, vector<1x1x64x128xf32>
    %153 = vector.shape_cast %152 : vector<1x1x64x128xf32> to vector<64x128xf32>
    %154 = arith.mulf %153, %102 : vector<64x128xf32>
    %c0_120 = arith.constant 0 : index
    %c3_121 = arith.constant 3 : index
    %c0_122 = arith.constant 0 : index
    %c0_123 = arith.constant 0 : index
    %155 = vector.load %arg10[%c0_120, %c3_121, %c0_122, %c0_123] : memref<1x4x64x128xf32, #tpu.memory_space<vmem>>, vector<1x1x64x128xf32>
    %156 = vector.shape_cast %155 : vector<1x1x64x128xf32> to vector<64x128xf32>
    %157 = vector.shape_cast %154 : vector<64x128xf32> to vector<1x1x64x128xf32>
    tpu.vector_store %arg10[%c0_120, %c3_121, %c0_122, %c0_123], %157 {strides = array<i32>} : memref<1x4x64x128xf32, #tpu.memory_space<vmem>>, vector<1x1x64x128xf32>,
    %158 = vector.extract_strided_slice %35 {offsets = [0, 48], sizes = [128, 16], strides = [1, 1]} : vector<128x64xbf16> to vector<128x16xbf16>
    %159 = arith.truncf %154 : vector<64x128xf32> to vector<64x128xbf16>
    %cst_124 = arith.constant dense<0.000000e+00> : vector<64x16xf32>
    %160 = tpu.matmul %159, %158, %cst_124 {dimension_numbers = #tpu.dot_dimension_numbers<[1], [0], [0], [1], [0, 0, 1, 1], [], []>} : vector<64x128xbf16>, vector<128x16xbf16>, vector<64x16xf32> -> vector<64x16xf32>
    %161 = vector.extract_strided_slice %21 {offsets = [0, 48], sizes = [64, 16], strides = [1, 1]} : vector<64x64xf32> to vector<64x16xf32>
    %162 = arith.mulf %160, %161 : vector<64x16xf32>
    %163 = arith.truncf %162 : vector<64x16xf32> to vector<64x16xbf16>
    %c3_125 = arith.constant 3 : index
    %c0_126 = arith.constant 0 : index
    %c0_127 = arith.constant 0 : index
    %164 = vector.load %arg6[%c3_125, %c0_126, %c0_127] : memref<4x16x64xbf16, #tpu.memory_space<vmem>>, vector<1x16x64xbf16>
    %165 = vector.shape_cast %164 : vector<1x16x64xbf16> to vector<16x64xbf16>
    %cst_128 = arith.constant dense<0.000000e+00> : vector<64x64xf32>
    %166 = tpu.matmul %163, %165, %cst_128 {dimension_numbers = #tpu.dot_dimension_numbers<[1], [0], [0], [1], [0, 0, 1, 1], [], []>} : vector<64x16xbf16>, vector<16x64xbf16>, vector<64x64xf32> -> vector<64x64xf32>
    %167 = arith.addf %151, %166 : vector<64x64xf32>
    %c0_129 = arith.constant 0 : index
    %c0_130 = arith.constant 0 : index
    %168 = vector.load %arg7[%c0_129, %c0_130] : memref<1x64xf32, #tpu.memory_space<vmem>>, vector<1x64xf32>
    %169 = vector.broadcast %168 : vector<1x64xf32> to vector<64x64xf32>
    %170 = arith.addf %167, %169 : vector<64x64xf32>
    %c0_131 = arith.constant 0 : index
    %c0_132 = arith.constant 0 : index
    %c0_133 = arith.constant 0 : index
    %171 = vector.load %arg9[%c0_131, %c0_132, %c0_133] : memref<1x64x64xf32, #tpu.memory_space<vmem>>, vector<1x64x64xf32>
    %172 = vector.shape_cast %171 : vector<1x64x64xf32> to vector<64x64xf32>
    %173 = vector.shape_cast %170 : vector<64x64xf32> to vector<1x64x64xf32>
    tpu.vector_store %arg9[%c0_131, %c0_132, %c0_133], %173 {strides = array<i32>} : memref<1x64x64xf32, #tpu.memory_space<vmem>>, vector<1x64x64xf32>,
    return
  }
  func.func @transform_0(%arg0: i32, %arg1: i32) -> (i32, i32, i32) {
    %c0_i32 = arith.constant 0 : i32
    %c0_i32_0 = arith.constant 0 : i32
    return %arg0, %arg1, %c0_i32 : i32, i32, i32
  }
  func.func @transform_1(%arg0: i32, %arg1: i32) -> (i32, i32, i32) {
    %c0_i32 = arith.constant 0 : i32
    %c0_i32_0 = arith.constant 0 : i32
    %c0_i32_1 = arith.constant 0 : i32
    return %arg0, %c0_i32, %c0_i32_0 : i32, i32, i32
  }
  func.func @transform_2(%arg0: i32, %arg1: i32) -> (i32, i32, i32) {
    %c0_i32 = arith.constant 0 : i32
    %c0_i32_0 = arith.constant 0 : i32
    %c0_i32_1 = arith.constant 0 : i32
    %c0_i32_2 = arith.constant 0 : i32
    return %c0_i32, %c0_i32_0, %c0_i32_1 : i32, i32, i32
  }
  func.func @transform_3(%arg0: i32, %arg1: i32) -> (i32, i32) {
    %c0_i32 = arith.constant 0 : i32
    %c0_i32_0 = arith.constant 0 : i32
    %c0_i32_1 = arith.constant 0 : i32
    return %c0_i32, %c0_i32_0 : i32, i32
  }
  func.func @transform_4(%arg0: i32, %arg1: i32) -> (i32, i32, i32) {
    %c0_i32 = arith.constant 0 : i32
    %c0_i32_0 = arith.constant 0 : i32
    %c0_i32_1 = arith.constant 0 : i32
    %c0_i32_2 = arith.constant 0 : i32
    return %c0_i32, %c0_i32_0, %c0_i32_1 : i32, i32, i32
  }
  func.func @transform_5(%arg0: i32, %arg1: i32) -> (i32, i32) {
    %c0_i32 = arith.constant 0 : i32
    %c0_i32_0 = arith.constant 0 : i32
    %c0_i32_1 = arith.constant 0 : i32
    return %c0_i32, %c0_i32_0 : i32, i32
  }
  func.func @transform_6(%arg0: i32, %arg1: i32) -> (i32, i32, i32) {
    %c0_i32 = arith.constant 0 : i32
    %c0_i32_0 = arith.constant 0 : i32
    return %arg0, %arg1, %c0_i32 : i32, i32, i32
  }
  func.func @transform_7(%arg0: i32, %arg1: i32) -> (i32, i32, i32) {
    %c0_i32 = arith.constant 0 : i32
    %c0_i32_0 = arith.constant 0 : i32
    return %arg0, %arg1, %c0_i32 : i32, i32, i32
  }
  func.func @transform_8(%arg0: i32, %arg1: i32) -> (i32, i32, i32, i32) {
    %c0_i32 = arith.constant 0 : i32
    %c0_i32_0 = arith.constant 0 : i32
    %c0_i32_1 = arith.constant 0 : i32
    return %arg0, %c0_i32, %arg1, %c0_i32_0 : i32, i32, i32, i32
  }
}

</mosaic_0001>

<llo_original>
// kernel: tpu_custom_call.1
$region0: #{tpu_custom_call.1}
  #allocation0 [shape = 'u32[]', space=smem, size = 0x4, offset = 0x4, fixed_abs, tag = 'smem constant byte address 0x4 - core index']
  #allocation1 [shape = 'u32[144,128]{1,0:T(1,128)}', space=vmem, size = 0x12000, scoped, tag = 'internal scratch']
  #allocation6 [shape = 's32[]', space=sflag, size = 0x4, offset = 0, fixed_abs, tag = 'sflag constant byte address 0x0 - dummy sync flag']
  %s0 = inlined_call_operand.vmem [shape: bf16[2,128,64], index: 0, kind: input, shape index: {}]
  %s1 = inlined_call_operand.vmem [shape: bf16[2,128,64], index: 1, kind: input, shape index: {}]
  %s2 = inlined_call_operand.hbm [shape: bf16[4,64,64], index: 2, kind: input, shape index: {}]
  %s3 = inlined_call_operand.vmem [shape: f32[4,64], index: 3, kind: input, shape index: {}]
  %s4 = inlined_call_operand.vmem [shape: bf16[4,16,64], index: 4, kind: input, shape index: {}]
  %s5 = inlined_call_operand.vmem [shape: f32[1,64], index: 5, kind: input, shape index: {}]
  %s6 = inlined_call_operand.vmem [shape: f32[2,128,128], index: 6, kind: input, shape index: {}]
  %s7 = inlined_call_operand.vmem [shape: f32[2,128,64], index: 7, kind: output, shape index: {0}]
  %s8 = inlined_call_operand.hbm [shape: f32[2,4,128,128], index: 8, kind: output, shape index: {1}]
  %9 = xla_tuple %s7, %s8
  %s10 = sld [smem:[#allocation0]]
  $region73: #{tpu_custom_call.1} parent=0
    _
  %s12 = ssub.s32 1, %s10
  %s13 = scalar_select 0, %s12, %s10
  $region1: #{tpu_custom_call.1} parent=0
    #allocation2 [shape = 'u8[65536]{0}', space=vmem, size = 0x10000, scoped, tag = 'input window, operand 2, single buffered']
    #allocation3 [shape = 's32[2]{0}', space=sflag, size = 0x8, scoped, tag = 'scoped memory for tpu_custom_call.1']
    #allocation4 [shape = 's32[2]{0}', space=sflag, size = 0x8, scoped, tag = 'scoped memory for tpu_custom_call.1']
    #allocation5 [shape = 'u8[262144]{0}', space=vmem, size = 0x40000, scoped, tag = 'output window, operand 1']
    %14 = vsyncpa [#allocation3], 0
    %15 = vsyncpa [#allocation4], 0
    %s16 = scalar_lea.sflag [#allocation4], 1
    %17 = vsyncpa %s16, 0
    loop: start=0, step=1, limit=6
    $region2: #{tpu_custom_call.1} parent=1 // loop_pre_header
      _
    $region3: #{tpu_custom_call.1} parent=1 // loop_header
      %s19 = sphi 0, %s23
      %p20 = scmp.ge.s32.totalorder %s19, 6
      %s26 = sphi 0, %s38
      %s27 = sphi 0, %s34
      %s28 = sphi 0, %s26
      %s29 = sphi 0, %s27
      %s30 = sphi 0, %s28
      %s31 = sphi 0, %s29
      %s43 = sphi 0, %s45
      %s46 = sphi 0, %s43
      %s47 = sphi 0, %s46
      %s63 = sphi 0, %s47
      %s69 = sphi 0, %s71
      %s72 = sphi 0, %s69
      %s73 = sphi 0, %s72
      %s89 = sphi 0, %s73
      %s93 = sphi 0, %s93
      %s95 = sphi 0, %s93
      %s96 = sphi 0, %s95
      %s110 = sphi 0, %s96
      %s114 = sphi 0, %s114
      %s116 = sphi 0, %s114
      %s117 = sphi 0, %s116
      %s131 = sphi 0, %s117
      %s135 = sphi 0, %s135
      %s137 = sphi 0, %s135
      %s138 = sphi 0, %s137
      %s152 = sphi 0, %s138
      %s156 = sphi 0, %s156
      %s158 = sphi 0, %s156
      %s159 = sphi 0, %s158
      %s173 = sphi 0, %s159
      %s181 = sphi 0, %s183
      %s184 = sphi 0, %s181
      %s185 = sphi 0, %s184
      %s201 = sphi 0, %s185
      %s209 = sphi 0, %s211
      %s212 = sphi 0, %s209
      %s213 = sphi 0, %s212
      %s229 = sphi 0, %s213
      %s237 = sphi 0, %s239
      %s240 = sphi 0, %s237
      %s241 = sphi 0, %s240
      %s257 = sphi 0, %s241
    $region4: #{tpu_custom_call.1} parent=1 // loop_header_branch
      %22 = sbr.rel (%p20) target = $region8
    $region5: #{tpu_custom_call.1} parent=1 // loop_body
      %s24 = ssub.s32 %s19, 1
      %s25 = ssub.s32 %s19, 2
      %s32 = sadd.s32 1, %s27
      %p33 = scmp.ge.s32.totalorder %s32, 2
      %s34 = scalar_select %p33, 0, %s32
      %s35 = sadd.s32 1, %s26
      %s36 = scalar_select %p33, %s35, %s26
      %p37 = scmp.ge.s32.totalorder %s36, 2
      %s38 = scalar_select %p37, 0, %s36
      %s39 = ssub.s32 %s26, %s38
      %s40 = ssub.s32 %s27, %s34
      %s41 = sor.u32 %s39, %s40
      %p42 = scmp.eq.s32.totalorder %s41, 0
      %s44 = sadd.s32 %s43, 1
      %s45 = scalar_select %p42, %s43, %s44
      %p48 = pneg %p42
      %p49 = scmp.eq.s32.totalorder %s19, 3
      %p50 = por %p48, %p49
      %p51 = scmp.ne.s32.totalorder %s43, %s46
      %p52 = scmp.eq.s32.totalorder %s19, 0
      %p53 = por %p51, %p52
      %p54 = scmp.ne.s32.totalorder %s43, %s46
      %p55 = scmp.eq.s32.totalorder %s24, 3
      %p56 = por %p54, %p55
      %p57 = scmp.ne.s32.totalorder %s46, %s47
      %p58 = scmp.eq.s32.totalorder %s24, 0
      %p59 = por %p57, %p58
      %p60 = scmp.ne.s32.totalorder %s46, %s47
      %p61 = scmp.eq.s32.totalorder %s25, 3
      %p62 = por %p60, %p61
      %p64 = scmp.ne.s32.totalorder %s47, %s63
      %p65 = scmp.eq.s32.totalorder %s25, 0
      %p66 = por %p64, %p65
      %s67 = ssub.s32 %s26, %s38
      %p68 = scmp.eq.s32.totalorder %s67, 0
      %s70 = sadd.s32 %s69, 1
      %s71 = scalar_select %p68, %s69, %s70
      %p74 = pneg %p68
      %p75 = scmp.eq.s32.totalorder %s19, 3
      %p76 = por %p74, %p75
      %p77 = scmp.ne.s32.totalorder %s69, %s72
      %p78 = scmp.eq.s32.totalorder %s19, 0
      %p79 = por %p77, %p78
      %p80 = scmp.ne.s32.totalorder %s69, %s72
      %p81 = scmp.eq.s32.totalorder %s24, 3
      %p82 = por %p80, %p81
      %p83 = scmp.ne.s32.totalorder %s72, %s73
      %p84 = scmp.eq.s32.totalorder %s24, 0
      %p85 = por %p83, %p84
      %p86 = scmp.ne.s32.totalorder %s72, %s73
      %p87 = scmp.eq.s32.totalorder %s25, 3
      %p88 = por %p86, %p87
      %p90 = scmp.ne.s32.totalorder %s73, %s89
      %p91 = scmp.eq.s32.totalorder %s25, 0
      %p92 = por %p90, %p91
      %s94 = sadd.s32 %s93, 1
      %p97 = scmp.eq.s32.totalorder %s19, 3
      %p98 = scmp.ne.s32.totalorder %s93, %s95
      %p99 = scmp.eq.s32.totalorder %s19, 0
      %p100 = por %p98, %p99
      %p101 = scmp.ne.s32.totalorder %s93, %s95
      %p102 = scmp.eq.s32.totalorder %s24, 3
      %p103 = por %p101, %p102
      %p104 = scmp.ne.s32.totalorder %s95, %s96
      %p105 = scmp.eq.s32.totalorder %s24, 0
      %p106 = por %p104, %p105
      %p107 = scmp.ne.s32.totalorder %s95, %s96
      %p108 = scmp.eq.s32.totalorder %s25, 3
      %p109 = por %p107, %p108
      %p111 = scmp.ne.s32.totalorder %s96, %s110
      %p112 = scmp.eq.s32.totalorder %s25, 0
      %p113 = por %p111, %p112
      %s115 = sadd.s32 %s114, 1
      %p118 = scmp.eq.s32.totalorder %s19, 3
      %p119 = scmp.ne.s32.totalorder %s114, %s116
      %p120 = scmp.eq.s32.totalorder %s19, 0
      %p121 = por %p119, %p120
      %p122 = scmp.ne.s32.totalorder %s114, %s116
      %p123 = scmp.eq.s32.totalorder %s24, 3
      %p124 = por %p122, %p123
      %p125 = scmp.ne.s32.totalorder %s116, %s117
      %p126 = scmp.eq.s32.totalorder %s24, 0
      %p127 = por %p125, %p126
      %p128 = scmp.ne.s32.totalorder %s116, %s117
      %p129 = scmp.eq.s32.totalorder %s25, 3
      %p130 = por %p128, %p129
      %p132 = scmp.ne.s32.totalorder %s117, %s131
      %p133 = scmp.eq.s32.totalorder %s25, 0
      %p134 = por %p132, %p133
      %s136 = sadd.s32 %s135, 1
      %p139 = scmp.eq.s32.totalorder %s19, 3
      %p140 = scmp.ne.s32.totalorder %s135, %s137
      %p141 = scmp.eq.s32.totalorder %s19, 0
      %p142 = por %p140, %p141
      %p143 = scmp.ne.s32.totalorder %s135, %s137
      %p144 = scmp.eq.s32.totalorder %s24, 3
      %p145 = por %p143, %p144
      %p146 = scmp.ne.s32.totalorder %s137, %s138
      %p147 = scmp.eq.s32.totalorder %s24, 0
      %p148 = por %p146, %p147
      %p149 = scmp.ne.s32.totalorder %s137, %s138
      %p150 = scmp.eq.s32.totalorder %s25, 3
      %p151 = por %p149, %p150
      %p153 = scmp.ne.s32.totalorder %s138, %s152
      %p154 = scmp.eq.s32.totalorder %s25, 0
      %p155 = por %p153, %p154
      %s157 = sadd.s32 %s156, 1
      %p160 = scmp.eq.s32.totalorder %s19, 3
      %p161 = scmp.ne.s32.totalorder %s156, %s158
      %p162 = scmp.eq.s32.totalorder %s19, 0
      %p163 = por %p161, %p162
      %p164 = scmp.ne.s32.totalorder %s156, %s158
      %p165 = scmp.eq.s32.totalorder %s24, 3
      %p166 = por %p164, %p165
      %p167 = scmp.ne.s32.totalorder %s158, %s159
      %p168 = scmp.eq.s32.totalorder %s24, 0
      %p169 = por %p167, %p168
      %p170 = scmp.ne.s32.totalorder %s158, %s159
      %p171 = scmp.eq.s32.totalorder %s25, 3
      %p172 = por %p170, %p171
      %p174 = scmp.ne.s32.totalorder %s159, %s173
      %p175 = scmp.eq.s32.totalorder %s25, 0
      %p176 = por %p174, %p175
      %s177 = ssub.s32 %s26, %s38
      %s178 = ssub.s32 %s27, %s34
      %s179 = sor.u32 %s177, %s178
      %p180 = scmp.eq.s32.totalorder %s179, 0
      %s182 = sadd.s32 %s181, 1
      %s183 = scalar_select %p180, %s181, %s182
      %p186 = pneg %p180
      %p187 = scmp.eq.s32.totalorder %s19, 3
      %p188 = por %p186, %p187
      %p189 = scmp.ne.s32.totalorder %s181, %s184
      %p190 = scmp.eq.s32.totalorder %s19, 0
      %p191 = por %p189, %p190
      %p192 = scmp.ne.s32.totalorder %s181, %s184
      %p193 = scmp.eq.s32.totalorder %s24, 3
      %p194 = por %p192, %p193
      %p195 = scmp.ne.s32.totalorder %s184, %s185
      %p196 = scmp.eq.s32.totalorder %s24, 0
      %p197 = por %p195, %p196
      %p198 = scmp.ne.s32.totalorder %s184, %s185
      %p199 = scmp.eq.s32.totalorder %s25, 3
      %p200 = por %p198, %p199
      %p202 = scmp.ne.s32.totalorder %s185, %s201
      %p203 = scmp.eq.s32.totalorder %s25, 0
      %p204 = por %p202, %p203
      %s205 = ssub.s32 %s26, %s38
      %s206 = ssub.s32 %s27, %s34
      %s207 = sor.u32 %s205, %s206
      %p208 = scmp.eq.s32.totalorder %s207, 0
      %s210 = sadd.s32 %s209, 1
      %s211 = scalar_select %p208, %s209, %s210
      %p214 = pneg %p208
      %p215 = scmp.eq.s32.totalorder %s19, 3
      %p216 = por %p214, %p215
      %p217 = scmp.ne.s32.totalorder %s209, %s212
      %p218 = scmp.eq.s32.totalorder %s19, 0
      %p219 = por %p217, %p218
      %p220 = scmp.ne.s32.totalorder %s209, %s212
      %p221 = scmp.eq.s32.totalorder %s24, 3
      %p222 = por %p220, %p221
      %p223 = scmp.ne.s32.totalorder %s212, %s213
      %p224 = scmp.eq.s32.totalorder %s24, 0
      %p225 = por %p223, %p224
      %p226 = scmp.ne.s32.totalorder %s212, %s213
      %p227 = scmp.eq.s32.totalorder %s25, 3
      %p228 = por %p226, %p227
      %p230 = scmp.ne.s32.totalorder %s213, %s229
      %p231 = scmp.eq.s32.totalorder %s25, 0
      %p232 = por %p230, %p231
      %s233 = ssub.s32 %s26, %s38
      %s234 = ssub.s32 %s27, %s34
      %s235 = sor.u32 %s233, %s234
      %p236 = scmp.eq.s32.totalorder %s235, 0
      %s238 = sadd.s32 %s237, 1
      %s239 = scalar_select %p236, %s237, %s238
      %p242 = pneg %p236
      %p243 = scmp.eq.s32.totalorder %s19, 3
      %p244 = por %p242, %p243
      %p245 = scmp.ne.s32.totalorder %s237, %s240
      %p246 = scmp.eq.s32.totalorder %s19, 0
      %p247 = por %p245, %p246
      %p248 = scmp.ne.s32.totalorder %s237, %s240
      %p249 = scmp.eq.s32.totalorder %s24, 3
      %p250 = por %p248, %p249
      %p251 = scmp.ne.s32.totalorder %s240, %s241
      %p252 = scmp.eq.s32.totalorder %s24, 0
      %p253 = por %p251, %p252
      %p254 = scmp.ne.s32.totalorder %s240, %s241
      %p255 = scmp.eq.s32.totalorder %s25, 3
      %p256 = por %p254, %p255
      %p258 = scmp.ne.s32.totalorder %s241, %s257
      %p259 = scmp.eq.s32.totalorder %s25, 0
      %p260 = por %p258, %p259
      %p261 = scmp.le.s32.totalorder 1, %s19
      %p262 = scmp.lt.s32.totalorder %s19, 5
      %p263 = pnand %p261, %p262
      %p264 = pneg %p263
      // Predicated region
      $region9: #{tpu_custom_call.1} parent=5 // pred_check
        _
      $region10: #{tpu_custom_call.1} parent=5 // pred_check_branch
        %266 = sbr.rel (%p263) target = $region12
      $region11: #{tpu_custom_call.1} parent=5 // pred_region
        %s267 = ssub.s32 %s19, 1
        // Predicated region
        $region13: #{tpu_custom_call.1} parent=11 // pred_check
          %p268 = pneg %p106
        $region14: #{tpu_custom_call.1} parent=11 // pred_check_branch
          %270 = sbr.rel (%p268) target = $region16
        $region15: #{tpu_custom_call.1} parent=11 // pred_region
          %s272 = ssub.s32 2048, 2048
          %273 = vsyncadd [#allocation3], %s272
          %s274 = sshll.u32 [#allocation2], 4
          %s275 = int_to_ptr.vmem [resolvable:$true] %s274
          %280 = dma.hbm_to_vmem [thread:$0]  %s2, 2048, %s275, [#allocation3], 64, 64, 4
        $region16: #{tpu_custom_call.1} parent=11 // pred_fallthru
          _
        // Predicated region
        $region17: #{tpu_custom_call.1} parent=11 // pred_check
          %p281 = pneg %p127
        $region18: #{tpu_custom_call.1} parent=11 // pred_check_branch
          %283 = sbr.rel (%p281) target = $region20
        $region19: #{tpu_custom_call.1} parent=11 // pred_region
          _
        $region20: #{tpu_custom_call.1} parent=11 // pred_fallthru
          _
        // Predicated region
        $region21: #{tpu_custom_call.1} parent=11 // pred_check
          %p284 = pneg %p148
        $region22: #{tpu_custom_call.1} parent=11 // pred_check_branch
          %286 = sbr.rel (%p284) target = $region24
        $region23: #{tpu_custom_call.1} parent=11 // pred_region
          _
        $region24: #{tpu_custom_call.1} parent=11 // pred_fallthru
          _
        // Predicated region
        $region25: #{tpu_custom_call.1} parent=11 // pred_check
          %p287 = pneg %p169
        $region26: #{tpu_custom_call.1} parent=11 // pred_check_branch
          %289 = sbr.rel (%p287) target = $region28
        $region27: #{tpu_custom_call.1} parent=11 // pred_region
          _
        $region28: #{tpu_custom_call.1} parent=11 // pred_fallthru
          _
      $region12: #{tpu_custom_call.1} parent=5 // pred_fallthru
        _
      %p290 = scmp.lt.s32.totalorder %s19, 4
      // Predicated region
      $region29: #{tpu_custom_call.1} parent=5 // pred_check
        %p291 = pneg %p290
      $region30: #{tpu_custom_call.1} parent=5 // pred_check_branch
        %293 = sbr.rel (%p291) target = $region32
      $region31: #{tpu_custom_call.1} parent=5 // pred_region
        // Predicated region
        $region33: #{tpu_custom_call.1} parent=31 // pred_check
          %p294 = pneg %p53
        $region34: #{tpu_custom_call.1} parent=31 // pred_check_branch
          %296 = sbr.rel (%p294) target = $region36
        $region35: #{tpu_custom_call.1} parent=31 // pred_region
          %s297 = smul.u32 8, %s27
          %p298 = scmp.lt.s32.totalorder %s26, 1
          %s299 = scalar_select %p298, %s26, 1
          %p300 = scmp.lt.s32.totalorder %s297, 15
          %s301 = scalar_select %p300, %s297, 15
          %s302 = smul.addr %s299, 16
          %s303 = sadd.s32 %s301, %s302
          %s304 = smul.addr %s303, 4
          %s305 = scalar_lea.vmem %s0, %s304
          %s306 = smul.u32 8, %s27
        $region36: #{tpu_custom_call.1} parent=31 // pred_fallthru
          _
        // Predicated region
        $region37: #{tpu_custom_call.1} parent=31 // pred_check
          %p307 = pneg %p79
        $region38: #{tpu_custom_call.1} parent=31 // pred_check_branch
          %309 = sbr.rel (%p307) target = $region40
        $region39: #{tpu_custom_call.1} parent=31 // pred_region
          %p310 = scmp.lt.s32.totalorder %s26, 1
          %s311 = scalar_select %p310, %s26, 1
          %s312 = smul.addr %s311, 16
          %s313 = smul.addr %s312, 4
          %s314 = scalar_lea.vmem %s1, %s313
        $region40: #{tpu_custom_call.1} parent=31 // pred_fallthru
          _
        // Predicated region
        $region41: #{tpu_custom_call.1} parent=31 // pred_check
          %p315 = pneg %p191
        $region42: #{tpu_custom_call.1} parent=31 // pred_check_branch
          %317 = sbr.rel (%p315) target = $region44
        $region43: #{tpu_custom_call.1} parent=31 // pred_region
          %s318 = smul.u32 8, %s27
          %p319 = scmp.lt.s32.totalorder %s26, 1
          %s320 = scalar_select %p319, %s26, 1
          %p321 = scmp.lt.s32.totalorder %s318, 15
          %s322 = scalar_select %p321, %s318, 15
          %s323 = smul.addr %s320, 16
          %s324 = sadd.s32 %s322, %s323
          %s325 = smul.addr %s324, 8
          %s326 = scalar_lea.vmem %s6, %s325
          %s327 = smul.u32 8, %s27
        $region44: #{tpu_custom_call.1} parent=31 // pred_fallthru
          _
      $region32: #{tpu_custom_call.1} parent=5 // pred_fallthru
        _
      %p328 = scmp.le.s32.totalorder 1, %s19
      %p329 = scmp.lt.s32.totalorder %s19, 5
      %p330 = pnand %p328, %p329
      %p331 = pneg %p330
      // Predicated region
      $region45: #{tpu_custom_call.1} parent=5 // pred_check
        _
      $region46: #{tpu_custom_call.1} parent=5 // pred_check_branch
        %333 = sbr.rel (%p330) target = $region48
      $region47: #{tpu_custom_call.1} parent=5 // pred_region
        %s334 = ssub.s32 %s19, 1
        // Predicated region
        $region49: #{tpu_custom_call.1} parent=47 // pred_check
          %p335 = pneg %p106
        $region50: #{tpu_custom_call.1} parent=47 // pred_check_branch
          %337 = sbr.rel (%p335) target = $region52
        $region51: #{tpu_custom_call.1} parent=47 // pred_region
          %338 = dma.done [#allocation3], 2048
        $region52: #{tpu_custom_call.1} parent=47 // pred_fallthru
          _
        %s339 = smul.u32 8, %s29
        %p340 = scmp.lt.s32.totalorder %s28, 1
        %s341 = scalar_select %p340, %s28, 1
        %p342 = scmp.lt.s32.totalorder %s339, 15
        %s343 = scalar_select %p342, %s339, 15
        %s344 = smul.addr %s341, 16
        %s345 = sadd.s32 %s343, %s344
        %s346 = smul.addr %s345, 4
        %s347 = scalar_lea.vmem %s0, %s346
        %p348 = pneg %p59
        %p349 = pneg %p56
        %p350 = scmp.lt.s32.totalorder %s28, 1
        %s351 = scalar_select %p350, %s28, 1
        %s352 = smul.addr %s351, 16
        %s353 = smul.addr %s352, 4
        %s354 = scalar_lea.vmem %s1, %s353
        %p355 = pneg %p85
        %p356 = pneg %p82
        %p357 = pneg %p106
        %p358 = pneg %p103
        %p359 = pneg %p127
        %p360 = pneg %p124
        %p361 = pneg %p148
        %p362 = pneg %p145
        %p363 = pneg %p169
        %p364 = pneg %p166
        %s365 = smul.u32 8, %s29
        %p366 = scmp.lt.s32.totalorder %s28, 1
        %s367 = scalar_select %p366, %s28, 1
        %p368 = scmp.lt.s32.totalorder %s365, 15
        %s369 = scalar_select %p368, %s365, 15
        %s370 = smul.addr %s367, 16
        %s371 = sadd.s32 %s369, %s370
        %s372 = smul.addr %s371, 8
        %s373 = scalar_lea.vmem %s6, %s372
        %p374 = pneg %p197
        %p375 = pneg %p194
        %p376 = pneg %p225
        %p377 = pneg %p222
        %s378 = smul.u32 8, %s29
        %p379 = scmp.lt.s32.totalorder %s28, 1
        %s380 = scalar_select %p379, %s28, 1
        %p381 = scmp.lt.s32.totalorder %s378, 15
        %s382 = scalar_select %p381, %s378, 15
        %s383 = smul.addr %s380, 16
        %s384 = sadd.s32 %s382, %s383
        %s385 = smul.addr %s384, 8
        %s386 = scalar_lea.vmem %s7, %s385
        %p387 = pneg %p253
        %p388 = pneg %p250
        %s389 = sand.u32 %s240, 1
        %s390 = scalar_lea.sflag [#allocation4], %s389
        %s391 = sand.u32 %s240, 1
        %s392 = smul.addr %s391, 256
        %s393 = scalar_lea.vmem [#allocation5], %s392
        %s394 = smul.u32 8, %s29
        %p395 = scmp.lt.s32.totalorder %s28, 1
        %s396 = scalar_select %p395, %s28, 1
        %p397 = scmp.lt.s32.totalorder %s394, 15
        %s398 = scalar_select %p397, %s394, 15
        %s399 = smul.addr %s396, 16
        %s400 = sadd.s32 %s398, %s399
        %s401 = smul.addr %s400, 4
        %s402 = scalar_lea.vmem %s0, %s401
        %s403 = smul.u32 8, %s29
        %p404 = scmp.lt.s32.totalorder %s28, 1
        %s405 = scalar_select %p404, %s28, 1
        %s406 = smul.addr %s405, 16
        %s407 = smul.addr %s406, 4
        %s408 = scalar_lea.vmem %s1, %s407
        %s409 = smul.u32 8, %s29
        %p410 = scmp.lt.s32.totalorder %s28, 1
        %s411 = scalar_select %p410, %s28, 1
        %p412 = scmp.lt.s32.totalorder %s409, 15
        %s413 = scalar_select %p412, %s409, 15
        %s414 = smul.addr %s411, 16
        %s415 = sadd.s32 %s413, %s414
        %s416 = smul.addr %s415, 8
        %s417 = scalar_lea.vmem %s6, %s416
        %s418 = smul.u32 8, %s29
        %s419 = smul.u32 8, %s29
        %p420 = scmp.lt.s32.totalorder %s28, 1
        %s421 = scalar_select %p420, %s28, 1
        %p422 = scmp.lt.s32.totalorder %s419, 15
        %s423 = scalar_select %p422, %s419, 15
        %s424 = smul.addr %s421, 16
        %s425 = sadd.s32 %s423, %s424
        %s426 = smul.addr %s425, 8
        %s427 = scalar_lea.vmem %s7, %s426
        %s428 = smul.u32 8, %s29
        %s429 = smul.u32 8, %s29
        %v431 = vld [vmem:[%s402] sm:$0xf]
        %v432 = vld [vmem:[%s402 + $0x4] sm:$0xf]
        %v433 = vld [vmem:[%s402 + $0x8] sm:$0xf]
        %v434 = vld [vmem:[%s402 + $0xc] sm:$0xf]
        %v435 = vld [vmem:[%s402 + $0x10] sm:$0xf]
        %v436 = vld [vmem:[%s402 + $0x14] sm:$0xf]
        %v437 = vld [vmem:[%s402 + $0x18] sm:$0xf]
        %v438 = vld [vmem:[%s402 + $0x1c] sm:$0xf]
        %v439 = vld [vmem:[%s408] sm:$0xf]
        %v440 = vld [vmem:[%s408 + $0x4] sm:$0xf]
        %v441 = vld [vmem:[%s408 + $0x8] sm:$0xf]
        %v442 = vld [vmem:[%s408 + $0xc] sm:$0xf]
        %v443 = vld [vmem:[%s408 + $0x10] sm:$0xf]
        %v444 = vld [vmem:[%s408 + $0x14] sm:$0xf]
        %v445 = vld [vmem:[%s408 + $0x18] sm:$0xf]
        %v446 = vld [vmem:[%s408 + $0x1c] sm:$0xf]
        %v447 = vld [vmem:[%s408 + $0x20] sm:$0xf]
        %v448 = vld [vmem:[%s408 + $0x24] sm:$0xf]
        %v449 = vld [vmem:[%s408 + $0x28] sm:$0xf]
        %v450 = vld [vmem:[%s408 + $0x2c] sm:$0xf]
        %v451 = vld [vmem:[%s408 + $0x30] sm:$0xf]
        %v452 = vld [vmem:[%s408 + $0x34] sm:$0xf]
        %v453 = vld [vmem:[%s408 + $0x38] sm:$0xf]
        %v454 = vld [vmem:[%s408 + $0x3c] sm:$0xf]
        %v455 = vld [vmem:[%s3] sm:$0xf]
        %v456 = vld [vmem:[#allocation2] sm:$0xf]
        %v457 = vld [vmem:[#allocation2 + $0x4] sm:$0xf]
        %v458 = vld [vmem:[#allocation2 + $0x8] sm:$0xf]
        %v459 = vld [vmem:[#allocation2 + $0xc] sm:$0xf]
        %v460 = vld [vmem:[#allocation2 + $0x10] sm:$0xf]
        %v461 = vld [vmem:[#allocation2 + $0x14] sm:$0xf]
        %v462 = vld [vmem:[#allocation2 + $0x18] sm:$0xf]
        %v463 = vld [vmem:[#allocation2 + $0x1c] sm:$0xf]
        %v464 = vlaneseq
        %v465 = vshrl.u32 %v464, 7
        %v466 = vsub.s32 0, %v465
        %v467 = vrot.slane %v455, %v466
        %v476 = vunpack.c.l.b16 %v431
        %v477 = vunpack.c.l.b16 %v432
        %v478 = vunpack.c.l.b16 %v433
        %v479 = vunpack.c.l.b16 %v434
        %v480 = vunpack.c.l.b16 %v435
        %v481 = vunpack.c.l.b16 %v436
        %v482 = vunpack.c.l.b16 %v437
        %v483 = vunpack.c.l.b16 %v438
        %v484 = vpack.c.b16 %v477, %v476
        %v485 = vpack.c.b16 %v479, %v478
        %v486 = vpack.c.b16 %v481, %v480
        %v487 = vpack.c.b16 %v483, %v482
        %v496 = vunpack.c.l.b16 %v456
        %v497 = vunpack.c.l.b16 %v457
        %v498 = vunpack.c.l.b16 %v458
        %v499 = vunpack.c.l.b16 %v459
        %v500 = vunpack.c.l.b16 %v460
        %v501 = vunpack.c.l.b16 %v461
        %v502 = vunpack.c.l.b16 %v462
        %v503 = vunpack.c.l.b16 %v463
        %v504 = vpack.c.b16 %v497, %v496
        %v505 = vpack.c.b16 %v499, %v498
        %v506 = vpack.c.b16 %v501, %v500
        %v507 = vpack.c.b16 %v503, %v502
        %vm512 = vcmask 523264
        %v514 = vsel %vm512, %v484, 0
        %v517 = vsel %vm512, %v485, 0
        %v520 = vsel %vm512, %v486, 0
        %v523 = vsel %vm512, %v487, 0
        %525 = vmatprep.subr.bf16.mxu0 0
        %526 = vmatpush1.bf16.msra.mxu0 %v504
        %527 = vmatprep.subr.bf16.mxu0 0
        %528 = vmatpush1.bf16.msra.mxu0 %v505
        %529 = vmatprep.subr.bf16.mxu0 0
        %530 = vmatpush1.bf16.msra.mxu0 %v506
        %531 = vmatprep.subr.bf16.mxu0 0
        %532 = vmatpush1.bf16.msra.mxu0 %v507
        %533 = vmatprep.subr.bf16.mxu0 0
        %534 = vmatpush1.bf16.msra.mxu0 0
        %535 = vmatprep.subr.bf16.mxu0 0
        %536 = vmatpush1.bf16.msra.mxu0 0
        %537 = vmatprep.subr.bf16.mxu0 0
        %538 = vmatpush1.bf16.msra.mxu0 0
        %539 = vmatprep.subr.bf16.mxu0 0
        %540 = vmatpush1.bf16.msra.mxu0 0
        %541 = vmatprep.subr.bf16.mxu0 0
        %542 = vmatpush1.bf16.msra.mxu0 0
        %543 = vmatprep.subr.bf16.mxu0 0
        %544 = vmatpush1.bf16.msra.mxu0 0
        %545 = vmatprep.subr.bf16.mxu0 0
        %546 = vmatpush1.bf16.msra.mxu0 0
        %547 = vmatprep.subr.bf16.mxu0 0
        %548 = vmatpush1.bf16.msra.mxu0 0
        %549 = vmatprep.subr.bf16.mxu0 0
        %550 = vmatpush1.bf16.msra.mxu0 0
        %551 = vmatprep.subr.bf16.mxu0 0
        %552 = vmatpush1.bf16.msra.mxu0 0
        %553 = vmatprep.subr.bf16.mxu0 0
        %554 = vmatpush1.bf16.msra.mxu0 0
        %555 = vmatprep.subr.bf16.mxu0 0
        %556 = vmatpush1.bf16.msra.mxu0 0
        %557 = vmatprep.mubr.bf16.mxu0 0
        %558 = vmatmul.mubr.bf16.gmra.mrb[0].mxu0 %v514
        %v559 = vpop.f32.mrb[0].mxu0
        %v560 = vadd.f32 %v467, %v559
        %v561 = vpop.f32.mrb[0].mxu0
        %v562 = vpop.f32.mrb[0].mxu0
        %v563 = vadd.f32 %v467, %v562
        %v564 = vpop.f32.mrb[0].mxu0
        %565 = vmatprep.mubr.bf16.mxu0 0
        %566 = vmatmul.mubr.bf16.gmra.mrb[0].mxu0 %v517
        %v567 = vpop.f32.mrb[0].mxu0
        %v568 = vadd.f32 %v467, %v567
        %v569 = vpop.f32.mrb[0].mxu0
        %v570 = vpop.f32.mrb[0].mxu0
        %v571 = vadd.f32 %v467, %v570
        %v572 = vpop.f32.mrb[0].mxu0
        %573 = vmatprep.mubr.bf16.mxu0 0
        %574 = vmatmul.mubr.bf16.gmra.mrb[0].mxu0 %v520
        %v575 = vpop.f32.mrb[0].mxu0
        %v576 = vadd.f32 %v467, %v575
        %v577 = vpop.f32.mrb[0].mxu0
        %v578 = vpop.f32.mrb[0].mxu0
        %v579 = vadd.f32 %v467, %v578
        %v580 = vpop.f32.mrb[0].mxu0
        %581 = vmatprep.mubr.bf16.mxu0 0
        %582 = vmatmul.mubr.bf16.gmra.mrb[0].mxu0 %v523
        %v583 = vpop.f32.mrb[0].mxu0
        %v584 = vadd.f32 %v467, %v583
        %v585 = vpop.f32.mrb[0].mxu0
        %v586 = vpop.f32.mrb[0].mxu0
        %v587 = vadd.f32 %v467, %v586
        %v588 = vpop.f32.mrb[0].mxu0
        %589 = vdwg.mxu0
        %s590 = scalar_lea.vmem [#allocation2], 96
        %v591 = vld [vmem:[%s590] sm:$0xf]
        %v592 = vld [vmem:[%s590 + $0x4] sm:$0xf]
        %v593 = vld [vmem:[%s590 + $0x8] sm:$0xf]
        %v594 = vld [vmem:[%s590 + $0xc] sm:$0xf]
        %v595 = vld [vmem:[%s590 + $0x10] sm:$0xf]
        %v596 = vld [vmem:[%s590 + $0x14] sm:$0xf]
        %v597 = vld [vmem:[%s590 + $0x18] sm:$0xf]
        %v598 = vld [vmem:[%s590 + $0x1c] sm:$0xf]
        %v599 = vlaneseq
        %v600 = vshrl.u32 %v599, 7
        %v601 = vsub.s32 3, %v600
        %v602 = vrot.slane %v455, %v601
        %v611 = vunpack.c.l.b16 %v591
        %v612 = vunpack.c.l.b16 %v592
        %v613 = vunpack.c.l.b16 %v593
        %v614 = vunpack.c.l.b16 %v594
        %v615 = vunpack.c.l.b16 %v595
        %v616 = vunpack.c.l.b16 %v596
        %v617 = vunpack.c.l.b16 %v597
        %v618 = vunpack.c.l.b16 %v598
        %v619 = vpack.c.b16 %v612, %v611
        %v620 = vpack.c.b16 %v614, %v613
        %v621 = vpack.c.b16 %v616, %v615
        %v622 = vpack.c.b16 %v618, %v617
        %627 = vmatprep.subr.bf16.mxu0 0
        %628 = vmatpush1.bf16.msra.mxu0 %v619
        %629 = vmatprep.subr.bf16.mxu0 0
        %630 = vmatpush1.bf16.msra.mxu0 %v620
        %631 = vmatprep.subr.bf16.mxu0 0
        %632 = vmatpush1.bf16.msra.mxu0 %v621
        %633 = vmatprep.subr.bf16.mxu0 0
        %634 = vmatpush1.bf16.msra.mxu0 %v622
        %635 = vmatprep.subr.bf16.mxu0 0
        %636 = vmatpush1.bf16.msra.mxu0 0
        %637 = vmatprep.subr.bf16.mxu0 0
        %638 = vmatpush1.bf16.msra.mxu0 0
        %639 = vmatprep.subr.bf16.mxu0 0
        %640 = vmatpush1.bf16.msra.mxu0 0
        %641 = vmatprep.subr.bf16.mxu0 0
        %642 = vmatpush1.bf16.msra.mxu0 0
        %643 = vmatprep.subr.bf16.mxu0 0
        %644 = vmatpush1.bf16.msra.mxu0 0
        %645 = vmatprep.subr.bf16.mxu0 0
        %646 = vmatpush1.bf16.msra.mxu0 0
        %647 = vmatprep.subr.bf16.mxu0 0
        %648 = vmatpush1.bf16.msra.mxu0 0
        %649 = vmatprep.subr.bf16.mxu0 0
        %650 = vmatpush1.bf16.msra.mxu0 0
        %651 = vmatprep.subr.bf16.mxu0 0
        %652 = vmatpush1.bf16.msra.mxu0 0
        %653 = vmatprep.subr.bf16.mxu0 0
        %654 = vmatpush1.bf16.msra.mxu0 0
        %655 = vmatprep.subr.bf16.mxu0 0
        %656 = vmatpush1.bf16.msra.mxu0 0
        %657 = vmatprep.subr.bf16.mxu0 0
        %658 = vmatpush1.bf16.msra.mxu0 0
        %659 = vmatprep.mubr.bf16.mxu0 0
        %660 = vmatmul.mubr.bf16.gmra.mrb[0].mxu0 %v514
        %v661 = vpop.f32.mrb[0].mxu0
        %v662 = vadd.f32 %v602, %v661
        %v663 = vpop.f32.mrb[0].mxu0
        %v664 = vpop.f32.mrb[0].mxu0
        %v665 = vadd.f32 %v602, %v664
        %v666 = vpop.f32.mrb[0].mxu0
        %667 = vmatprep.mubr.bf16.mxu0 0
        %668 = vmatmul.mubr.bf16.gmra.mrb[0].mxu0 %v517
        %v669 = vpop.f32.mrb[0].mxu0
        %v670 = vadd.f32 %v602, %v669
        %v671 = vpop.f32.mrb[0].mxu0
        %v672 = vpop.f32.mrb[0].mxu0
        %v673 = vadd.f32 %v602, %v672
        %v674 = vpop.f32.mrb[0].mxu0
        %675 = vmatprep.mubr.bf16.mxu0 0
        %676 = vmatmul.mubr.bf16.gmra.mrb[0].mxu0 %v520
        %v677 = vpop.f32.mrb[0].mxu0
        %v678 = vadd.f32 %v602, %v677
        %v679 = vpop.f32.mrb[0].mxu0
        %v680 = vpop.f32.mrb[0].mxu0
        %v681 = vadd.f32 %v602, %v680
        %v682 = vpop.f32.mrb[0].mxu0
        %683 = vmatprep.mubr.bf16.mxu0 0
        %684 = vmatmul.mubr.bf16.gmra.mrb[0].mxu0 %v523
        %v685 = vpop.f32.mrb[0].mxu0
        %v686 = vadd.f32 %v602, %v685
        %v687 = vpop.f32.mrb[0].mxu0
        %v688 = vpop.f32.mrb[0].mxu0
        %v689 = vadd.f32 %v602, %v688
        %v690 = vpop.f32.mrb[0].mxu0
        %691 = vdwg.mxu0
        %v692 = vxor.u32 %v662, 2147483648
        %v693 = vxor.u32 %v665, 2147483648
        %v694 = vxor.u32 %v670, 2147483648
        %v695 = vxor.u32 %v673, 2147483648
        %v696 = vxor.u32 %v678, 2147483648
        %v697 = vxor.u32 %v681, 2147483648
        %v698 = vxor.u32 %v686, 2147483648
        %v699 = vxor.u32 %v689, 2147483648
        %v700 = vmul.f32 %v692, 1.442695
        %v701 = vpow.pop %v700
        %v702 = vmul.f32 %v693, 1.442695
        %v703 = vpow.pop %v702
        %v704 = vmul.f32 %v694, 1.442695
        %v705 = vpow.pop %v704
        %v706 = vmul.f32 %v695, 1.442695
        %v707 = vpow.pop %v706
        %v708 = vmul.f32 %v696, 1.442695
        %v709 = vpow.pop %v708
        %v710 = vmul.f32 %v697, 1.442695
        %v711 = vpow.pop %v710
        %v712 = vmul.f32 %v698, 1.442695
        %v713 = vpow.pop %v712
        %v714 = vmul.f32 %v699, 1.442695
        %v715 = vpow.pop %v714
        %v716 = vadd.f32 %v701, 1.0
        %v717 = vadd.f32 %v703, 1.0
        %v718 = vadd.f32 %v705, 1.0
        %v719 = vadd.f32 %v707, 1.0
        %v720 = vadd.f32 %v709, 1.0
        %v721 = vadd.f32 %v711, 1.0
        %v722 = vadd.f32 %v713, 1.0
        %v723 = vadd.f32 %v715, 1.0
        %v724 = vrcp.pop %v716
        %v725 = vmul.f32 1.0, %v724
        %v726 = vrcp.pop %v717
        %v727 = vmul.f32 1.0, %v726
        %v728 = vrcp.pop %v718
        %v729 = vmul.f32 1.0, %v728
        %v730 = vrcp.pop %v719
        %v731 = vmul.f32 1.0, %v730
        %v732 = vrcp.pop %v720
        %v733 = vmul.f32 1.0, %v732
        %v734 = vrcp.pop %v721
        %v735 = vmul.f32 1.0, %v734
        %v736 = vrcp.pop %v722
        %v737 = vmul.f32 1.0, %v736
        %v738 = vrcp.pop %v723
        %v739 = vmul.f32 1.0, %v738
        %s740 = scalar_lea.vmem [#allocation2], 32
        %v741 = vld [vmem:[%s740] sm:$0xf]
        %v742 = vld [vmem:[%s740 + $0x4] sm:$0xf]
        %v743 = vld [vmem:[%s740 + $0x8] sm:$0xf]
        %v744 = vld [vmem:[%s740 + $0xc] sm:$0xf]
        %v745 = vld [vmem:[%s740 + $0x10] sm:$0xf]
        %v746 = vld [vmem:[%s740 + $0x14] sm:$0xf]
        %v747 = vld [vmem:[%s740 + $0x18] sm:$0xf]
        %v748 = vld [vmem:[%s740 + $0x1c] sm:$0xf]
        %v749 = vlaneseq
        %v750 = vshrl.u32 %v749, 7
        %v751 = vsub.s32 1, %v750
        %v752 = vrot.slane %v455, %v751
        %v769 = vunpack.c.l.b16 %v439
        %v770 = vunpack.c.l.b16 %v440
        %v771 = vunpack.c.l.b16 %v441
        %v772 = vunpack.c.l.b16 %v442
        %v773 = vunpack.c.l.b16 %v443
        %v774 = vunpack.c.l.b16 %v444
        %v775 = vunpack.c.l.b16 %v445
        %v776 = vunpack.c.l.b16 %v446
        %v777 = vunpack.c.l.b16 %v447
        %v778 = vunpack.c.l.b16 %v448
        %v779 = vunpack.c.l.b16 %v449
        %v780 = vunpack.c.l.b16 %v450
        %v781 = vunpack.c.l.b16 %v451
        %v782 = vunpack.c.l.b16 %v452
        %v783 = vunpack.c.l.b16 %v453
        %v784 = vunpack.c.l.b16 %v454
        %v785 = vpack.c.b16 %v770, %v769
        %v786 = vpack.c.b16 %v772, %v771
        %v787 = vpack.c.b16 %v774, %v773
        %v788 = vpack.c.b16 %v776, %v775
        %v789 = vpack.c.b16 %v778, %v777
        %v790 = vpack.c.b16 %v780, %v779
        %v791 = vpack.c.b16 %v782, %v781
        %v792 = vpack.c.b16 %v784, %v783
        %v801 = vunpack.c.l.b16 %v741
        %v802 = vunpack.c.l.b16 %v742
        %v803 = vunpack.c.l.b16 %v743
        %v804 = vunpack.c.l.b16 %v744
        %v805 = vunpack.c.l.b16 %v745
        %v806 = vunpack.c.l.b16 %v746
        %v807 = vunpack.c.l.b16 %v747
        %v808 = vunpack.c.l.b16 %v748
        %v809 = vpack.c.b16 %v802, %v801
        %v810 = vpack.c.b16 %v804, %v803
        %v811 = vpack.c.b16 %v806, %v805
        %v812 = vpack.c.b16 %v808, %v807
        %v818 = vsel %vm512, %v785, 0
        %v821 = vsel %vm512, %v786, 0
        %v824 = vsel %vm512, %v787, 0
        %v827 = vsel %vm512, %v788, 0
        %v830 = vsel %vm512, %v789, 0
        %v833 = vsel %vm512, %v790, 0
        %v836 = vsel %vm512, %v791, 0
        %v839 = vsel %vm512, %v792, 0
        %841 = vmatprep.subr.bf16.mxu0 0
        %842 = vmatpush1.bf16.msra.mxu0 %v809
        %843 = vmatprep.subr.bf16.mxu0 0
        %844 = vmatpush1.bf16.msra.mxu0 %v810
        %845 = vmatprep.subr.bf16.mxu0 0
        %846 = vmatpush1.bf16.msra.mxu0 %v811
        %847 = vmatprep.subr.bf16.mxu0 0
        %848 = vmatpush1.bf16.msra.mxu0 %v812
        %849 = vmatprep.subr.bf16.mxu0 0
        %850 = vmatpush1.bf16.msra.mxu0 0
        %851 = vmatprep.subr.bf16.mxu0 0
        %852 = vmatpush1.bf16.msra.mxu0 0
        %853 = vmatprep.subr.bf16.mxu0 0
        %854 = vmatpush1.bf16.msra.mxu0 0
        %855 = vmatprep.subr.bf16.mxu0 0
        %856 = vmatpush1.bf16.msra.mxu0 0
        %857 = vmatprep.subr.bf16.mxu0 0
        %858 = vmatpush1.bf16.msra.mxu0 0
        %859 = vmatprep.subr.bf16.mxu0 0
        %860 = vmatpush1.bf16.msra.mxu0 0
        %861 = vmatprep.subr.bf16.mxu0 0
        %862 = vmatpush1.bf16.msra.mxu0 0
        %863 = vmatprep.subr.bf16.mxu0 0
        %864 = vmatpush1.bf16.msra.mxu0 0
        %865 = vmatprep.subr.bf16.mxu0 0
        %866 = vmatpush1.bf16.msra.mxu0 0
        %867 = vmatprep.subr.bf16.mxu0 0
        %868 = vmatpush1.bf16.msra.mxu0 0
        %869 = vmatprep.subr.bf16.mxu0 0
        %870 = vmatpush1.bf16.msra.mxu0 0
        %871 = vmatprep.subr.bf16.mxu0 0
        %872 = vmatpush1.bf16.msra.mxu0 0
        %873 = vmatprep.mubr.bf16.mxu0 0
        %874 = vmatmul.mubr.bf16.gmra.mrb[0].mxu0 %v818
        %v875 = vpop.f32.mrb[0].mxu0
        %v876 = vadd.f32 %v752, %v875
        %v877 = vpop.f32.mrb[0].mxu0
        %v878 = vpop.f32.mrb[0].mxu0
        %v879 = vadd.f32 %v752, %v878
        %v880 = vpop.f32.mrb[0].mxu0
        %881 = vmatprep.mubr.bf16.mxu0 0
        %882 = vmatmul.mubr.bf16.gmra.mrb[0].mxu0 %v821
        %v883 = vpop.f32.mrb[0].mxu0
        %v884 = vadd.f32 %v752, %v883
        %v885 = vpop.f32.mrb[0].mxu0
        %v886 = vpop.f32.mrb[0].mxu0
        %v887 = vadd.f32 %v752, %v886
        %v888 = vpop.f32.mrb[0].mxu0
        %889 = vmatprep.mubr.bf16.mxu0 0
        %890 = vmatmul.mubr.bf16.gmra.mrb[0].mxu0 %v824
        %v891 = vpop.f32.mrb[0].mxu0
        %v892 = vadd.f32 %v752, %v891
        %v893 = vpop.f32.mrb[0].mxu0
        %v894 = vpop.f32.mrb[0].mxu0
        %v895 = vadd.f32 %v752, %v894
        %v896 = vpop.f32.mrb[0].mxu0
        %897 = vmatprep.mubr.bf16.mxu0 0
        %898 = vmatmul.mubr.bf16.gmra.mrb[0].mxu0 %v827
        %v899 = vpop.f32.mrb[0].mxu0
        %v900 = vadd.f32 %v752, %v899
        %v901 = vpop.f32.mrb[0].mxu0
        %v902 = vpop.f32.mrb[0].mxu0
        %v903 = vadd.f32 %v752, %v902
        %v904 = vpop.f32.mrb[0].mxu0
        %905 = vmatprep.mubr.bf16.mxu0 0
        %906 = vmatmul.mubr.bf16.gmra.mrb[0].mxu0 %v830
        %v907 = vpop.f32.mrb[0].mxu0
        %v908 = vadd.f32 %v752, %v907
        %v909 = vpop.f32.mrb[0].mxu0
        %v910 = vpop.f32.mrb[0].mxu0
        %v911 = vadd.f32 %v752, %v910
        %v912 = vpop.f32.mrb[0].mxu0
        %913 = vmatprep.mubr.bf16.mxu0 0
        %914 = vmatmul.mubr.bf16.gmra.mrb[0].mxu0 %v833
        %v915 = vpop.f32.mrb[0].mxu0
        %v916 = vadd.f32 %v752, %v915
        %v917 = vpop.f32.mrb[0].mxu0
        %v918 = vpop.f32.mrb[0].mxu0
        %v919 = vadd.f32 %v752, %v918
        %v920 = vpop.f32.mrb[0].mxu0
        %921 = vmatprep.mubr.bf16.mxu0 0
        %922 = vmatmul.mubr.bf16.gmra.mrb[0].mxu0 %v836
        %v923 = vpop.f32.mrb[0].mxu0
        %v924 = vadd.f32 %v752, %v923
        %v925 = vpop.f32.mrb[0].mxu0
        %v926 = vpop.f32.mrb[0].mxu0
        %v927 = vadd.f32 %v752, %v926
        %v928 = vpop.f32.mrb[0].mxu0
        %929 = vmatprep.mubr.bf16.mxu0 0
        %930 = vmatmul.mubr.bf16.gmra.mrb[0].mxu0 %v839
        %v931 = vpop.f32.mrb[0].mxu0
        %v932 = vadd.f32 %v752, %v931
        %v933 = vpop.f32.mrb[0].mxu0
        %v934 = vpop.f32.mrb[0].mxu0
        %v935 = vadd.f32 %v752, %v934
        %v936 = vpop.f32.mrb[0].mxu0
        %937 = vdwg.mxu0
        %s938 = scalar_lea.vmem [#allocation2], 64
        %v939 = vld [vmem:[%s938] sm:$0xf]
        %v940 = vld [vmem:[%s938 + $0x4] sm:$0xf]
        %v941 = vld [vmem:[%s938 + $0x8] sm:$0xf]
        %v942 = vld [vmem:[%s938 + $0xc] sm:$0xf]
        %v943 = vld [vmem:[%s938 + $0x10] sm:$0xf]
        %v944 = vld [vmem:[%s938 + $0x14] sm:$0xf]
        %v945 = vld [vmem:[%s938 + $0x18] sm:$0xf]
        %v946 = vld [vmem:[%s938 + $0x1c] sm:$0xf]
        %v947 = vlaneseq
        %v948 = vshrl.u32 %v947, 7
        %v949 = vsub.s32 2, %v948
        %v950 = vrot.slane %v455, %v949
        %v959 = vunpack.c.l.b16 %v939
        %v960 = vunpack.c.l.b16 %v940
        %v961 = vunpack.c.l.b16 %v941
        %v962 = vunpack.c.l.b16 %v942
        %v963 = vunpack.c.l.b16 %v943
        %v964 = vunpack.c.l.b16 %v944
        %v965 = vunpack.c.l.b16 %v945
        %v966 = vunpack.c.l.b16 %v946
        %v967 = vpack.c.b16 %v960, %v959
        %v968 = vpack.c.b16 %v962, %v961
        %v969 = vpack.c.b16 %v964, %v963
        %v970 = vpack.c.b16 %v966, %v965
        %975 = vmatprep.subr.bf16.mxu0 0
        %976 = vmatpush1.bf16.msra.mxu0 %v967
        %977 = vmatprep.subr.bf16.mxu0 0
        %978 = vmatpush1.bf16.msra.mxu0 %v968
        %979 = vmatprep.subr.bf16.mxu0 0
        %980 = vmatpush1.bf16.msra.mxu0 %v969
        %981 = vmatprep.subr.bf16.mxu0 0
        %982 = vmatpush1.bf16.msra.mxu0 %v970
        %983 = vmatprep.subr.bf16.mxu0 0
        %984 = vmatpush1.bf16.msra.mxu0 0
        %985 = vmatprep.subr.bf16.mxu0 0
        %986 = vmatpush1.bf16.msra.mxu0 0
        %987 = vmatprep.subr.bf16.mxu0 0
        %988 = vmatpush1.bf16.msra.mxu0 0
        %989 = vmatprep.subr.bf16.mxu0 0
        %990 = vmatpush1.bf16.msra.mxu0 0
        %991 = vmatprep.subr.bf16.mxu0 0
        %992 = vmatpush1.bf16.msra.mxu0 0
        %993 = vmatprep.subr.bf16.mxu0 0
        %994 = vmatpush1.bf16.msra.mxu0 0
        %995 = vmatprep.subr.bf16.mxu0 0
        %996 = vmatpush1.bf16.msra.mxu0 0
        %997 = vmatprep.subr.bf16.mxu0 0
        %998 = vmatpush1.bf16.msra.mxu0 0
        %999 = vmatprep.subr.bf16.mxu0 0
        %1000 = vmatpush1.bf16.msra.mxu0 0
        %1001 = vmatprep.subr.bf16.mxu0 0
        %1002 = vmatpush1.bf16.msra.mxu0 0
        %1003 = vmatprep.subr.bf16.mxu0 0
        %1004 = vmatpush1.bf16.msra.mxu0 0
        %1005 = vmatprep.subr.bf16.mxu0 0
        %1006 = vmatpush1.bf16.msra.mxu0 0
        %1007 = vmatprep.mubr.bf16.mxu0 0
        %1008 = vmatmul.mubr.bf16.gmra.mrb[0].mxu0 %v818
        %v1009 = vpop.f32.mrb[0].mxu0
        %v1010 = vadd.f32 %v950, %v1009
        %v1011 = vpop.f32.mrb[0].mxu0
        %v1012 = vpop.f32.mrb[0].mxu0
        %v1013 = vadd.f32 %v950, %v1012
        %v1014 = vpop.f32.mrb[0].mxu0
        %1015 = vmatprep.mubr.bf16.mxu0 0
        %1016 = vmatmul.mubr.bf16.gmra.mrb[0].mxu0 %v821
        %v1017 = vpop.f32.mrb[0].mxu0
        %v1018 = vadd.f32 %v950, %v1017
        %v1019 = vpop.f32.mrb[0].mxu0
        %v1020 = vpop.f32.mrb[0].mxu0
        %v1021 = vadd.f32 %v950, %v1020
        %v1022 = vpop.f32.mrb[0].mxu0
        %1023 = vmatprep.mubr.bf16.mxu0 0
        %1024 = vmatmul.mubr.bf16.gmra.mrb[0].mxu0 %v824
        %v1025 = vpop.f32.mrb[0].mxu0
        %v1026 = vadd.f32 %v950, %v1025
        %v1027 = vpop.f32.mrb[0].mxu0
        %v1028 = vpop.f32.mrb[0].mxu0
        %v1029 = vadd.f32 %v950, %v1028
        %v1030 = vpop.f32.mrb[0].mxu0
        %1031 = vmatprep.mubr.bf16.mxu0 0
        %1032 = vmatmul.mubr.bf16.gmra.mrb[0].mxu0 %v827
        %v1033 = vpop.f32.mrb[0].mxu0
        %v1034 = vadd.f32 %v950, %v1033
        %v1035 = vpop.f32.mrb[0].mxu0
        %v1036 = vpop.f32.mrb[0].mxu0
        %v1037 = vadd.f32 %v950, %v1036
        %v1038 = vpop.f32.mrb[0].mxu0
        %1039 = vmatprep.mubr.bf16.mxu0 0
        %1040 = vmatmul.mubr.bf16.gmra.mrb[0].mxu0 %v830
        %v1041 = vpop.f32.mrb[0].mxu0
        %v1042 = vadd.f32 %v950, %v1041
        %v1043 = vpop.f32.mrb[0].mxu0
        %v1044 = vpop.f32.mrb[0].mxu0
        %v1045 = vadd.f32 %v950, %v1044
        %v1046 = vpop.f32.mrb[0].mxu0
        %1047 = vmatprep.mubr.bf16.mxu0 0
        %1048 = vmatmul.mubr.bf16.gmra.mrb[0].mxu0 %v833
        %v1049 = vpop.f32.mrb[0].mxu0
        %v1050 = vadd.f32 %v950, %v1049
        %v1051 = vpop.f32.mrb[0].mxu0
        %v1052 = vpop.f32.mrb[0].mxu0
        %v1053 = vadd.f32 %v950, %v1052
        %v1054 = vpop.f32.mrb[0].mxu0
        %1055 = vmatprep.mubr.bf16.mxu0 0
        %1056 = vmatmul.mubr.bf16.gmra.mrb[0].mxu0 %v836
        %v1057 = vpop.f32.mrb[0].mxu0
        %v1058 = vadd.f32 %v950, %v1057
        %v1059 = vpop.f32.mrb[0].mxu0
        %v1060 = vpop.f32.mrb[0].mxu0
        %v1061 = vadd.f32 %v950, %v1060
        %v1062 = vpop.f32.mrb[0].mxu0
        %1063 = vmatprep.mubr.bf16.mxu0 0
        %1064 = vmatmul.mubr.bf16.gmra.mrb[0].mxu0 %v839
        %v1065 = vpop.f32.mrb[0].mxu0
        %v1066 = vadd.f32 %v950, %v1065
        %v1067 = vpop.f32.mrb[0].mxu0
        %v1068 = vpop.f32.mrb[0].mxu0
        %v1069 = vadd.f32 %v950, %v1068
        %v1070 = vpop.f32.mrb[0].mxu0
        %1071 = vdwg.mxu0
        %v1072 = vtanh.pop %v1010
        %v1073 = vtanh.pop %v1013
        %v1074 = vtanh.pop %v1018
        %v1075 = vtanh.pop %v1021
        %v1076 = vtanh.pop %v1026
        %v1077 = vtanh.pop %v1029
        %v1078 = vtanh.pop %v1034
        %v1079 = vtanh.pop %v1037
        %v1080 = vtanh.pop %v1042
        %v1081 = vtanh.pop %v1045
        %v1082 = vtanh.pop %v1050
        %v1083 = vtanh.pop %v1053
        %v1084 = vtanh.pop %v1058
        %v1085 = vtanh.pop %v1061
        %v1086 = vtanh.pop %v1066
        %v1087 = vtanh.pop %v1069
        %v1088 = vpack.c.bf16 %v1073, %v1072
        %v1089 = vpack.c.bf16 %v1075, %v1074
        %v1090 = vpack.c.bf16 %v1077, %v1076
        %v1091 = vpack.c.bf16 %v1079, %v1078
        %v1092 = vpack.c.bf16 %v1081, %v1080
        %v1093 = vpack.c.bf16 %v1083, %v1082
        %v1094 = vpack.c.bf16 %v1085, %v1084
        %v1095 = vpack.c.bf16 %v1087, %v1086
        %v1096 = vmul.f32 %v560, 0.25
        %v1097 = vmul.f32 %v563, 0.25
        %v1098 = vmul.f32 %v568, 0.25
        %v1099 = vmul.f32 %v571, 0.25
        %v1100 = vmul.f32 %v576, 0.25
        %v1101 = vmul.f32 %v579, 0.25
        %v1102 = vmul.f32 %v584, 0.25
        %v1103 = vmul.f32 %v587, 0.25
        %v1104 = vpack.c.bf16 %v1097, %v1096
        %v1105 = vpack.c.bf16 %v1099, %v1098
        %v1106 = vpack.c.bf16 %v1101, %v1100
        %v1107 = vpack.c.bf16 %v1103, %v1102
        %v1108 = vpack.c.bf16 %v879, %v876
        %v1109 = vpack.c.bf16 %v887, %v884
        %v1110 = vpack.c.bf16 %v895, %v892
        %v1111 = vpack.c.bf16 %v903, %v900
        %v1112 = vpack.c.bf16 %v911, %v908
        %v1113 = vpack.c.bf16 %v919, %v916
        %v1114 = vpack.c.bf16 %v927, %v924
        %v1115 = vpack.c.bf16 %v935, %v932
        %vm1116 = vcmask 130048
        %v1118 = vsel %vm1116, %v1104, 0
        %v1121 = vsel %vm1116, %v1105, 0
        %v1124 = vsel %vm1116, %v1106, 0
        %v1127 = vsel %vm1116, %v1107, 0
        %v1130 = vsel %vm1116, %v1108, 0
        %v1133 = vsel %vm1116, %v1109, 0
        %v1136 = vsel %vm1116, %v1110, 0
        %v1139 = vsel %vm1116, %v1111, 0
        %v1142 = vsel %vm1116, %v1112, 0
        %v1145 = vsel %vm1116, %v1113, 0
        %v1148 = vsel %vm1116, %v1114, 0
        %v1151 = vsel %vm1116, %v1115, 0
        %1153 = vmatprep.subr.bf16.mxu0 0
        %1154 = vmatpush1.bf16.xpose.msra.mxu0 %v1130
        %1155 = vmatprep.subr.bf16.mxu0 0
        %1156 = vmatpush1.bf16.xpose.msra.mxu0 %v1133
        %1157 = vmatprep.subr.bf16.mxu0 0
        %1158 = vmatpush1.bf16.xpose.msra.mxu0 %v1136
        %1159 = vmatprep.subr.bf16.mxu0 0
        %1160 = vmatpush1.bf16.xpose.msra.mxu0 %v1139
        %1161 = vmatprep.subr.bf16.mxu0 0
        %1162 = vmatpush1.bf16.xpose.msra.mxu0 %v1142
        %1163 = vmatprep.subr.bf16.mxu0 0
        %1164 = vmatpush1.bf16.xpose.msra.mxu0 %v1145
        %1165 = vmatprep.subr.bf16.mxu0 0
        %1166 = vmatpush1.bf16.xpose.msra.mxu0 %v1148
        %1167 = vmatprep.subr.bf16.mxu0 0
        %1168 = vmatpush1.bf16.xpose.msra.mxu0 %v1151
        %1169 = vmatprep.subr.bf16.mxu0 0
        %1170 = vmatpush1.bf16.xpose.msra.mxu0 0
        %1171 = vmatprep.subr.bf16.mxu0 0
        %1172 = vmatpush1.bf16.xpose.msra.mxu0 0
        %1173 = vmatprep.subr.bf16.mxu0 0
        %1174 = vmatpush1.bf16.xpose.msra.mxu0 0
        %1175 = vmatprep.subr.bf16.mxu0 0
        %1176 = vmatpush1.bf16.xpose.msra.mxu0 0
        %1177 = vmatprep.subr.bf16.mxu0 0
        %1178 = vmatpush1.bf16.xpose.msra.mxu0 0
        %1179 = vmatprep.subr.bf16.mxu0 0
        %1180 = vmatpush1.bf16.xpose.msra.mxu0 0
        %1181 = vmatprep.subr.bf16.mxu0 0
        %1182 = vmatpush1.bf16.xpose.msra.mxu0 0
        %1183 = vmatprep.subr.bf16.mxu0 0
        %1184 = vmatpush1.bf16.xpose.msra.mxu0 0
        %1185 = vmatprep.mubr.bf16.mxu0 0
        %1186 = vmatmul.mubr.bf16.gmra.mrb[0].mxu0 %v1118
        %v1187 = vpop.f32.mrb[0].mxu0
        %v1188 = vadd.f32 0.0, %v1187
        %v1189 = vpop.f32.mrb[0].mxu0
        %v1190 = vpop.f32.mrb[0].mxu0
        %v1191 = vadd.f32 0.0, %v1190
        %v1192 = vpop.f32.mrb[0].mxu0
        %1193 = vmatprep.mubr.bf16.mxu0 0
        %1194 = vmatmul.mubr.bf16.gmra.mrb[0].mxu0 %v1121
        %v1195 = vpop.f32.mrb[0].mxu0
        %v1196 = vadd.f32 0.0, %v1195
        %v1197 = vpop.f32.mrb[0].mxu0
        %v1198 = vpop.f32.mrb[0].mxu0
        %v1199 = vadd.f32 0.0, %v1198
        %v1200 = vpop.f32.mrb[0].mxu0
        %1201 = vmatprep.mubr.bf16.mxu0 0
        %1202 = vmatmul.mubr.bf16.gmra.mrb[0].mxu0 %v1124
        %v1203 = vpop.f32.mrb[0].mxu0
        %v1204 = vadd.f32 0.0, %v1203
        %v1205 = vpop.f32.mrb[0].mxu0
        %v1206 = vpop.f32.mrb[0].mxu0
        %v1207 = vadd.f32 0.0, %v1206
        %v1208 = vpop.f32.mrb[0].mxu0
        %1209 = vmatprep.mubr.bf16.mxu0 0
        %1210 = vmatmul.mubr.bf16.gmra.mrb[0].mxu0 %v1127
        %v1211 = vpop.f32.mrb[0].mxu0
        %v1212 = vadd.f32 0.0, %v1211
        %v1213 = vpop.f32.mrb[0].mxu0
        %v1214 = vpop.f32.mrb[0].mxu0
        %v1215 = vadd.f32 0.0, %v1214
        %v1216 = vpop.f32.mrb[0].mxu0
        %1217 = vdwg.mxu0
        %1218 = vst [vmem:[%s393] sm:$0xff] %v1188
        %1219 = vst [vmem:[%s393 + $0x8] sm:$0xff] %v1191
        %1220 = vst [vmem:[%s393 + $0x10] sm:$0xff] %v1196
        %1221 = vst [vmem:[%s393 + $0x18] sm:$0xff] %v1199
        %1222 = vst [vmem:[%s393 + $0x20] sm:$0xff] %v1204
        %1223 = vst [vmem:[%s393 + $0x28] sm:$0xff] %v1207
        %1224 = vst [vmem:[%s393 + $0x30] sm:$0xff] %v1212
        %1225 = vst [vmem:[%s393 + $0x38] sm:$0xff] %v1215
        %1230 = vrot.lane.b32.xlu0 %v1104, 112
        %v1231 = vpop.permute.xlu0 %1230
        %1232 = vrot.lane.b32.xlu0 %v1105, 112
        %v1233 = vpop.permute.xlu0 %1232
        %1234 = vrot.lane.b32.xlu0 %v1106, 112
        %v1235 = vpop.permute.xlu0 %1234
        %1236 = vrot.lane.b32.xlu0 %v1107, 112
        %v1237 = vpop.permute.xlu0 %1236
        %1246 = vrot.lane.b32.xlu0 %v1108, 112
        %v1247 = vpop.permute.xlu0 %1246
        %1248 = vrot.lane.b32.xlu0 %v1109, 112
        %v1249 = vpop.permute.xlu0 %1248
        %1250 = vrot.lane.b32.xlu0 %v1110, 112
        %v1251 = vpop.permute.xlu0 %1250
        %1252 = vrot.lane.b32.xlu0 %v1111, 112
        %v1253 = vpop.permute.xlu0 %1252
        %1254 = vrot.lane.b32.xlu0 %v1112, 112
        %v1255 = vpop.permute.xlu0 %1254
        %1256 = vrot.lane.b32.xlu0 %v1113, 112
        %v1257 = vpop.permute.xlu0 %1256
        %1258 = vrot.lane.b32.xlu0 %v1114, 112
        %v1259 = vpop.permute.xlu0 %1258
        %1260 = vrot.lane.b32.xlu0 %v1115, 112
        %v1261 = vpop.permute.xlu0 %1260
        %v1263 = vsel %vm1116, %v1231, 0
        %v1266 = vsel %vm1116, %v1233, 0
        %v1269 = vsel %vm1116, %v1235, 0
        %v1272 = vsel %vm1116, %v1237, 0
        %v1275 = vsel %vm1116, %v1247, 0
        %v1278 = vsel %vm1116, %v1249, 0
        %v1281 = vsel %vm1116, %v1251, 0
        %v1284 = vsel %vm1116, %v1253, 0
        %v1287 = vsel %vm1116, %v1255, 0
        %v1290 = vsel %vm1116, %v1257, 0
        %v1293 = vsel %vm1116, %v1259, 0
        %v1296 = vsel %vm1116, %v1261, 0
        %1298 = vmatprep.subr.bf16.mxu0 0
        %1299 = vmatpush1.bf16.xpose.msra.mxu0 %v1275
        %1300 = vmatprep.subr.bf16.mxu0 0
        %1301 = vmatpush1.bf16.xpose.msra.mxu0 %v1278
        %1302 = vmatprep.subr.bf16.mxu0 0
        %1303 = vmatpush1.bf16.xpose.msra.mxu0 %v1281
        %1304 = vmatprep.subr.bf16.mxu0 0
        %1305 = vmatpush1.bf16.xpose.msra.mxu0 %v1284
        %1306 = vmatprep.subr.bf16.mxu0 0
        %1307 = vmatpush1.bf16.xpose.msra.mxu0 %v1287
        %1308 = vmatprep.subr.bf16.mxu0 0
        %1309 = vmatpush1.bf16.xpose.msra.mxu0 %v1290
        %1310 = vmatprep.subr.bf16.mxu0 0
        %1311 = vmatpush1.bf16.xpose.msra.mxu0 %v1293
        %1312 = vmatprep.subr.bf16.mxu0 0
        %1313 = vmatpush1.bf16.xpose.msra.mxu0 %v1296
        %1314 = vmatprep.subr.bf16.mxu0 0
        %1315 = vmatpush1.bf16.xpose.msra.mxu0 0
        %1316 = vmatprep.subr.bf16.mxu0 0
        %1317 = vmatpush1.bf16.xpose.msra.mxu0 0
        %1318 = vmatprep.subr.bf16.mxu0 0
        %1319 = vmatpush1.bf16.xpose.msra.mxu0 0
        %1320 = vmatprep.subr.bf16.mxu0 0
        %1321 = vmatpush1.bf16.xpose.msra.mxu0 0
        %1322 = vmatprep.subr.bf16.mxu0 0
        %1323 = vmatpush1.bf16.xpose.msra.mxu0 0
        %1324 = vmatprep.subr.bf16.mxu0 0
        %1325 = vmatpush1.bf16.xpose.msra.mxu0 0
        %1326 = vmatprep.subr.bf16.mxu0 0
        %1327 = vmatpush1.bf16.xpose.msra.mxu0 0
        %1328 = vmatprep.subr.bf16.mxu0 0
        %1329 = vmatpush1.bf16.xpose.msra.mxu0 0
        %1330 = vmatprep.mubr.bf16.mxu0 0
        %1331 = vmatmul.mubr.bf16.gmra.mrb[0].mxu0 %v1263
        %v1332 = vpop.f32.mrb[0].mxu0
        %v1333 = vadd.f32 0.0, %v1332
        %v1334 = vpop.f32.mrb[0].mxu0
        %v1335 = vpop.f32.mrb[0].mxu0
        %v1336 = vadd.f32 0.0, %v1335
        %v1337 = vpop.f32.mrb[0].mxu0
        %1338 = vmatprep.mubr.bf16.mxu0 0
        %1339 = vmatmul.mubr.bf16.gmra.mrb[0].mxu0 %v1266
        %v1340 = vpop.f32.mrb[0].mxu0
        %v1341 = vadd.f32 0.0, %v1340
        %v1342 = vpop.f32.mrb[0].mxu0
        %v1343 = vpop.f32.mrb[0].mxu0
        %v1344 = vadd.f32 0.0, %v1343
        %v1345 = vpop.f32.mrb[0].mxu0
        %1346 = vmatprep.mubr.bf16.mxu0 0
        %1347 = vmatmul.mubr.bf16.gmra.mrb[0].mxu0 %v1269
        %v1348 = vpop.f32.mrb[0].mxu0
        %v1349 = vadd.f32 0.0, %v1348
        %v1350 = vpop.f32.mrb[0].mxu0
        %v1351 = vpop.f32.mrb[0].mxu0
        %v1352 = vadd.f32 0.0, %v1351
        %v1353 = vpop.f32.mrb[0].mxu0
        %1354 = vmatprep.mubr.bf16.mxu0 0
        %1355 = vmatmul.mubr.bf16.gmra.mrb[0].mxu0 %v1272
        %v1356 = vpop.f32.mrb[0].mxu0
        %v1357 = vadd.f32 0.0, %v1356
        %v1358 = vpop.f32.mrb[0].mxu0
        %v1359 = vpop.f32.mrb[0].mxu0
        %v1360 = vadd.f32 0.0, %v1359
        %v1361 = vpop.f32.mrb[0].mxu0
        %1362 = vdwg.mxu0
        %s1363 = scalar_lea.vmem %s393, 64 [#allocation5]
        %1364 = vst [vmem:[%s1363] sm:$0xff] %v1333
        %1365 = vst [vmem:[%s1363 + $0x8] sm:$0xff] %v1336
        %1366 = vst [vmem:[%s1363 + $0x10] sm:$0xff] %v1341
        %1367 = vst [vmem:[%s1363 + $0x18] sm:$0xff] %v1344
        %1368 = vst [vmem:[%s1363 + $0x20] sm:$0xff] %v1349
        %1369 = vst [vmem:[%s1363 + $0x28] sm:$0xff] %v1352
        %1370 = vst [vmem:[%s1363 + $0x30] sm:$0xff] %v1357
        %1371 = vst [vmem:[%s1363 + $0x38] sm:$0xff] %v1360
        %v1372 = vmax.f32 %v1188, %v1333
        %v1373 = vmax.f32 %v1191, %v1336
        %v1374 = vmax.f32 %v1196, %v1341
        %v1375 = vmax.f32 %v1199, %v1344
        %v1376 = vmax.f32 %v1204, %v1349
        %v1377 = vmax.f32 %v1207, %v1352
        %v1378 = vmax.f32 %v1212, %v1357
        %v1379 = vmax.f32 %v1215, %v1360
        %1380 = vrot.lane.b32.xlu0 %v1104, 96
        %v1381 = vpop.permute.xlu0 %1380
        %1382 = vrot.lane.b32.xlu0 %v1105, 96
        %v1383 = vpop.permute.xlu0 %1382
        %1384 = vrot.lane.b32.xlu0 %v1106, 96
        %v1385 = vpop.permute.xlu0 %1384
        %1386 = vrot.lane.b32.xlu0 %v1107, 96
        %v1387 = vpop.permute.xlu0 %1386
        %1388 = vrot.lane.b32.xlu0 %v1108, 96
        %v1389 = vpop.permute.xlu0 %1388
        %1390 = vrot.lane.b32.xlu0 %v1109, 96
        %v1391 = vpop.permute.xlu0 %1390
        %1392 = vrot.lane.b32.xlu0 %v1110, 96
        %v1393 = vpop.permute.xlu0 %1392
        %1394 = vrot.lane.b32.xlu0 %v1111, 96
        %v1395 = vpop.permute.xlu0 %1394
        %1396 = vrot.lane.b32.xlu0 %v1112, 96
        %v1397 = vpop.permute.xlu0 %1396
        %1398 = vrot.lane.b32.xlu0 %v1113, 96
        %v1399 = vpop.permute.xlu0 %1398
        %1400 = vrot.lane.b32.xlu0 %v1114, 96
        %v1401 = vpop.permute.xlu0 %1400
        %1402 = vrot.lane.b32.xlu0 %v1115, 96
        %v1403 = vpop.permute.xlu0 %1402
        %v1405 = vsel %vm1116, %v1381, 0
        %v1408 = vsel %vm1116, %v1383, 0
        %v1411 = vsel %vm1116, %v1385, 0
        %v1414 = vsel %vm1116, %v1387, 0
        %v1417 = vsel %vm1116, %v1389, 0
        %v1420 = vsel %vm1116, %v1391, 0
        %v1423 = vsel %vm1116, %v1393, 0
        %v1426 = vsel %vm1116, %v1395, 0
        %v1429 = vsel %vm1116, %v1397, 0
        %v1432 = vsel %vm1116, %v1399, 0
        %v1435 = vsel %vm1116, %v1401, 0
        %v1438 = vsel %vm1116, %v1403, 0
        %1440 = vmatprep.subr.bf16.mxu0 0
        %1441 = vmatpush1.bf16.xpose.msra.mxu0 %v1417
        %1442 = vmatprep.subr.bf16.mxu0 0
        %1443 = vmatpush1.bf16.xpose.msra.mxu0 %v1420
        %1444 = vmatprep.subr.bf16.mxu0 0
        %1445 = vmatpush1.bf16.xpose.msra.mxu0 %v1423
        %1446 = vmatprep.subr.bf16.mxu0 0
        %1447 = vmatpush1.bf16.xpose.msra.mxu0 %v1426
        %1448 = vmatprep.subr.bf16.mxu0 0
        %1449 = vmatpush1.bf16.xpose.msra.mxu0 %v1429
        %1450 = vmatprep.subr.bf16.mxu0 0
        %1451 = vmatpush1.bf16.xpose.msra.mxu0 %v1432
        %1452 = vmatprep.subr.bf16.mxu0 0
        %1453 = vmatpush1.bf16.xpose.msra.mxu0 %v1435
        %1454 = vmatprep.subr.bf16.mxu0 0
        %1455 = vmatpush1.bf16.xpose.msra.mxu0 %v1438
        %1456 = vmatprep.subr.bf16.mxu0 0
        %1457 = vmatpush1.bf16.xpose.msra.mxu0 0
        %1458 = vmatprep.subr.bf16.mxu0 0
        %1459 = vmatpush1.bf16.xpose.msra.mxu0 0
        %1460 = vmatprep.subr.bf16.mxu0 0
        %1461 = vmatpush1.bf16.xpose.msra.mxu0 0
        %1462 = vmatprep.subr.bf16.mxu0 0
        %1463 = vmatpush1.bf16.xpose.msra.mxu0 0
        %1464 = vmatprep.subr.bf16.mxu0 0
        %1465 = vmatpush1.bf16.xpose.msra.mxu0 0
        %1466 = vmatprep.subr.bf16.mxu0 0
        %1467 = vmatpush1.bf16.xpose.msra.mxu0 0
        %1468 = vmatprep.subr.bf16.mxu0 0
        %1469 = vmatpush1.bf16.xpose.msra.mxu0 0
        %1470 = vmatprep.subr.bf16.mxu0 0
        %1471 = vmatpush1.bf16.xpose.msra.mxu0 0
        %1472 = vmatprep.mubr.bf16.mxu0 0
        %1473 = vmatmul.mubr.bf16.gmra.mrb[0].mxu0 %v1405
        %v1474 = vpop.f32.mrb[0].mxu0
        %v1475 = vadd.f32 0.0, %v1474
        %v1476 = vpop.f32.mrb[0].mxu0
        %v1477 = vpop.f32.mrb[0].mxu0
        %v1478 = vadd.f32 0.0, %v1477
        %v1479 = vpop.f32.mrb[0].mxu0
        %1480 = vmatprep.mubr.bf16.mxu0 0
        %1481 = vmatmul.mubr.bf16.gmra.mrb[0].mxu0 %v1408
        %v1482 = vpop.f32.mrb[0].mxu0
        %v1483 = vadd.f32 0.0, %v1482
        %v1484 = vpop.f32.mrb[0].mxu0
        %v1485 = vpop.f32.mrb[0].mxu0
        %v1486 = vadd.f32 0.0, %v1485
        %v1487 = vpop.f32.mrb[0].mxu0
        %1488 = vmatprep.mubr.bf16.mxu0 0
        %1489 = vmatmul.mubr.bf16.gmra.mrb[0].mxu0 %v1411
        %v1490 = vpop.f32.mrb[0].mxu0
        %v1491 = vadd.f32 0.0, %v1490
        %v1492 = vpop.f32.mrb[0].mxu0
        %v1493 = vpop.f32.mrb[0].mxu0
        %v1494 = vadd.f32 0.0, %v1493
        %v1495 = vpop.f32.mrb[0].mxu0
        %1496 = vmatprep.mubr.bf16.mxu0 0
        %1497 = vmatmul.mubr.bf16.gmra.mrb[0].mxu0 %v1414
        %v1498 = vpop.f32.mrb[0].mxu0
        %v1499 = vadd.f32 0.0, %v1498
        %v1500 = vpop.f32.mrb[0].mxu0
        %v1501 = vpop.f32.mrb[0].mxu0
        %v1502 = vadd.f32 0.0, %v1501
        %v1503 = vpop.f32.mrb[0].mxu0
        %1504 = vdwg.mxu0
        %s1505 = scalar_lea.vmem %s393, 128 [#allocation5]
        %1506 = vst [vmem:[%s1505] sm:$0xff] %v1475
        %1507 = vst [vmem:[%s1505 + $0x8] sm:$0xff] %v1478
        %1508 = vst [vmem:[%s1505 + $0x10] sm:$0xff] %v1483
        %1509 = vst [vmem:[%s1505 + $0x18] sm:$0xff] %v1486
        %1510 = vst [vmem:[%s1505 + $0x20] sm:$0xff] %v1491
        %1511 = vst [vmem:[%s1505 + $0x28] sm:$0xff] %v1494
        %1512 = vst [vmem:[%s1505 + $0x30] sm:$0xff] %v1499
        %1513 = vst [vmem:[%s1505 + $0x38] sm:$0xff] %v1502
        %v1514 = vmax.f32 %v1372, %v1475
        %v1515 = vmax.f32 %v1373, %v1478
        %v1516 = vmax.f32 %v1374, %v1483
        %v1517 = vmax.f32 %v1375, %v1486
        %v1518 = vmax.f32 %v1376, %v1491
        %v1519 = vmax.f32 %v1377, %v1494
        %v1520 = vmax.f32 %v1378, %v1499
        %v1521 = vmax.f32 %v1379, %v1502
        %1522 = vrot.lane.b32.xlu0 %v1104, 80
        %v1523 = vpop.permute.xlu0 %1522
        %1524 = vrot.lane.b32.xlu0 %v1105, 80
        %v1525 = vpop.permute.xlu0 %1524
        %1526 = vrot.lane.b32.xlu0 %v1106, 80
        %v1527 = vpop.permute.xlu0 %1526
        %1528 = vrot.lane.b32.xlu0 %v1107, 80
        %v1529 = vpop.permute.xlu0 %1528
        %1530 = vrot.lane.b32.xlu0 %v1108, 80
        %v1531 = vpop.permute.xlu0 %1530
        %1532 = vrot.lane.b32.xlu0 %v1109, 80
        %v1533 = vpop.permute.xlu0 %1532
        %1534 = vrot.lane.b32.xlu0 %v1110, 80
        %v1535 = vpop.permute.xlu0 %1534
        %1536 = vrot.lane.b32.xlu0 %v1111, 80
        %v1537 = vpop.permute.xlu0 %1536
        %1538 = vrot.lane.b32.xlu0 %v1112, 80
        %v1539 = vpop.permute.xlu0 %1538
        %1540 = vrot.lane.b32.xlu0 %v1113, 80
        %v1541 = vpop.permute.xlu0 %1540
        %1542 = vrot.lane.b32.xlu0 %v1114, 80
        %v1543 = vpop.permute.xlu0 %1542
        %1544 = vrot.lane.b32.xlu0 %v1115, 80
        %v1545 = vpop.permute.xlu0 %1544
        %v1547 = vsel %vm1116, %v1523, 0
        %v1550 = vsel %vm1116, %v1525, 0
        %v1553 = vsel %vm1116, %v1527, 0
        %v1556 = vsel %vm1116, %v1529, 0
        %v1559 = vsel %vm1116, %v1531, 0
        %v1562 = vsel %vm1116, %v1533, 0
        %v1565 = vsel %vm1116, %v1535, 0
        %v1568 = vsel %vm1116, %v1537, 0
        %v1571 = vsel %vm1116, %v1539, 0
        %v1574 = vsel %vm1116, %v1541, 0
        %v1577 = vsel %vm1116, %v1543, 0
        %v1580 = vsel %vm1116, %v1545, 0
        %1582 = vmatprep.subr.bf16.mxu0 0
        %1583 = vmatpush1.bf16.xpose.msra.mxu0 %v1559
        %1584 = vmatprep.subr.bf16.mxu0 0
        %1585 = vmatpush1.bf16.xpose.msra.mxu0 %v1562
        %1586 = vmatprep.subr.bf16.mxu0 0
        %1587 = vmatpush1.bf16.xpose.msra.mxu0 %v1565
        %1588 = vmatprep.subr.bf16.mxu0 0
        %1589 = vmatpush1.bf16.xpose.msra.mxu0 %v1568
        %1590 = vmatprep.subr.bf16.mxu0 0
        %1591 = vmatpush1.bf16.xpose.msra.mxu0 %v1571
        %1592 = vmatprep.subr.bf16.mxu0 0
        %1593 = vmatpush1.bf16.xpose.msra.mxu0 %v1574
        %1594 = vmatprep.subr.bf16.mxu0 0
        %1595 = vmatpush1.bf16.xpose.msra.mxu0 %v1577
        %1596 = vmatprep.subr.bf16.mxu0 0
        %1597 = vmatpush1.bf16.xpose.msra.mxu0 %v1580
        %1598 = vmatprep.subr.bf16.mxu0 0
        %1599 = vmatpush1.bf16.xpose.msra.mxu0 0
        %1600 = vmatprep.subr.bf16.mxu0 0
        %1601 = vmatpush1.bf16.xpose.msra.mxu0 0
        %1602 = vmatprep.subr.bf16.mxu0 0
        %1603 = vmatpush1.bf16.xpose.msra.mxu0 0
        %1604 = vmatprep.subr.bf16.mxu0 0
        %1605 = vmatpush1.bf16.xpose.msra.mxu0 0
        %1606 = vmatprep.subr.bf16.mxu0 0
        %1607 = vmatpush1.bf16.xpose.msra.mxu0 0
        %1608 = vmatprep.subr.bf16.mxu0 0
        %1609 = vmatpush1.bf16.xpose.msra.mxu0 0
        %1610 = vmatprep.subr.bf16.mxu0 0
        %1611 = vmatpush1.bf16.xpose.msra.mxu0 0
        %1612 = vmatprep.subr.bf16.mxu0 0
        %1613 = vmatpush1.bf16.xpose.msra.mxu0 0
        %1614 = vmatprep.mubr.bf16.mxu0 0
        %1615 = vmatmul.mubr.bf16.gmra.mrb[0].mxu0 %v1547
        %v1616 = vpop.f32.mrb[0].mxu0
        %v1617 = vadd.f32 0.0, %v1616
        %v1618 = vpop.f32.mrb[0].mxu0
        %v1619 = vpop.f32.mrb[0].mxu0
        %v1620 = vadd.f32 0.0, %v1619
        %v1621 = vpop.f32.mrb[0].mxu0
        %1622 = vmatprep.mubr.bf16.mxu0 0
        %1623 = vmatmul.mubr.bf16.gmra.mrb[0].mxu0 %v1550
        %v1624 = vpop.f32.mrb[0].mxu0
        %v1625 = vadd.f32 0.0, %v1624
        %v1626 = vpop.f32.mrb[0].mxu0
        %v1627 = vpop.f32.mrb[0].mxu0
        %v1628 = vadd.f32 0.0, %v1627
        %v1629 = vpop.f32.mrb[0].mxu0
        %1630 = vmatprep.mubr.bf16.mxu0 0
        %1631 = vmatmul.mubr.bf16.gmra.mrb[0].mxu0 %v1553
        %v1632 = vpop.f32.mrb[0].mxu0
        %v1633 = vadd.f32 0.0, %v1632
        %v1634 = vpop.f32.mrb[0].mxu0
        %v1635 = vpop.f32.mrb[0].mxu0
        %v1636 = vadd.f32 0.0, %v1635
        %v1637 = vpop.f32.mrb[0].mxu0
        %1638 = vmatprep.mubr.bf16.mxu0 0
        %1639 = vmatmul.mubr.bf16.gmra.mrb[0].mxu0 %v1556
        %v1640 = vpop.f32.mrb[0].mxu0
        %v1641 = vadd.f32 0.0, %v1640
        %v1642 = vpop.f32.mrb[0].mxu0
        %v1643 = vpop.f32.mrb[0].mxu0
        %v1644 = vadd.f32 0.0, %v1643
        %v1645 = vpop.f32.mrb[0].mxu0
        %1646 = vdwg.mxu0
        %s1647 = scalar_lea.vmem %s393, 192 [#allocation5]
        %1648 = vst [vmem:[%s1647] sm:$0xff] %v1617
        %1649 = vst [vmem:[%s1647 + $0x8] sm:$0xff] %v1620
        %1650 = vst [vmem:[%s1647 + $0x10] sm:$0xff] %v1625
        %1651 = vst [vmem:[%s1647 + $0x18] sm:$0xff] %v1628
        %1652 = vst [vmem:[%s1647 + $0x20] sm:$0xff] %v1633
        %1653 = vst [vmem:[%s1647 + $0x28] sm:$0xff] %v1636
        %1654 = vst [vmem:[%s1647 + $0x30] sm:$0xff] %v1641
        %1655 = vst [vmem:[%s1647 + $0x38] sm:$0xff] %v1644
        %v1656 = vmax.f32 %v1514, %v1617
        %v1657 = vmax.f32 %v1515, %v1620
        %v1658 = vmax.f32 %v1516, %v1625
        %v1659 = vmax.f32 %v1517, %v1628
        %v1660 = vmax.f32 %v1518, %v1633
        %v1661 = vmax.f32 %v1519, %v1636
        %v1662 = vmax.f32 %v1520, %v1641
        %v1663 = vmax.f32 %v1521, %v1644
        %v1664 = vld [vmem:[%s393] sm:$0xff]
        %v1665 = vld [vmem:[%s393 + $0x8] sm:$0xff]
        %v1666 = vld [vmem:[%s393 + $0x10] sm:$0xff]
        %v1667 = vld [vmem:[%s393 + $0x18] sm:$0xff]
        %v1668 = vld [vmem:[%s393 + $0x20] sm:$0xff]
        %v1669 = vld [vmem:[%s393 + $0x28] sm:$0xff]
        %v1670 = vld [vmem:[%s393 + $0x30] sm:$0xff]
        %v1671 = vld [vmem:[%s393 + $0x38] sm:$0xff]
        %v1672 = vsub.f32 %v1664, %v1656
        %v1673 = vsub.f32 %v1665, %v1657
        %v1674 = vsub.f32 %v1666, %v1658
        %v1675 = vsub.f32 %v1667, %v1659
        %v1676 = vsub.f32 %v1668, %v1660
        %v1677 = vsub.f32 %v1669, %v1661
        %v1678 = vsub.f32 %v1670, %v1662
        %v1679 = vsub.f32 %v1671, %v1663
        %v1680 = vmul.f32 %v1672, 1.442695
        %v1681 = vpow.pop %v1680
        %v1682 = vmul.f32 %v1673, 1.442695
        %v1683 = vpow.pop %v1682
        %v1684 = vmul.f32 %v1674, 1.442695
        %v1685 = vpow.pop %v1684
        %v1686 = vmul.f32 %v1675, 1.442695
        %v1687 = vpow.pop %v1686
        %v1688 = vmul.f32 %v1676, 1.442695
        %v1689 = vpow.pop %v1688
        %v1690 = vmul.f32 %v1677, 1.442695
        %v1691 = vpow.pop %v1690
        %v1692 = vmul.f32 %v1678, 1.442695
        %v1693 = vpow.pop %v1692
        %v1694 = vmul.f32 %v1679, 1.442695
        %v1695 = vpow.pop %v1694
        %1696 = vst [vmem:[%s393] sm:$0xff] %v1681
        %1697 = vst [vmem:[%s393 + $0x8] sm:$0xff] %v1683
        %1698 = vst [vmem:[%s393 + $0x10] sm:$0xff] %v1685
        %1699 = vst [vmem:[%s393 + $0x18] sm:$0xff] %v1687
        %1700 = vst [vmem:[%s393 + $0x20] sm:$0xff] %v1689
        %1701 = vst [vmem:[%s393 + $0x28] sm:$0xff] %v1691
        %1702 = vst [vmem:[%s393 + $0x30] sm:$0xff] %v1693
        %1703 = vst [vmem:[%s393 + $0x38] sm:$0xff] %v1695
        %v1704 = vld [vmem:[%s1363] sm:$0xff]
        %v1705 = vld [vmem:[%s1363 + $0x8] sm:$0xff]
        %v1706 = vld [vmem:[%s1363 + $0x10] sm:$0xff]
        %v1707 = vld [vmem:[%s1363 + $0x18] sm:$0xff]
        %v1708 = vld [vmem:[%s1363 + $0x20] sm:$0xff]
        %v1709 = vld [vmem:[%s1363 + $0x28] sm:$0xff]
        %v1710 = vld [vmem:[%s1363 + $0x30] sm:$0xff]
        %v1711 = vld [vmem:[%s1363 + $0x38] sm:$0xff]
        %v1712 = vsub.f32 %v1704, %v1656
        %v1713 = vsub.f32 %v1705, %v1657
        %v1714 = vsub.f32 %v1706, %v1658
        %v1715 = vsub.f32 %v1707, %v1659
        %v1716 = vsub.f32 %v1708, %v1660
        %v1717 = vsub.f32 %v1709, %v1661
        %v1718 = vsub.f32 %v1710, %v1662
        %v1719 = vsub.f32 %v1711, %v1663
        %v1720 = vmul.f32 %v1712, 1.442695
        %v1721 = vpow.pop %v1720
        %v1722 = vmul.f32 %v1713, 1.442695
        %v1723 = vpow.pop %v1722
        %v1724 = vmul.f32 %v1714, 1.442695
        %v1725 = vpow.pop %v1724
        %v1726 = vmul.f32 %v1715, 1.442695
        %v1727 = vpow.pop %v1726
        %v1728 = vmul.f32 %v1716, 1.442695
        %v1729 = vpow.pop %v1728
        %v1730 = vmul.f32 %v1717, 1.442695
        %v1731 = vpow.pop %v1730
        %v1732 = vmul.f32 %v1718, 1.442695
        %v1733 = vpow.pop %v1732
        %v1734 = vmul.f32 %v1719, 1.442695
        %v1735 = vpow.pop %v1734
        %1736 = vst [vmem:[%s1363] sm:$0xff] %v1721
        %1737 = vst [vmem:[%s1363 + $0x8] sm:$0xff] %v1723
        %1738 = vst [vmem:[%s1363 + $0x10] sm:$0xff] %v1725
        %1739 = vst [vmem:[%s1363 + $0x18] sm:$0xff] %v1727
        %1740 = vst [vmem:[%s1363 + $0x20] sm:$0xff] %v1729
        %1741 = vst [vmem:[%s1363 + $0x28] sm:$0xff] %v1731
        %1742 = vst [vmem:[%s1363 + $0x30] sm:$0xff] %v1733
        %1743 = vst [vmem:[%s1363 + $0x38] sm:$0xff] %v1735
        %v1744 = vadd.f32 %v1681, %v1721
        %v1745 = vadd.f32 %v1683, %v1723
        %v1746 = vadd.f32 %v1685, %v1725
        %v1747 = vadd.f32 %v1687, %v1727
        %v1748 = vadd.f32 %v1689, %v1729
        %v1749 = vadd.f32 %v1691, %v1731
        %v1750 = vadd.f32 %v1693, %v1733
        %v1751 = vadd.f32 %v1695, %v1735
        %v1752 = vld [vmem:[%s1505] sm:$0xff]
        %v1753 = vld [vmem:[%s1505 + $0x8] sm:$0xff]
        %v1754 = vld [vmem:[%s1505 + $0x10] sm:$0xff]
        %v1755 = vld [vmem:[%s1505 + $0x18] sm:$0xff]
        %v1756 = vld [vmem:[%s1505 + $0x20] sm:$0xff]
        %v1757 = vld [vmem:[%s1505 + $0x28] sm:$0xff]
        %v1758 = vld [vmem:[%s1505 + $0x30] sm:$0xff]
        %v1759 = vld [vmem:[%s1505 + $0x38] sm:$0xff]
        %v1760 = vsub.f32 %v1752, %v1656
        %v1761 = vsub.f32 %v1753, %v1657
        %v1762 = vsub.f32 %v1754, %v1658
        %v1763 = vsub.f32 %v1755, %v1659
        %v1764 = vsub.f32 %v1756, %v1660
        %v1765 = vsub.f32 %v1757, %v1661
        %v1766 = vsub.f32 %v1758, %v1662
        %v1767 = vsub.f32 %v1759, %v1663
        %v1768 = vmul.f32 %v1760, 1.442695
        %v1769 = vpow.pop %v1768
        %v1770 = vmul.f32 %v1761, 1.442695
        %v1771 = vpow.pop %v1770
        %v1772 = vmul.f32 %v1762, 1.442695
        %v1773 = vpow.pop %v1772
        %v1774 = vmul.f32 %v1763, 1.442695
        %v1775 = vpow.pop %v1774
        %v1776 = vmul.f32 %v1764, 1.442695
        %v1777 = vpow.pop %v1776
        %v1778 = vmul.f32 %v1765, 1.442695
        %v1779 = vpow.pop %v1778
        %v1780 = vmul.f32 %v1766, 1.442695
        %v1781 = vpow.pop %v1780
        %v1782 = vmul.f32 %v1767, 1.442695
        %v1783 = vpow.pop %v1782
        %1784 = vst [vmem:[%s1505] sm:$0xff] %v1769
        %1785 = vst [vmem:[%s1505 + $0x8] sm:$0xff] %v1771
        %1786 = vst [vmem:[%s1505 + $0x10] sm:$0xff] %v1773
        %1787 = vst [vmem:[%s1505 + $0x18] sm:$0xff] %v1775
        %1788 = vst [vmem:[%s1505 + $0x20] sm:$0xff] %v1777
        %1789 = vst [vmem:[%s1505 + $0x28] sm:$0xff] %v1779
        %1790 = vst [vmem:[%s1505 + $0x30] sm:$0xff] %v1781
        %1791 = vst [vmem:[%s1505 + $0x38] sm:$0xff] %v1783
        %v1792 = vadd.f32 %v1744, %v1769
        %v1793 = vadd.f32 %v1745, %v1771
        %v1794 = vadd.f32 %v1746, %v1773
        %v1795 = vadd.f32 %v1747, %v1775
        %v1796 = vadd.f32 %v1748, %v1777
        %v1797 = vadd.f32 %v1749, %v1779
        %v1798 = vadd.f32 %v1750, %v1781
        %v1799 = vadd.f32 %v1751, %v1783
        %v1800 = vld [vmem:[%s1647] sm:$0xff]
        %v1801 = vld [vmem:[%s1647 + $0x8] sm:$0xff]
        %v1802 = vld [vmem:[%s1647 + $0x10] sm:$0xff]
        %v1803 = vld [vmem:[%s1647 + $0x18] sm:$0xff]
        %v1804 = vld [vmem:[%s1647 + $0x20] sm:$0xff]
        %v1805 = vld [vmem:[%s1647 + $0x28] sm:$0xff]
        %v1806 = vld [vmem:[%s1647 + $0x30] sm:$0xff]
        %v1807 = vld [vmem:[%s1647 + $0x38] sm:$0xff]
        %v1808 = vsub.f32 %v1800, %v1656
        %v1809 = vsub.f32 %v1801, %v1657
        %v1810 = vsub.f32 %v1802, %v1658
        %v1811 = vsub.f32 %v1803, %v1659
        %v1812 = vsub.f32 %v1804, %v1660
        %v1813 = vsub.f32 %v1805, %v1661
        %v1814 = vsub.f32 %v1806, %v1662
        %v1815 = vsub.f32 %v1807, %v1663
        %v1816 = vmul.f32 %v1808, 1.442695
        %v1817 = vpow.pop %v1816
        %v1818 = vmul.f32 %v1809, 1.442695
        %v1819 = vpow.pop %v1818
        %v1820 = vmul.f32 %v1810, 1.442695
        %v1821 = vpow.pop %v1820
        %v1822 = vmul.f32 %v1811, 1.442695
        %v1823 = vpow.pop %v1822
        %v1824 = vmul.f32 %v1812, 1.442695
        %v1825 = vpow.pop %v1824
        %v1826 = vmul.f32 %v1813, 1.442695
        %v1827 = vpow.pop %v1826
        %v1828 = vmul.f32 %v1814, 1.442695
        %v1829 = vpow.pop %v1828
        %v1830 = vmul.f32 %v1815, 1.442695
        %v1831 = vpow.pop %v1830
        %1832 = vst [vmem:[%s1647] sm:$0xff] %v1817
        %1833 = vst [vmem:[%s1647 + $0x8] sm:$0xff] %v1819
        %1834 = vst [vmem:[%s1647 + $0x10] sm:$0xff] %v1821
        %1835 = vst [vmem:[%s1647 + $0x18] sm:$0xff] %v1823
        %1836 = vst [vmem:[%s1647 + $0x20] sm:$0xff] %v1825
        %1837 = vst [vmem:[%s1647 + $0x28] sm:$0xff] %v1827
        %1838 = vst [vmem:[%s1647 + $0x30] sm:$0xff] %v1829
        %1839 = vst [vmem:[%s1647 + $0x38] sm:$0xff] %v1831
        %v1840 = vadd.f32 %v1792, %v1817
        %v1841 = vadd.f32 %v1793, %v1819
        %v1842 = vadd.f32 %v1794, %v1821
        %v1843 = vadd.f32 %v1795, %v1823
        %v1844 = vadd.f32 %v1796, %v1825
        %v1845 = vadd.f32 %v1797, %v1827
        %v1846 = vadd.f32 %v1798, %v1829
        %v1847 = vadd.f32 %v1799, %v1831
        %v1848 = vld [vmem:[%s417] sm:$0xff]
        %v1849 = vld [vmem:[%s417 + $0x8] sm:$0xff]
        %v1850 = vld [vmem:[%s417 + $0x10] sm:$0xff]
        %v1851 = vld [vmem:[%s417 + $0x18] sm:$0xff]
        %v1852 = vld [vmem:[%s417 + $0x20] sm:$0xff]
        %v1853 = vld [vmem:[%s417 + $0x28] sm:$0xff]
        %v1854 = vld [vmem:[%s417 + $0x30] sm:$0xff]
        %v1855 = vld [vmem:[%s417 + $0x38] sm:$0xff]
        %v1856 = vmul.f32 %v1848, 1.442695
        %v1857 = vpow.pop %v1856
        %v1858 = vmul.f32 %v1849, 1.442695
        %v1859 = vpow.pop %v1858
        %v1860 = vmul.f32 %v1850, 1.442695
        %v1861 = vpow.pop %v1860
        %v1862 = vmul.f32 %v1851, 1.442695
        %v1863 = vpow.pop %v1862
        %v1864 = vmul.f32 %v1852, 1.442695
        %v1865 = vpow.pop %v1864
        %v1866 = vmul.f32 %v1853, 1.442695
        %v1867 = vpow.pop %v1866
        %v1868 = vmul.f32 %v1854, 1.442695
        %v1869 = vpow.pop %v1868
        %v1870 = vmul.f32 %v1855, 1.442695
        %v1871 = vpow.pop %v1870
        %v1872 = vrcp.pop %v1840
        %v1873 = vrcp.pop %v1841
        %v1874 = vrcp.pop %v1842
        %v1875 = vrcp.pop %v1843
        %v1876 = vrcp.pop %v1844
        %v1877 = vrcp.pop %v1845
        %v1878 = vrcp.pop %v1846
        %v1879 = vrcp.pop %v1847
        %v1880 = vmul.f32 %v1857, %v1872
        %v1881 = vmul.f32 %v1859, %v1873
        %v1882 = vmul.f32 %v1861, %v1874
        %v1883 = vmul.f32 %v1863, %v1875
        %v1884 = vmul.f32 %v1865, %v1876
        %v1885 = vmul.f32 %v1867, %v1877
        %v1886 = vmul.f32 %v1869, %v1878
        %v1887 = vmul.f32 %v1871, %v1879
        %v1888 = vld [vmem:[%s393] sm:$0xff]
        %v1889 = vld [vmem:[%s393 + $0x8] sm:$0xff]
        %v1890 = vld [vmem:[%s393 + $0x10] sm:$0xff]
        %v1891 = vld [vmem:[%s393 + $0x18] sm:$0xff]
        %v1892 = vld [vmem:[%s393 + $0x20] sm:$0xff]
        %v1893 = vld [vmem:[%s393 + $0x28] sm:$0xff]
        %v1894 = vld [vmem:[%s393 + $0x30] sm:$0xff]
        %v1895 = vld [vmem:[%s393 + $0x38] sm:$0xff]
        %v1896 = vmul.f32 %v1888, %v1880
        %v1897 = vmul.f32 %v1889, %v1881
        %v1898 = vmul.f32 %v1890, %v1882
        %v1899 = vmul.f32 %v1891, %v1883
        %v1900 = vmul.f32 %v1892, %v1884
        %v1901 = vmul.f32 %v1893, %v1885
        %v1902 = vmul.f32 %v1894, %v1886
        %v1903 = vmul.f32 %v1895, %v1887
        %1904 = vst [vmem:[%s393] sm:$0xff] %v1896
        %1905 = vst [vmem:[%s393 + $0x8] sm:$0xff] %v1897
        %1906 = vst [vmem:[%s393 + $0x10] sm:$0xff] %v1898
        %1907 = vst [vmem:[%s393 + $0x18] sm:$0xff] %v1899
        %1908 = vst [vmem:[%s393 + $0x20] sm:$0xff] %v1900
        %1909 = vst [vmem:[%s393 + $0x28] sm:$0xff] %v1901
        %1910 = vst [vmem:[%s393 + $0x30] sm:$0xff] %v1902
        %1911 = vst [vmem:[%s393 + $0x38] sm:$0xff] %v1903
        %v1912 = vpack.c.bf16 %v1897, %v1896
        %v1913 = vpack.c.bf16 %v1899, %v1898
        %v1914 = vpack.c.bf16 %v1901, %v1900
        %v1915 = vpack.c.bf16 %v1903, %v1902
        %1916 = vmatprep.subr.bf16.mxu0 0
        %1917 = vmatpush1.bf16.msra.mxu0 %v1088
        %1918 = vmatprep.subr.bf16.mxu0 0
        %1919 = vmatpush1.bf16.msra.mxu0 %v1089
        %1920 = vmatprep.subr.bf16.mxu0 0
        %1921 = vmatpush1.bf16.msra.mxu0 %v1090
        %1922 = vmatprep.subr.bf16.mxu0 0
        %1923 = vmatpush1.bf16.msra.mxu0 %v1091
        %1924 = vmatprep.subr.bf16.mxu0 0
        %1925 = vmatpush1.bf16.msra.mxu0 %v1092
        %1926 = vmatprep.subr.bf16.mxu0 0
        %1927 = vmatpush1.bf16.msra.mxu0 %v1093
        %1928 = vmatprep.subr.bf16.mxu0 0
        %1929 = vmatpush1.bf16.msra.mxu0 %v1094
        %1930 = vmatprep.subr.bf16.mxu0 0
        %1931 = vmatpush1.bf16.msra.mxu0 %v1095
        %1932 = vmatprep.subr.bf16.mxu0 0
        %1933 = vmatpush1.bf16.msra.mxu0 0
        %1934 = vmatprep.subr.bf16.mxu0 0
        %1935 = vmatpush1.bf16.msra.mxu0 0
        %1936 = vmatprep.subr.bf16.mxu0 0
        %1937 = vmatpush1.bf16.msra.mxu0 0
        %1938 = vmatprep.subr.bf16.mxu0 0
        %1939 = vmatpush1.bf16.msra.mxu0 0
        %1940 = vmatprep.subr.bf16.mxu0 0
        %1941 = vmatpush1.bf16.msra.mxu0 0
        %1942 = vmatprep.subr.bf16.mxu0 0
        %1943 = vmatpush1.bf16.msra.mxu0 0
        %1944 = vmatprep.subr.bf16.mxu0 0
        %1945 = vmatpush1.bf16.msra.mxu0 0
        %1946 = vmatprep.subr.bf16.mxu0 0
        %1947 = vmatpush1.bf16.msra.mxu0 0
        %1948 = vmatprep.mubr.bf16.mxu0 0
        %1949 = vmatmul.mubr.bf16.gmra.mrb[0].mxu0 %v1912
        %v1950 = vpop.f32.mrb[0].mxu0
        %v1951 = vadd.f32 0.0, %v1950
        %v1952 = vpop.f32.mrb[0].mxu0
        %v1953 = vpop.f32.mrb[0].mxu0
        %v1954 = vadd.f32 0.0, %v1953
        %v1955 = vpop.f32.mrb[0].mxu0
        %1956 = vmatprep.mubr.bf16.mxu0 0
        %1957 = vmatmul.mubr.bf16.gmra.mrb[0].mxu0 %v1913
        %v1958 = vpop.f32.mrb[0].mxu0
        %v1959 = vadd.f32 0.0, %v1958
        %v1960 = vpop.f32.mrb[0].mxu0
        %v1961 = vpop.f32.mrb[0].mxu0
        %v1962 = vadd.f32 0.0, %v1961
        %v1963 = vpop.f32.mrb[0].mxu0
        %1964 = vmatprep.mubr.bf16.mxu0 0
        %1965 = vmatmul.mubr.bf16.gmra.mrb[0].mxu0 %v1914
        %v1966 = vpop.f32.mrb[0].mxu0
        %v1967 = vadd.f32 0.0, %v1966
        %v1968 = vpop.f32.mrb[0].mxu0
        %v1969 = vpop.f32.mrb[0].mxu0
        %v1970 = vadd.f32 0.0, %v1969
        %v1971 = vpop.f32.mrb[0].mxu0
        %1972 = vmatprep.mubr.bf16.mxu0 0
        %1973 = vmatmul.mubr.bf16.gmra.mrb[0].mxu0 %v1915
        %v1974 = vpop.f32.mrb[0].mxu0
        %v1975 = vadd.f32 0.0, %v1974
        %v1976 = vpop.f32.mrb[0].mxu0
        %v1977 = vpop.f32.mrb[0].mxu0
        %v1978 = vadd.f32 0.0, %v1977
        %v1979 = vpop.f32.mrb[0].mxu0
        %1980 = vdwg.mxu0
        %v1981 = vmul.f32 %v1951, %v725
        %v1982 = vmul.f32 %v1954, %v727
        %v1983 = vmul.f32 %v1959, %v729
        %v1984 = vmul.f32 %v1962, %v731
        %v1985 = vmul.f32 %v1967, %v733
        %v1986 = vmul.f32 %v1970, %v735
        %v1987 = vmul.f32 %v1975, %v737
        %v1988 = vmul.f32 %v1978, %v739
        %v1989 = vpack.c.bf16 %v1982, %v1981
        %v1990 = vpack.c.bf16 %v1984, %v1983
        %v1991 = vpack.c.bf16 %v1986, %v1985
        %v1992 = vpack.c.bf16 %v1988, %v1987
        %v1993 = vld [vmem:[%s4] sm:$0xf]
        %v1994 = vld [vmem:[%s4 + $0x4] sm:$0xf]
        %v1995 = vld [vmem:[%s1363] sm:$0xff]
        %v1996 = vld [vmem:[%s1363 + $0x8] sm:$0xff]
        %v1997 = vld [vmem:[%s1363 + $0x10] sm:$0xff]
        %v1998 = vld [vmem:[%s1363 + $0x18] sm:$0xff]
        %v1999 = vld [vmem:[%s1363 + $0x20] sm:$0xff]
        %v2000 = vld [vmem:[%s1363 + $0x28] sm:$0xff]
        %v2001 = vld [vmem:[%s1363 + $0x30] sm:$0xff]
        %v2002 = vld [vmem:[%s1363 + $0x38] sm:$0xff]
        %v2003 = vmul.f32 %v1995, %v1880
        %v2004 = vmul.f32 %v1996, %v1881
        %v2005 = vmul.f32 %v1997, %v1882
        %v2006 = vmul.f32 %v1998, %v1883
        %v2007 = vmul.f32 %v1999, %v1884
        %v2008 = vmul.f32 %v2000, %v1885
        %v2009 = vmul.f32 %v2001, %v1886
        %v2010 = vmul.f32 %v2002, %v1887
        %2011 = vst [vmem:[%s1363] sm:$0xff] %v2003
        %2012 = vst [vmem:[%s1363 + $0x8] sm:$0xff] %v2004
        %2013 = vst [vmem:[%s1363 + $0x10] sm:$0xff] %v2005
        %2014 = vst [vmem:[%s1363 + $0x18] sm:$0xff] %v2006
        %2015 = vst [vmem:[%s1363 + $0x20] sm:$0xff] %v2007
        %2016 = vst [vmem:[%s1363 + $0x28] sm:$0xff] %v2008
        %2017 = vst [vmem:[%s1363 + $0x30] sm:$0xff] %v2009
        %2018 = vst [vmem:[%s1363 + $0x38] sm:$0xff] %v2010
        %v2019 = vpack.c.bf16 %v2004, %v2003
        %v2020 = vpack.c.bf16 %v2006, %v2005
        %v2021 = vpack.c.bf16 %v2008, %v2007
        %v2022 = vpack.c.bf16 %v2010, %v2009
        %2031 = vrot.lane.b32.xlu0 %v1088, 112
        %v2032 = vpop.permute.xlu0 %2031
        %2033 = vrot.lane.b32.xlu0 %v1089, 112
        %v2034 = vpop.permute.xlu0 %2033
        %2035 = vrot.lane.b32.xlu0 %v1090, 112
        %v2036 = vpop.permute.xlu0 %2035
        %2037 = vrot.lane.b32.xlu0 %v1091, 112
        %v2038 = vpop.permute.xlu0 %2037
        %2039 = vrot.lane.b32.xlu0 %v1092, 112
        %v2040 = vpop.permute.xlu0 %2039
        %2041 = vrot.lane.b32.xlu0 %v1093, 112
        %v2042 = vpop.permute.xlu0 %2041
        %2043 = vrot.lane.b32.xlu0 %v1094, 112
        %v2044 = vpop.permute.xlu0 %2043
        %2045 = vrot.lane.b32.xlu0 %v1095, 112
        %v2046 = vpop.permute.xlu0 %2045
        %2055 = vmatprep.subr.bf16.mxu0 0
        %2056 = vmatpush1.bf16.msra.mxu0 %v2032
        %2057 = vmatprep.subr.bf16.mxu0 0
        %2058 = vmatpush1.bf16.msra.mxu0 %v2034
        %2059 = vmatprep.subr.bf16.mxu0 0
        %2060 = vmatpush1.bf16.msra.mxu0 %v2036
        %2061 = vmatprep.subr.bf16.mxu0 0
        %2062 = vmatpush1.bf16.msra.mxu0 %v2038
        %2063 = vmatprep.subr.bf16.mxu0 0
        %2064 = vmatpush1.bf16.msra.mxu0 %v2040
        %2065 = vmatprep.subr.bf16.mxu0 0
        %2066 = vmatpush1.bf16.msra.mxu0 %v2042
        %2067 = vmatprep.subr.bf16.mxu0 0
        %2068 = vmatpush1.bf16.msra.mxu0 %v2044
        %2069 = vmatprep.subr.bf16.mxu0 0
        %2070 = vmatpush1.bf16.msra.mxu0 %v2046
        %2071 = vmatprep.subr.bf16.mxu0 0
        %2072 = vmatpush1.bf16.msra.mxu0 0
        %2073 = vmatprep.subr.bf16.mxu0 0
        %2074 = vmatpush1.bf16.msra.mxu0 0
        %2075 = vmatprep.subr.bf16.mxu0 0
        %2076 = vmatpush1.bf16.msra.mxu0 0
        %2077 = vmatprep.subr.bf16.mxu0 0
        %2078 = vmatpush1.bf16.msra.mxu0 0
        %2079 = vmatprep.subr.bf16.mxu0 0
        %2080 = vmatpush1.bf16.msra.mxu0 0
        %2081 = vmatprep.subr.bf16.mxu0 0
        %2082 = vmatpush1.bf16.msra.mxu0 0
        %2083 = vmatprep.subr.bf16.mxu0 0
        %2084 = vmatpush1.bf16.msra.mxu0 0
        %2085 = vmatprep.subr.bf16.mxu0 0
        %2086 = vmatpush1.bf16.msra.mxu0 0
        %2087 = vmatprep.mubr.bf16.mxu0 0
        %2088 = vmatmul.mubr.bf16.gmra.mrb[0].mxu0 %v2019
        %v2089 = vpop.f32.mrb[0].mxu0
        %v2090 = vadd.f32 0.0, %v2089
        %v2091 = vpop.f32.mrb[0].mxu0
        %v2092 = vpop.f32.mrb[0].mxu0
        %v2093 = vadd.f32 0.0, %v2092
        %v2094 = vpop.f32.mrb[0].mxu0
        %2095 = vmatprep.mubr.bf16.mxu0 0
        %2096 = vmatmul.mubr.bf16.gmra.mrb[0].mxu0 %v2020
        %v2097 = vpop.f32.mrb[0].mxu0
        %v2098 = vadd.f32 0.0, %v2097
        %v2099 = vpop.f32.mrb[0].mxu0
        %v2100 = vpop.f32.mrb[0].mxu0
        %v2101 = vadd.f32 0.0, %v2100
        %v2102 = vpop.f32.mrb[0].mxu0
        %2103 = vmatprep.mubr.bf16.mxu0 0
        %2104 = vmatmul.mubr.bf16.gmra.mrb[0].mxu0 %v2021
        %v2105 = vpop.f32.mrb[0].mxu0
        %v2106 = vadd.f32 0.0, %v2105
        %v2107 = vpop.f32.mrb[0].mxu0
        %v2108 = vpop.f32.mrb[0].mxu0
        %v2109 = vadd.f32 0.0, %v2108
        %v2110 = vpop.f32.mrb[0].mxu0
        %2111 = vmatprep.mubr.bf16.mxu0 0
        %2112 = vmatmul.mubr.bf16.gmra.mrb[0].mxu0 %v2022
        %v2113 = vpop.f32.mrb[0].mxu0
        %v2114 = vadd.f32 0.0, %v2113
        %v2115 = vpop.f32.mrb[0].mxu0
        %v2116 = vpop.f32.mrb[0].mxu0
        %v2117 = vadd.f32 0.0, %v2116
        %v2118 = vpop.f32.mrb[0].mxu0
        %2119 = vdwg.mxu0
        %2128 = vrot.lane.b32.xlu0 %v725, 112
        %v2129 = vpop.permute.xlu0 %2128
        %2130 = vrot.lane.b32.xlu0 %v727, 112
        %v2131 = vpop.permute.xlu0 %2130
        %2132 = vrot.lane.b32.xlu0 %v729, 112
        %v2133 = vpop.permute.xlu0 %2132
        %2134 = vrot.lane.b32.xlu0 %v731, 112
        %v2135 = vpop.permute.xlu0 %2134
        %2136 = vrot.lane.b32.xlu0 %v733, 112
        %v2137 = vpop.permute.xlu0 %2136
        %2138 = vrot.lane.b32.xlu0 %v735, 112
        %v2139 = vpop.permute.xlu0 %2138
        %2140 = vrot.lane.b32.xlu0 %v737, 112
        %v2141 = vpop.permute.xlu0 %2140
        %2142 = vrot.lane.b32.xlu0 %v739, 112
        %v2143 = vpop.permute.xlu0 %2142
        %v2152 = vmul.f32 %v2090, %v2129
        %v2153 = vmul.f32 %v2093, %v2131
        %v2154 = vmul.f32 %v2098, %v2133
        %v2155 = vmul.f32 %v2101, %v2135
        %v2156 = vmul.f32 %v2106, %v2137
        %v2157 = vmul.f32 %v2109, %v2139
        %v2158 = vmul.f32 %v2114, %v2141
        %v2159 = vmul.f32 %v2117, %v2143
        %v2160 = vpack.c.bf16 %v2153, %v2152
        %v2161 = vpack.c.bf16 %v2155, %v2154
        %v2162 = vpack.c.bf16 %v2157, %v2156
        %v2163 = vpack.c.bf16 %v2159, %v2158
        %s2164 = scalar_lea.vmem %s4, 8
        %v2165 = vld [vmem:[%s2164] sm:$0xf]
        %v2166 = vld [vmem:[%s2164 + $0x4] sm:$0xf]
        %v2169 = vunpack.c.l.b16 %v2165
        %v2170 = vunpack.c.l.b16 %v2166
        %v2171 = vpack.c.b16 %v2170, %v2169
        %v2174 = vsel %vm1116, %v2160, 0
        %v2177 = vsel %vm1116, %v2161, 0
        %v2180 = vsel %vm1116, %v2162, 0
        %v2183 = vsel %vm1116, %v2163, 0
        %2185 = vmatprep.subr.bf16.mxu0 0
        %2186 = vmatpush1.bf16.msra.mxu0 %v2171
        %2187 = vmatprep.subr.bf16.mxu0 0
        %2188 = vmatpush1.bf16.msra.mxu0 0
        %2189 = vmatprep.subr.bf16.mxu0 0
        %2190 = vmatpush1.bf16.msra.mxu0 0
        %2191 = vmatprep.subr.bf16.mxu0 0
        %2192 = vmatpush1.bf16.msra.mxu0 0
        %2193 = vmatprep.subr.bf16.mxu0 0
        %2194 = vmatpush1.bf16.msra.mxu0 0
        %2195 = vmatprep.subr.bf16.mxu0 0
        %2196 = vmatpush1.bf16.msra.mxu0 0
        %2197 = vmatprep.subr.bf16.mxu0 0
        %2198 = vmatpush1.bf16.msra.mxu0 0
        %2199 = vmatprep.subr.bf16.mxu0 0
        %2200 = vmatpush1.bf16.msra.mxu0 0
        %2201 = vmatprep.subr.bf16.mxu0 0
        %2202 = vmatpush1.bf16.msra.mxu0 0
        %2203 = vmatprep.subr.bf16.mxu0 0
        %2204 = vmatpush1.bf16.msra.mxu0 0
        %2205 = vmatprep.subr.bf16.mxu0 0
        %2206 = vmatpush1.bf16.msra.mxu0 0
        %2207 = vmatprep.subr.bf16.mxu0 0
        %2208 = vmatpush1.bf16.msra.mxu0 0
        %2209 = vmatprep.subr.bf16.mxu0 0
        %2210 = vmatpush1.bf16.msra.mxu0 0
        %2211 = vmatprep.subr.bf16.mxu0 0
        %2212 = vmatpush1.bf16.msra.mxu0 0
        %2213 = vmatprep.subr.bf16.mxu0 0
        %2214 = vmatpush1.bf16.msra.mxu0 0
        %2215 = vmatprep.subr.bf16.mxu0 0
        %2216 = vmatpush1.bf16.msra.mxu0 0
        %2217 = vmatprep.mubr.bf16.mxu0 0
        %2218 = vmatmul.mubr.bf16.gmra.mrb[0].mxu0 %v2174
        %v2219 = vpop.f32.mrb[0].mxu0
        %v2220 = vadd.f32 0.0, %v2219
        %v2221 = vpop.f32.mrb[0].mxu0
        %v2222 = vpop.f32.mrb[0].mxu0
        %v2223 = vadd.f32 0.0, %v2222
        %v2224 = vpop.f32.mrb[0].mxu0
        %2225 = vmatprep.mubr.bf16.mxu0 0
        %2226 = vmatmul.mubr.bf16.gmra.mrb[0].mxu0 %v2177
        %v2227 = vpop.f32.mrb[0].mxu0
        %v2228 = vadd.f32 0.0, %v2227
        %v2229 = vpop.f32.mrb[0].mxu0
        %v2230 = vpop.f32.mrb[0].mxu0
        %v2231 = vadd.f32 0.0, %v2230
        %v2232 = vpop.f32.mrb[0].mxu0
        %2233 = vmatprep.mubr.bf16.mxu0 0
        %2234 = vmatmul.mubr.bf16.gmra.mrb[0].mxu0 %v2180
        %v2235 = vpop.f32.mrb[0].mxu0
        %v2236 = vadd.f32 0.0, %v2235
        %v2237 = vpop.f32.mrb[0].mxu0
        %v2238 = vpop.f32.mrb[0].mxu0
        %v2239 = vadd.f32 0.0, %v2238
        %v2240 = vpop.f32.mrb[0].mxu0
        %2241 = vmatprep.mubr.bf16.mxu0 0
        %2242 = vmatmul.mubr.bf16.gmra.mrb[0].mxu0 %v2183
        %v2243 = vpop.f32.mrb[0].mxu0
        %v2244 = vadd.f32 0.0, %v2243
        %v2245 = vpop.f32.mrb[0].mxu0
        %v2246 = vpop.f32.mrb[0].mxu0
        %v2247 = vadd.f32 0.0, %v2246
        %v2248 = vpop.f32.mrb[0].mxu0
        %2249 = vdwg.mxu0
        %v2252 = vunpack.c.l.b16 %v1993
        %v2253 = vunpack.c.l.b16 %v1994
        %v2254 = vpack.c.b16 %v2253, %v2252
        %v2257 = vsel %vm1116, %v1989, 0
        %v2260 = vsel %vm1116, %v1990, 0
        %v2263 = vsel %vm1116, %v1991, 0
        %v2266 = vsel %vm1116, %v1992, 0
        %2268 = vmatprep.subr.bf16.mxu0 0
        %2269 = vmatpush1.bf16.msra.mxu0 %v2254
        %2270 = vmatprep.subr.bf16.mxu0 0
        %2271 = vmatpush1.bf16.msra.mxu0 0
        %2272 = vmatprep.subr.bf16.mxu0 0
        %2273 = vmatpush1.bf16.msra.mxu0 0
        %2274 = vmatprep.subr.bf16.mxu0 0
        %2275 = vmatpush1.bf16.msra.mxu0 0
        %2276 = vmatprep.subr.bf16.mxu0 0
        %2277 = vmatpush1.bf16.msra.mxu0 0
        %2278 = vmatprep.subr.bf16.mxu0 0
        %2279 = vmatpush1.bf16.msra.mxu0 0
        %2280 = vmatprep.subr.bf16.mxu0 0
        %2281 = vmatpush1.bf16.msra.mxu0 0
        %2282 = vmatprep.subr.bf16.mxu0 0
        %2283 = vmatpush1.bf16.msra.mxu0 0
        %2284 = vmatprep.subr.bf16.mxu0 0
        %2285 = vmatpush1.bf16.msra.mxu0 0
        %2286 = vmatprep.subr.bf16.mxu0 0
        %2287 = vmatpush1.bf16.msra.mxu0 0
        %2288 = vmatprep.subr.bf16.mxu0 0
        %2289 = vmatpush1.bf16.msra.mxu0 0
        %2290 = vmatprep.subr.bf16.mxu0 0
        %2291 = vmatpush1.bf16.msra.mxu0 0
        %2292 = vmatprep.subr.bf16.mxu0 0
        %2293 = vmatpush1.bf16.msra.mxu0 0
        %2294 = vmatprep.subr.bf16.mxu0 0
        %2295 = vmatpush1.bf16.msra.mxu0 0
        %2296 = vmatprep.subr.bf16.mxu0 0
        %2297 = vmatpush1.bf16.msra.mxu0 0
        %2298 = vmatprep.subr.bf16.mxu0 0
        %2299 = vmatpush1.bf16.msra.mxu0 0
        %2300 = vmatprep.mubr.bf16.mxu0 0
        %2301 = vmatmul.mubr.bf16.gmra.mrb[0].mxu0 %v2257
        %v2302 = vpop.f32.mrb[0].mxu0
        %v2303 = vadd.f32 %v2220, %v2302
        %v2304 = vpop.f32.mrb[0].mxu0
        %v2305 = vpop.f32.mrb[0].mxu0
        %v2306 = vadd.f32 %v2223, %v2305
        %v2307 = vpop.f32.mrb[0].mxu0
        %2308 = vmatprep.mubr.bf16.mxu0 0
        %2309 = vmatmul.mubr.bf16.gmra.mrb[0].mxu0 %v2260
        %v2310 = vpop.f32.mrb[0].mxu0
        %v2311 = vadd.f32 %v2228, %v2310
        %v2312 = vpop.f32.mrb[0].mxu0
        %v2313 = vpop.f32.mrb[0].mxu0
        %v2314 = vadd.f32 %v2231, %v2313
        %v2315 = vpop.f32.mrb[0].mxu0
        %2316 = vmatprep.mubr.bf16.mxu0 0
        %2317 = vmatmul.mubr.bf16.gmra.mrb[0].mxu0 %v2263
        %v2318 = vpop.f32.mrb[0].mxu0
        %v2319 = vadd.f32 %v2236, %v2318
        %v2320 = vpop.f32.mrb[0].mxu0
        %v2321 = vpop.f32.mrb[0].mxu0
        %v2322 = vadd.f32 %v2239, %v2321
        %v2323 = vpop.f32.mrb[0].mxu0
        %2324 = vmatprep.mubr.bf16.mxu0 0
        %2325 = vmatmul.mubr.bf16.gmra.mrb[0].mxu0 %v2266
        %v2326 = vpop.f32.mrb[0].mxu0
        %v2327 = vadd.f32 %v2244, %v2326
        %v2328 = vpop.f32.mrb[0].mxu0
        %v2329 = vpop.f32.mrb[0].mxu0
        %v2330 = vadd.f32 %v2247, %v2329
        %v2331 = vpop.f32.mrb[0].mxu0
        %2332 = vdwg.mxu0
        %v2333 = vld [vmem:[%s1505] sm:$0xff]
        %v2334 = vld [vmem:[%s1505 + $0x8] sm:$0xff]
        %v2335 = vld [vmem:[%s1505 + $0x10] sm:$0xff]
        %v2336 = vld [vmem:[%s1505 + $0x18] sm:$0xff]
        %v2337 = vld [vmem:[%s1505 + $0x20] sm:$0xff]
        %v2338 = vld [vmem:[%s1505 + $0x28] sm:$0xff]
        %v2339 = vld [vmem:[%s1505 + $0x30] sm:$0xff]
        %v2340 = vld [vmem:[%s1505 + $0x38] sm:$0xff]
        %v2341 = vmul.f32 %v2333, %v1880
        %v2342 = vmul.f32 %v2334, %v1881
        %v2343 = vmul.f32 %v2335, %v1882
        %v2344 = vmul.f32 %v2336, %v1883
        %v2345 = vmul.f32 %v2337, %v1884
        %v2346 = vmul.f32 %v2338, %v1885
        %v2347 = vmul.f32 %v2339, %v1886
        %v2348 = vmul.f32 %v2340, %v1887
        %2349 = vst [vmem:[%s1505] sm:$0xff] %v2341
        %2350 = vst [vmem:[%s1505 + $0x8] sm:$0xff] %v2342
        %2351 = vst [vmem:[%s1505 + $0x10] sm:$0xff] %v2343
        %2352 = vst [vmem:[%s1505 + $0x18] sm:$0xff] %v2344
        %2353 = vst [vmem:[%s1505 + $0x20] sm:$0xff] %v2345
        %2354 = vst [vmem:[%s1505 + $0x28] sm:$0xff] %v2346
        %2355 = vst [vmem:[%s1505 + $0x30] sm:$0xff] %v2347
        %2356 = vst [vmem:[%s1505 + $0x38] sm:$0xff] %v2348
        %v2357 = vpack.c.bf16 %v2342, %v2341
        %v2358 = vpack.c.bf16 %v2344, %v2343
        %v2359 = vpack.c.bf16 %v2346, %v2345
        %v2360 = vpack.c.bf16 %v2348, %v2347
        %2361 = vrot.lane.b32.xlu0 %v1088, 96
        %v2362 = vpop.permute.xlu0 %2361
        %2363 = vrot.lane.b32.xlu0 %v1089, 96
        %v2364 = vpop.permute.xlu0 %2363
        %2365 = vrot.lane.b32.xlu0 %v1090, 96
        %v2366 = vpop.permute.xlu0 %2365
        %2367 = vrot.lane.b32.xlu0 %v1091, 96
        %v2368 = vpop.permute.xlu0 %2367
        %2369 = vrot.lane.b32.xlu0 %v1092, 96
        %v2370 = vpop.permute.xlu0 %2369
        %2371 = vrot.lane.b32.xlu0 %v1093, 96
        %v2372 = vpop.permute.xlu0 %2371
        %2373 = vrot.lane.b32.xlu0 %v1094, 96
        %v2374 = vpop.permute.xlu0 %2373
        %2375 = vrot.lane.b32.xlu0 %v1095, 96
        %v2376 = vpop.permute.xlu0 %2375
        %2385 = vmatprep.subr.bf16.mxu0 0
        %2386 = vmatpush1.bf16.msra.mxu0 %v2362
        %2387 = vmatprep.subr.bf16.mxu0 0
        %2388 = vmatpush1.bf16.msra.mxu0 %v2364
        %2389 = vmatprep.subr.bf16.mxu0 0
        %2390 = vmatpush1.bf16.msra.mxu0 %v2366
        %2391 = vmatprep.subr.bf16.mxu0 0
        %2392 = vmatpush1.bf16.msra.mxu0 %v2368
        %2393 = vmatprep.subr.bf16.mxu0 0
        %2394 = vmatpush1.bf16.msra.mxu0 %v2370
        %2395 = vmatprep.subr.bf16.mxu0 0
        %2396 = vmatpush1.bf16.msra.mxu0 %v2372
        %2397 = vmatprep.subr.bf16.mxu0 0
        %2398 = vmatpush1.bf16.msra.mxu0 %v2374
        %2399 = vmatprep.subr.bf16.mxu0 0
        %2400 = vmatpush1.bf16.msra.mxu0 %v2376
        %2401 = vmatprep.subr.bf16.mxu0 0
        %2402 = vmatpush1.bf16.msra.mxu0 0
        %2403 = vmatprep.subr.bf16.mxu0 0
        %2404 = vmatpush1.bf16.msra.mxu0 0
        %2405 = vmatprep.subr.bf16.mxu0 0
        %2406 = vmatpush1.bf16.msra.mxu0 0
        %2407 = vmatprep.subr.bf16.mxu0 0
        %2408 = vmatpush1.bf16.msra.mxu0 0
        %2409 = vmatprep.subr.bf16.mxu0 0
        %2410 = vmatpush1.bf16.msra.mxu0 0
        %2411 = vmatprep.subr.bf16.mxu0 0
        %2412 = vmatpush1.bf16.msra.mxu0 0
        %2413 = vmatprep.subr.bf16.mxu0 0
        %2414 = vmatpush1.bf16.msra.mxu0 0
        %2415 = vmatprep.subr.bf16.mxu0 0
        %2416 = vmatpush1.bf16.msra.mxu0 0
        %2417 = vmatprep.mubr.bf16.mxu0 0
        %2418 = vmatmul.mubr.bf16.gmra.mrb[0].mxu0 %v2357
        %v2419 = vpop.f32.mrb[0].mxu0
        %v2420 = vadd.f32 0.0, %v2419
        %v2421 = vpop.f32.mrb[0].mxu0
        %v2422 = vpop.f32.mrb[0].mxu0
        %v2423 = vadd.f32 0.0, %v2422
        %v2424 = vpop.f32.mrb[0].mxu0
        %2425 = vmatprep.mubr.bf16.mxu0 0
        %2426 = vmatmul.mubr.bf16.gmra.mrb[0].mxu0 %v2358
        %v2427 = vpop.f32.mrb[0].mxu0
        %v2428 = vadd.f32 0.0, %v2427
        %v2429 = vpop.f32.mrb[0].mxu0
        %v2430 = vpop.f32.mrb[0].mxu0
        %v2431 = vadd.f32 0.0, %v2430
        %v2432 = vpop.f32.mrb[0].mxu0
        %2433 = vmatprep.mubr.bf16.mxu0 0
        %2434 = vmatmul.mubr.bf16.gmra.mrb[0].mxu0 %v2359
        %v2435 = vpop.f32.mrb[0].mxu0
        %v2436 = vadd.f32 0.0, %v2435
        %v2437 = vpop.f32.mrb[0].mxu0
        %v2438 = vpop.f32.mrb[0].mxu0
        %v2439 = vadd.f32 0.0, %v2438
        %v2440 = vpop.f32.mrb[0].mxu0
        %2441 = vmatprep.mubr.bf16.mxu0 0
        %2442 = vmatmul.mubr.bf16.gmra.mrb[0].mxu0 %v2360
        %v2443 = vpop.f32.mrb[0].mxu0
        %v2444 = vadd.f32 0.0, %v2443
        %v2445 = vpop.f32.mrb[0].mxu0
        %v2446 = vpop.f32.mrb[0].mxu0
        %v2447 = vadd.f32 0.0, %v2446
        %v2448 = vpop.f32.mrb[0].mxu0
        %2449 = vdwg.mxu0
        %2450 = vrot.lane.b32.xlu0 %v725, 96
        %v2451 = vpop.permute.xlu0 %2450
        %2452 = vrot.lane.b32.xlu0 %v727, 96
        %v2453 = vpop.permute.xlu0 %2452
        %2454 = vrot.lane.b32.xlu0 %v729, 96
        %v2455 = vpop.permute.xlu0 %2454
        %2456 = vrot.lane.b32.xlu0 %v731, 96
        %v2457 = vpop.permute.xlu0 %2456
        %2458 = vrot.lane.b32.xlu0 %v733, 96
        %v2459 = vpop.permute.xlu0 %2458
        %2460 = vrot.lane.b32.xlu0 %v735, 96
        %v2461 = vpop.permute.xlu0 %2460
        %2462 = vrot.lane.b32.xlu0 %v737, 96
        %v2463 = vpop.permute.xlu0 %2462
        %2464 = vrot.lane.b32.xlu0 %v739, 96
        %v2465 = vpop.permute.xlu0 %2464
        %v2474 = vmul.f32 %v2420, %v2451
        %v2475 = vmul.f32 %v2423, %v2453
        %v2476 = vmul.f32 %v2428, %v2455
        %v2477 = vmul.f32 %v2431, %v2457
        %v2478 = vmul.f32 %v2436, %v2459
        %v2479 = vmul.f32 %v2439, %v2461
        %v2480 = vmul.f32 %v2444, %v2463
        %v2481 = vmul.f32 %v2447, %v2465
        %v2482 = vpack.c.bf16 %v2475, %v2474
        %v2483 = vpack.c.bf16 %v2477, %v2476
        %v2484 = vpack.c.bf16 %v2479, %v2478
        %v2485 = vpack.c.bf16 %v2481, %v2480
        %s2486 = scalar_lea.vmem %s4, 16
        %v2487 = vld [vmem:[%s2486] sm:$0xf]
        %v2488 = vld [vmem:[%s2486 + $0x4] sm:$0xf]
        %v2491 = vunpack.c.l.b16 %v2487
        %v2492 = vunpack.c.l.b16 %v2488
        %v2493 = vpack.c.b16 %v2492, %v2491
        %v2496 = vsel %vm1116, %v2482, 0
        %v2499 = vsel %vm1116, %v2483, 0
        %v2502 = vsel %vm1116, %v2484, 0
        %v2505 = vsel %vm1116, %v2485, 0
        %2507 = vmatprep.subr.bf16.mxu0 0
        %2508 = vmatpush1.bf16.msra.mxu0 %v2493
        %2509 = vmatprep.subr.bf16.mxu0 0
        %2510 = vmatpush1.bf16.msra.mxu0 0
        %2511 = vmatprep.subr.bf16.mxu0 0
        %2512 = vmatpush1.bf16.msra.mxu0 0
        %2513 = vmatprep.subr.bf16.mxu0 0
        %2514 = vmatpush1.bf16.msra.mxu0 0
        %2515 = vmatprep.subr.bf16.mxu0 0
        %2516 = vmatpush1.bf16.msra.mxu0 0
        %2517 = vmatprep.subr.bf16.mxu0 0
        %2518 = vmatpush1.bf16.msra.mxu0 0
        %2519 = vmatprep.subr.bf16.mxu0 0
        %2520 = vmatpush1.bf16.msra.mxu0 0
        %2521 = vmatprep.subr.bf16.mxu0 0
        %2522 = vmatpush1.bf16.msra.mxu0 0
        %2523 = vmatprep.subr.bf16.mxu0 0
        %2524 = vmatpush1.bf16.msra.mxu0 0
        %2525 = vmatprep.subr.bf16.mxu0 0
        %2526 = vmatpush1.bf16.msra.mxu0 0
        %2527 = vmatprep.subr.bf16.mxu0 0
        %2528 = vmatpush1.bf16.msra.mxu0 0
        %2529 = vmatprep.subr.bf16.mxu0 0
        %2530 = vmatpush1.bf16.msra.mxu0 0
        %2531 = vmatprep.subr.bf16.mxu0 0
        %2532 = vmatpush1.bf16.msra.mxu0 0
        %2533 = vmatprep.subr.bf16.mxu0 0
        %2534 = vmatpush1.bf16.msra.mxu0 0
        %2535 = vmatprep.subr.bf16.mxu0 0
        %2536 = vmatpush1.bf16.msra.mxu0 0
        %2537 = vmatprep.subr.bf16.mxu0 0
        %2538 = vmatpush1.bf16.msra.mxu0 0
        %2539 = vmatprep.mubr.bf16.mxu0 0
        %2540 = vmatmul.mubr.bf16.gmra.mrb[0].mxu0 %v2496
        %v2541 = vpop.f32.mrb[0].mxu0
        %v2542 = vadd.f32 0.0, %v2541
        %v2543 = vpop.f32.mrb[0].mxu0
        %v2544 = vpop.f32.mrb[0].mxu0
        %v2545 = vadd.f32 0.0, %v2544
        %v2546 = vpop.f32.mrb[0].mxu0
        %2547 = vmatprep.mubr.bf16.mxu0 0
        %2548 = vmatmul.mubr.bf16.gmra.mrb[0].mxu0 %v2499
        %v2549 = vpop.f32.mrb[0].mxu0
        %v2550 = vadd.f32 0.0, %v2549
        %v2551 = vpop.f32.mrb[0].mxu0
        %v2552 = vpop.f32.mrb[0].mxu0
        %v2553 = vadd.f32 0.0, %v2552
        %v2554 = vpop.f32.mrb[0].mxu0
        %2555 = vmatprep.mubr.bf16.mxu0 0
        %2556 = vmatmul.mubr.bf16.gmra.mrb[0].mxu0 %v2502
        %v2557 = vpop.f32.mrb[0].mxu0
        %v2558 = vadd.f32 0.0, %v2557
        %v2559 = vpop.f32.mrb[0].mxu0
        %v2560 = vpop.f32.mrb[0].mxu0
        %v2561 = vadd.f32 0.0, %v2560
        %v2562 = vpop.f32.mrb[0].mxu0
        %2563 = vmatprep.mubr.bf16.mxu0 0
        %2564 = vmatmul.mubr.bf16.gmra.mrb[0].mxu0 %v2505
        %v2565 = vpop.f32.mrb[0].mxu0
        %v2566 = vadd.f32 0.0, %v2565
        %v2567 = vpop.f32.mrb[0].mxu0
        %v2568 = vpop.f32.mrb[0].mxu0
        %v2569 = vadd.f32 0.0, %v2568
        %v2570 = vpop.f32.mrb[0].mxu0
        %2571 = vdwg.mxu0
        %v2572 = vadd.f32 %v2303, %v2542
        %v2573 = vadd.f32 %v2306, %v2545
        %v2574 = vadd.f32 %v2311, %v2550
        %v2575 = vadd.f32 %v2314, %v2553
        %v2576 = vadd.f32 %v2319, %v2558
        %v2577 = vadd.f32 %v2322, %v2561
        %v2578 = vadd.f32 %v2327, %v2566
        %v2579 = vadd.f32 %v2330, %v2569
        %v2580 = vld [vmem:[%s1647] sm:$0xff]
        %v2581 = vld [vmem:[%s1647 + $0x8] sm:$0xff]
        %v2582 = vld [vmem:[%s1647 + $0x10] sm:$0xff]
        %v2583 = vld [vmem:[%s1647 + $0x18] sm:$0xff]
        %v2584 = vld [vmem:[%s1647 + $0x20] sm:$0xff]
        %v2585 = vld [vmem:[%s1647 + $0x28] sm:$0xff]
        %v2586 = vld [vmem:[%s1647 + $0x30] sm:$0xff]
        %v2587 = vld [vmem:[%s1647 + $0x38] sm:$0xff]
        %v2588 = vmul.f32 %v2580, %v1880
        %v2589 = vmul.f32 %v2581, %v1881
        %v2590 = vmul.f32 %v2582, %v1882
        %v2591 = vmul.f32 %v2583, %v1883
        %v2592 = vmul.f32 %v2584, %v1884
        %v2593 = vmul.f32 %v2585, %v1885
        %v2594 = vmul.f32 %v2586, %v1886
        %v2595 = vmul.f32 %v2587, %v1887
        %2596 = vst [vmem:[%s1647] sm:$0xff] %v2588
        %2597 = vst [vmem:[%s1647 + $0x8] sm:$0xff] %v2589
        %2598 = vst [vmem:[%s1647 + $0x10] sm:$0xff] %v2590
        %2599 = vst [vmem:[%s1647 + $0x18] sm:$0xff] %v2591
        %2600 = vst [vmem:[%s1647 + $0x20] sm:$0xff] %v2592
        %2601 = vst [vmem:[%s1647 + $0x28] sm:$0xff] %v2593
        %2602 = vst [vmem:[%s1647 + $0x30] sm:$0xff] %v2594
        %2603 = vst [vmem:[%s1647 + $0x38] sm:$0xff] %v2595
        %v2604 = vpack.c.bf16 %v2589, %v2588
        %v2605 = vpack.c.bf16 %v2591, %v2590
        %v2606 = vpack.c.bf16 %v2593, %v2592
        %v2607 = vpack.c.bf16 %v2595, %v2594
        %2608 = vrot.lane.b32.xlu0 %v1088, 80
        %v2609 = vpop.permute.xlu0 %2608
        %2610 = vrot.lane.b32.xlu0 %v1089, 80
        %v2611 = vpop.permute.xlu0 %2610
        %2612 = vrot.lane.b32.xlu0 %v1090, 80
        %v2613 = vpop.permute.xlu0 %2612
        %2614 = vrot.lane.b32.xlu0 %v1091, 80
        %v2615 = vpop.permute.xlu0 %2614
        %2616 = vrot.lane.b32.xlu0 %v1092, 80
        %v2617 = vpop.permute.xlu0 %2616
        %2618 = vrot.lane.b32.xlu0 %v1093, 80
        %v2619 = vpop.permute.xlu0 %2618
        %2620 = vrot.lane.b32.xlu0 %v1094, 80
        %v2621 = vpop.permute.xlu0 %2620
        %2622 = vrot.lane.b32.xlu0 %v1095, 80
        %v2623 = vpop.permute.xlu0 %2622
        %2632 = vmatprep.subr.bf16.mxu0 0
        %2633 = vmatpush1.bf16.msra.mxu0 %v2609
        %2634 = vmatprep.subr.bf16.mxu0 0
        %2635 = vmatpush1.bf16.msra.mxu0 %v2611
        %2636 = vmatprep.subr.bf16.mxu0 0
        %2637 = vmatpush1.bf16.msra.mxu0 %v2613
        %2638 = vmatprep.subr.bf16.mxu0 0
        %2639 = vmatpush1.bf16.msra.mxu0 %v2615
        %2640 = vmatprep.subr.bf16.mxu0 0
        %2641 = vmatpush1.bf16.msra.mxu0 %v2617
        %2642 = vmatprep.subr.bf16.mxu0 0
        %2643 = vmatpush1.bf16.msra.mxu0 %v2619
        %2644 = vmatprep.subr.bf16.mxu0 0
        %2645 = vmatpush1.bf16.msra.mxu0 %v2621
        %2646 = vmatprep.subr.bf16.mxu0 0
        %2647 = vmatpush1.bf16.msra.mxu0 %v2623
        %2648 = vmatprep.subr.bf16.mxu0 0
        %2649 = vmatpush1.bf16.msra.mxu0 0
        %2650 = vmatprep.subr.bf16.mxu0 0
        %2651 = vmatpush1.bf16.msra.mxu0 0
        %2652 = vmatprep.subr.bf16.mxu0 0
        %2653 = vmatpush1.bf16.msra.mxu0 0
        %2654 = vmatprep.subr.bf16.mxu0 0
        %2655 = vmatpush1.bf16.msra.mxu0 0
        %2656 = vmatprep.subr.bf16.mxu0 0
        %2657 = vmatpush1.bf16.msra.mxu0 0
        %2658 = vmatprep.subr.bf16.mxu0 0
        %2659 = vmatpush1.bf16.msra.mxu0 0
        %2660 = vmatprep.subr.bf16.mxu0 0
        %2661 = vmatpush1.bf16.msra.mxu0 0
        %2662 = vmatprep.subr.bf16.mxu0 0
        %2663 = vmatpush1.bf16.msra.mxu0 0
        %2664 = vmatprep.mubr.bf16.mxu0 0
        %2665 = vmatmul.mubr.bf16.gmra.mrb[0].mxu0 %v2604
        %v2666 = vpop.f32.mrb[0].mxu0
        %v2667 = vadd.f32 0.0, %v2666
        %v2668 = vpop.f32.mrb[0].mxu0
        %v2669 = vpop.f32.mrb[0].mxu0
        %v2670 = vadd.f32 0.0, %v2669
        %v2671 = vpop.f32.mrb[0].mxu0
        %2672 = vmatprep.mubr.bf16.mxu0 0
        %2673 = vmatmul.mubr.bf16.gmra.mrb[0].mxu0 %v2605
        %v2674 = vpop.f32.mrb[0].mxu0
        %v2675 = vadd.f32 0.0, %v2674
        %v2676 = vpop.f32.mrb[0].mxu0
        %v2677 = vpop.f32.mrb[0].mxu0
        %v2678 = vadd.f32 0.0, %v2677
        %v2679 = vpop.f32.mrb[0].mxu0
        %2680 = vmatprep.mubr.bf16.mxu0 0
        %2681 = vmatmul.mubr.bf16.gmra.mrb[0].mxu0 %v2606
        %v2682 = vpop.f32.mrb[0].mxu0
        %v2683 = vadd.f32 0.0, %v2682
        %v2684 = vpop.f32.mrb[0].mxu0
        %v2685 = vpop.f32.mrb[0].mxu0
        %v2686 = vadd.f32 0.0, %v2685
        %v2687 = vpop.f32.mrb[0].mxu0
        %2688 = vmatprep.mubr.bf16.mxu0 0
        %2689 = vmatmul.mubr.bf16.gmra.mrb[0].mxu0 %v2607
        %v2690 = vpop.f32.mrb[0].mxu0
        %v2691 = vadd.f32 0.0, %v2690
        %v2692 = vpop.f32.mrb[0].mxu0
        %v2693 = vpop.f32.mrb[0].mxu0
        %v2694 = vadd.f32 0.0, %v2693
        %v2695 = vpop.f32.mrb[0].mxu0
        %2696 = vdwg.mxu0
        %2697 = vrot.lane.b32.xlu0 %v725, 80
        %v2698 = vpop.permute.xlu0 %2697
        %2699 = vrot.lane.b32.xlu0 %v727, 80
        %v2700 = vpop.permute.xlu0 %2699
        %2701 = vrot.lane.b32.xlu0 %v729, 80
        %v2702 = vpop.permute.xlu0 %2701
        %2703 = vrot.lane.b32.xlu0 %v731, 80
        %v2704 = vpop.permute.xlu0 %2703
        %2705 = vrot.lane.b32.xlu0 %v733, 80
        %v2706 = vpop.permute.xlu0 %2705
        %2707 = vrot.lane.b32.xlu0 %v735, 80
        %v2708 = vpop.permute.xlu0 %2707
        %2709 = vrot.lane.b32.xlu0 %v737, 80
        %v2710 = vpop.permute.xlu0 %2709
        %2711 = vrot.lane.b32.xlu0 %v739, 80
        %v2712 = vpop.permute.xlu0 %2711
        %v2721 = vmul.f32 %v2667, %v2698
        %v2722 = vmul.f32 %v2670, %v2700
        %v2723 = vmul.f32 %v2675, %v2702
        %v2724 = vmul.f32 %v2678, %v2704
        %v2725 = vmul.f32 %v2683, %v2706
        %v2726 = vmul.f32 %v2686, %v2708
        %v2727 = vmul.f32 %v2691, %v2710
        %v2728 = vmul.f32 %v2694, %v2712
        %v2729 = vpack.c.bf16 %v2722, %v2721
        %v2730 = vpack.c.bf16 %v2724, %v2723
        %v2731 = vpack.c.bf16 %v2726, %v2725
        %v2732 = vpack.c.bf16 %v2728, %v2727
        %s2733 = scalar_lea.vmem %s4, 24
        %v2734 = vld [vmem:[%s2733] sm:$0xf]
        %v2735 = vld [vmem:[%s2733 + $0x4] sm:$0xf]
        %v2738 = vunpack.c.l.b16 %v2734
        %v2739 = vunpack.c.l.b16 %v2735
        %v2740 = vpack.c.b16 %v2739, %v2738
        %v2743 = vsel %vm1116, %v2729, 0
        %v2746 = vsel %vm1116, %v2730, 0
        %v2749 = vsel %vm1116, %v2731, 0
        %v2752 = vsel %vm1116, %v2732, 0
        %2754 = vmatprep.subr.bf16.mxu0 0
        %2755 = vmatpush1.bf16.msra.mxu0 %v2740
        %2756 = vmatprep.subr.bf16.mxu0 0
        %2757 = vmatpush1.bf16.msra.mxu0 0
        %2758 = vmatprep.subr.bf16.mxu0 0
        %2759 = vmatpush1.bf16.msra.mxu0 0
        %2760 = vmatprep.subr.bf16.mxu0 0
        %2761 = vmatpush1.bf16.msra.mxu0 0
        %2762 = vmatprep.subr.bf16.mxu0 0
        %2763 = vmatpush1.bf16.msra.mxu0 0
        %2764 = vmatprep.subr.bf16.mxu0 0
        %2765 = vmatpush1.bf16.msra.mxu0 0
        %2766 = vmatprep.subr.bf16.mxu0 0
        %2767 = vmatpush1.bf16.msra.mxu0 0
        %2768 = vmatprep.subr.bf16.mxu0 0
        %2769 = vmatpush1.bf16.msra.mxu0 0
        %2770 = vmatprep.subr.bf16.mxu0 0
        %2771 = vmatpush1.bf16.msra.mxu0 0
        %2772 = vmatprep.subr.bf16.mxu0 0
        %2773 = vmatpush1.bf16.msra.mxu0 0
        %2774 = vmatprep.subr.bf16.mxu0 0
        %2775 = vmatpush1.bf16.msra.mxu0 0
        %2776 = vmatprep.subr.bf16.mxu0 0
        %2777 = vmatpush1.bf16.msra.mxu0 0
        %2778 = vmatprep.subr.bf16.mxu0 0
        %2779 = vmatpush1.bf16.msra.mxu0 0
        %2780 = vmatprep.subr.bf16.mxu0 0
        %2781 = vmatpush1.bf16.msra.mxu0 0
        %2782 = vmatprep.subr.bf16.mxu0 0
        %2783 = vmatpush1.bf16.msra.mxu0 0
        %2784 = vmatprep.subr.bf16.mxu0 0
        %2785 = vmatpush1.bf16.msra.mxu0 0
        %2786 = vmatprep.mubr.bf16.mxu0 0
        %2787 = vmatmul.mubr.bf16.gmra.mrb[0].mxu0 %v2743
        %v2788 = vpop.f32.mrb[0].mxu0
        %v2789 = vadd.f32 0.0, %v2788
        %v2790 = vpop.f32.mrb[0].mxu0
        %v2791 = vpop.f32.mrb[0].mxu0
        %v2792 = vadd.f32 0.0, %v2791
        %v2793 = vpop.f32.mrb[0].mxu0
        %2794 = vmatprep.mubr.bf16.mxu0 0
        %2795 = vmatmul.mubr.bf16.gmra.mrb[0].mxu0 %v2746
        %v2796 = vpop.f32.mrb[0].mxu0
        %v2797 = vadd.f32 0.0, %v2796
        %v2798 = vpop.f32.mrb[0].mxu0
        %v2799 = vpop.f32.mrb[0].mxu0
        %v2800 = vadd.f32 0.0, %v2799
        %v2801 = vpop.f32.mrb[0].mxu0
        %2802 = vmatprep.mubr.bf16.mxu0 0
        %2803 = vmatmul.mubr.bf16.gmra.mrb[0].mxu0 %v2749
        %v2804 = vpop.f32.mrb[0].mxu0
        %v2805 = vadd.f32 0.0, %v2804
        %v2806 = vpop.f32.mrb[0].mxu0
        %v2807 = vpop.f32.mrb[0].mxu0
        %v2808 = vadd.f32 0.0, %v2807
        %v2809 = vpop.f32.mrb[0].mxu0
        %2810 = vmatprep.mubr.bf16.mxu0 0
        %2811 = vmatmul.mubr.bf16.gmra.mrb[0].mxu0 %v2752
        %v2812 = vpop.f32.mrb[0].mxu0
        %v2813 = vadd.f32 0.0, %v2812
        %v2814 = vpop.f32.mrb[0].mxu0
        %v2815 = vpop.f32.mrb[0].mxu0
        %v2816 = vadd.f32 0.0, %v2815
        %v2817 = vpop.f32.mrb[0].mxu0
        %2818 = vdwg.mxu0
        %v2819 = vadd.f32 %v2572, %v2789
        %v2820 = vadd.f32 %v2573, %v2792
        %v2821 = vadd.f32 %v2574, %v2797
        %v2822 = vadd.f32 %v2575, %v2800
        %v2823 = vadd.f32 %v2576, %v2805
        %v2824 = vadd.f32 %v2577, %v2808
        %v2825 = vadd.f32 %v2578, %v2813
        %v2826 = vadd.f32 %v2579, %v2816
        %v2827 = vld [vmem:[%s5] sm:$0x1]
        %v2829 = vlaneseq
        %v2830 = vshrl.u32 %v2829, 7
        %v2831 = vsub.s32 0, %v2830
        %v2832 = vrot.slane %v2827, %v2831
        %v2834 = vadd.f32 %v2819, %v2832
        %v2835 = vadd.f32 %v2820, %v2832
        %v2836 = vadd.f32 %v2821, %v2832
        %v2837 = vadd.f32 %v2822, %v2832
        %v2838 = vadd.f32 %v2823, %v2832
        %v2839 = vadd.f32 %v2824, %v2832
        %v2840 = vadd.f32 %v2825, %v2832
        %v2841 = vadd.f32 %v2826, %v2832
        %2842 = vst.msk [vmem:[%s427] sm:$0xff] %vm512, %v2834
        %2843 = vst.msk [vmem:[%s427 + $0x8] sm:$0xff] %vm512, %v2835
        %2844 = vst.msk [vmem:[%s427 + $0x10] sm:$0xff] %vm512, %v2836
        %2845 = vst.msk [vmem:[%s427 + $0x18] sm:$0xff] %vm512, %v2837
        %2846 = vst.msk [vmem:[%s427 + $0x20] sm:$0xff] %vm512, %v2838
        %2847 = vst.msk [vmem:[%s427 + $0x28] sm:$0xff] %vm512, %v2839
        %2848 = vst.msk [vmem:[%s427 + $0x30] sm:$0xff] %vm512, %v2840
        %2849 = vst.msk [vmem:[%s427 + $0x38] sm:$0xff] %vm512, %v2841
        %s2850 = smul.u32 8, %s29
        %p2851 = scmp.lt.s32.totalorder %s28, 1
        %s2852 = scalar_select %p2851, %s28, 1
        %p2853 = scmp.lt.s32.totalorder %s2850, 15
        %s2854 = scalar_select %p2853, %s2850, 15
        %s2855 = smul.addr %s2852, 16
        %s2856 = sadd.s32 %s2854, %s2855
        %s2857 = smul.addr %s2856, 8
        %s2858 = scalar_lea.vmem %s7, %s2857
        %s2859 = sand.u32 %s240, 1
        %s2860 = scalar_lea.sflag [#allocation4], %s2859
        %s2861 = sand.u32 %s240, 1
        %s2862 = smul.addr %s2861, 256
        %s2863 = scalar_lea.vmem [#allocation5], %s2862
        // Predicated region
        $region53: #{tpu_custom_call.1} parent=47 // pred_check
          %p2864 = pneg %p222
        $region54: #{tpu_custom_call.1} parent=47 // pred_check_branch
          %2866 = sbr.rel (%p2864) target = $region56
        $region55: #{tpu_custom_call.1} parent=47 // pred_region
          %s2867 = smul.u32 8, %s29
        $region56: #{tpu_custom_call.1} parent=47 // pred_fallthru
          _
        // Predicated region
        $region57: #{tpu_custom_call.1} parent=47 // pred_check
          %p2868 = pneg %p250
        $region58: #{tpu_custom_call.1} parent=47 // pred_check_branch
          %2870 = sbr.rel (%p2868) target = $region60
        $region59: #{tpu_custom_call.1} parent=47 // pred_region
          #allocation7 [shape = 'u32[6]{0}', space=smem, size = 0x18, scoped, tag = 'DMA stride descriptor']
          %s2871 = smul.u32 8, %s29
          %s2873 = ssub.s32 4096, 4096
          %2874 = vsyncadd %s2860, %s2873
          %s2875 = smul.addr %s28, 64
          %s2876 = sadd.s32 %s2871, %s2875
          %s2877 = smul.addr %s2876, 128
          %s2878 = scalar_lea.hbm %s8, %s2877
          %s2880 = sshll.u32 1, 14
          %s2881 = sxor.u32 4294967295, %s2880
          %s2884 = sshll.u32 7, 18
          %s2885 = sxor.u32 4294967295, %s2884
          %s2886 = sand.u32 0, %s2885
          %s2888 = sor.u32 %s2886, 0
          %s2890 = sshll.u32 3, 24
          %s2891 = sxor.u32 4294967295, %s2890
          %s2892 = sand.u32 %s2888, %s2891
          %s2894 = sor.u32 %s2892, 0
          %s2895 = sshll.u32 %s2863, 4
          %s2896 = int_to_ptr.vmem [resolvable:$true] %s2895
          %2902 = sst [smem:[#allocation7]] 1024
          %s2903 = scalar_lea.smem [#allocation7], 1
          %2904 = sst [smem:[%s2903]] 2048
          %s2905 = scalar_lea.smem [#allocation7], 2
          %2906 = sst [smem:[%s2905]] 8
          %s2907 = scalar_lea.smem [#allocation7], 3
          %2908 = sst [smem:[%s2907]] 128
          %s2909 = scalar_lea.smem [#allocation7], 4
          %2910 = sst [smem:[%s2909]] 128
          %s2911 = scalar_lea.smem [#allocation7], 5
          %2912 = sst [smem:[%s2911]] 8
          %2914 = dma.general %s2896, 4096, %s2878, %s2860, [#allocation6], [#allocation7], %s2894, 0
        $region60: #{tpu_custom_call.1} parent=47 // pred_fallthru
          _
      $region48: #{tpu_custom_call.1} parent=5 // pred_fallthru
        _
      %p2915 = scmp.le.s32.totalorder 2, %s19
      // Predicated region
      $region61: #{tpu_custom_call.1} parent=5 // pred_check
        %p2916 = pneg %p2915
      $region62: #{tpu_custom_call.1} parent=5 // pred_check_branch
        %2918 = sbr.rel (%p2916) target = $region64
      $region63: #{tpu_custom_call.1} parent=5 // pred_region
        %s2919 = ssub.s32 %s19, 2
        // Predicated region
        $region65: #{tpu_custom_call.1} parent=63 // pred_check
          %p2920 = pneg %p228
        $region66: #{tpu_custom_call.1} parent=63 // pred_check_branch
          %2922 = sbr.rel (%p2920) target = $region68
        $region67: #{tpu_custom_call.1} parent=63 // pred_region
          %s2923 = smul.u32 8, %s31
          %p2924 = scmp.lt.s32.totalorder %s30, 1
          %s2925 = scalar_select %p2924, %s30, 1
          %p2926 = scmp.lt.s32.totalorder %s2923, 15
          %s2927 = scalar_select %p2926, %s2923, 15
          %s2928 = smul.addr %s2925, 16
          %s2929 = sadd.s32 %s2927, %s2928
          %s2930 = smul.addr %s2929, 8
          %s2931 = scalar_lea.vmem %s7, %s2930
        $region68: #{tpu_custom_call.1} parent=63 // pred_fallthru
          _
        // Predicated region
        $region69: #{tpu_custom_call.1} parent=63 // pred_check
          %p2932 = pneg %p256
        $region70: #{tpu_custom_call.1} parent=63 // pred_check_branch
          %2934 = sbr.rel (%p2932) target = $region72
        $region71: #{tpu_custom_call.1} parent=63 // pred_region
          %s2935 = sand.u32 %s241, 1
          %s2936 = scalar_lea.sflag [#allocation4], %s2935
          %s2937 = sand.u32 %s241, 1
          %s2938 = smul.addr %s2937, 256
          %s2939 = scalar_lea.vmem [#allocation5], %s2938
          %2940 = dma.done %s2936, 4096
        $region72: #{tpu_custom_call.1} parent=63 // pred_fallthru
          _
      $region64: #{tpu_custom_call.1} parent=5 // pred_fallthru
        _
    $region6: #{tpu_custom_call.1} parent=1 // loop_footer
      %s23 = sadd.s32 1, %s19
    $region7: #{tpu_custom_call.1} parent=1 // loop_footer_branch
      %18 = sbr.rel target = $region3
    $region8: #{tpu_custom_call.1} parent=1 // loop_exit
      _
    %2941 = vsyncpa [#allocation3], 1
    %s2942 = scalar_lea.sflag [#allocation3], 1
    %2943 = vsyncpa %s2942, 1
    %2944 = vsyncpa [#allocation4], 1
    %s2945 = scalar_lea.sflag [#allocation4], 1
    %2946 = vsyncpa %s2945, 1

</llo_original>
